<compile_context>
chip_gen: v5e
topology: v5e:2x2
jax: 0.10.0
libtpu: 0.0.40
codegen_flags: <defaults>
</compile_context>

<pallas_src>
import math
import functools

import jax
import jax.numpy as jnp
from jax import lax
from jax.experimental import pallas as pl
from jax.experimental.pallas import tpu as pltpu


def _layernorm(x, gamma, beta, eps=1e-5):
    # x: (S, E); gamma/beta: (1, E); unbiased=False variance, rsqrt on the EUP slot.
    mean = jnp.mean(x, axis=-1, keepdims=True)
    xc = x - mean
    var = jnp.mean(xc * xc, axis=-1, keepdims=True)
    return xc * lax.rsqrt(var + eps) * gamma + beta


def _gelu_exact(x):
    # PyTorch nn.GELU() default: 0.5 * x * (1 + erf(x / sqrt(2)))
    return 0.5 * x * (1.0 + lax.erf(x * (1.0 / math.sqrt(2.0))))


def encoder_layer_kernel(
    x_ref,
    g1_ref, b1_ref,
    wq_ref, bq_ref,
    wkv_ref, bkv_ref,
    wo_ref, bo_ref,
    g2_ref, b2_ref,
    w1_ref, bb1_ref,
    w2_ref, bb2_ref,
    o_ref,
    xln_scr, kv_scr, ctx_scr,
    *, num_heads, q_block, compute_dtype,
):
    S, E = x_ref.shape[1], x_ref.shape[2]
    head_dim = E // num_heads
    scale = 1.0 / math.sqrt(head_dim)
    qi = pl.program_id(1)

    def mm(a, b, dn=None):
        # MXU matmul with compute_dtype operands (bf16 by default), f32 accumulation.
        a = a.astype(compute_dtype)
        b = b.astype(compute_dtype)
        if dn is None:
            return jnp.dot(a, b, preferred_element_type=jnp.float32)
        return lax.dot_general(a, b, dn, preferred_element_type=jnp.float32)

    # ---- once per batch row (qi == 0): LN1 over the full sequence + fused K/V
    # projection, cached in VMEM scratch and reused by every query tile of this row. ----
    @pl.when(qi == 0)
    def _():
        xln = _layernorm(x_ref[0], g1_ref[...], b1_ref[...])     # (S, E) f32
        xln_scr[...] = xln
        kv = mm(xln, wkv_ref[...]) + bkv_ref[...]                # (S, 2E) f32: [K | V]
        kv_scr[...] = kv.astype(kv_scr.dtype)

    # ---- this query tile ----
    q_start = pl.multiple_of(qi * q_block, q_block)
    xq = x_ref[0, pl.ds(q_start, q_block), :]                    # (Sq, E) residual rows
    xln_q = xln_scr[pl.ds(q_start, q_block), :]                  # (Sq, E) cached LN1 rows

    q = (mm(xln_q, wq_ref[...]) + bq_ref[...]) * scale           # (Sq, E), 1/sqrt(Dh) folded

    # ---- multi-head attention: per-head context stored into a (Sq, E) scratch so the
    # output projection below is a single full-depth (Sq,E)@(E,E) MXU matmul. ----
    # QK^T contracts the last dims directly (MXU transposed-stationary operand); if the
    # lowered MLIR ever shows a per-head XLU transpose here, hoist a single K^T into the
    # qi == 0 prologue instead.
    dn_qk = (((1,), (1,)), ((), ()))
    for h in range(num_heads):
        lo = h * head_dim
        hi = lo + head_dim
        qh = q[:, lo:hi]                                         # (Sq, Dh)
        kh = kv_scr[:, lo:hi]                                    # (S,  Dh)
        vh = kv_scr[:, E + lo:E + hi]                            # (S,  Dh)
        s = mm(qh, kh, dn_qk)                                    # (Sq, S)
        s = s - jnp.max(s, axis=-1, keepdims=True)
        p = jnp.exp(s)
        p = p * pl.reciprocal(jnp.sum(p, axis=-1, keepdims=True), approx=True)
        ctx_scr[:, lo:hi] = mm(p, vh)                            # (Sq, Dh) f32

    z = mm(ctx_scr[...], wo_ref[...]) + bo_ref[...]              # ONE K=E output projection

    # residual 1 (dropout p=0.001 treated as identity -- inference mode)
    x1 = z + xq

    # ---- LN2 + MLP (GELU) ----
    x2 = _layernorm(x1, g2_ref[...], b2_ref[...])
    hmid = _gelu_exact(mm(x2, w1_ref[...]) + bb1_ref[...])
    y = mm(hmid, w2_ref[...]) + bb2_ref[...]

    # residual 2
    o_ref[0] = y + x1


def _build_encoder_call(B, S, E, hidden, num_heads, q_block, cdt, single_buffer_weights):
    nq = S // q_block
    weight_mode = pl.Buffered(1) if single_buffer_weights else None

    def full(shape):
        # Grid-invariant operand: constant index_map; single-buffered when supported.
        return pl.BlockSpec(shape, lambda b, qi: (0,) * len(shape),
                            pipeline_mode=weight_mode)

    in_specs = [
        pl.BlockSpec((1, S, E), lambda b, qi: (b, 0, 0)),   # x: full rows, once per batch
        full((1, E)), full((1, E)),                         # ln1 gamma / beta
        full((E, E)), full((1, E)),                         # q projection
        full((E, 2 * E)), full((1, 2 * E)),                 # fused k/v projection
        full((E, E)), full((1, E)),                         # output projection / bias
        full((1, E)), full((1, E)),                         # ln2 gamma / beta
        full((E, hidden)), full((1, hidden)),               # mlp linear1
        full((hidden, E)), full((1, E)),                    # mlp linear2
    ]

    scratch_shapes = [
        pltpu.VMEM((S, E), jnp.float32),         # cached LN1(x) over full sequence
        pltpu.VMEM((S, 2 * E), cdt),             # cached [K | V]
        pltpu.VMEM((q_block, E), jnp.float32),   # concatenated per-head context
    ]

    # ---- VMEM budget: single-buffered weights + scratches + double-buffered x/out tiles
    # + in-flight activations; capped at 85% of this generation's per-core VMEM. ----
    wfactor = 1 if single_buffer_weights else 2
    wbytes = wfactor * (4 * E * E + 2 * E * hidden) * cdt.itemsize
    bbytes = wfactor * (9 * E + hidden) * 4
    scrbytes = (S * E + q_block * E) * 4 + S * 2 * E * cdt.itemsize
    iobytes = 2 * (S * E + q_block * E) * 4
    actbytes = (q_block * (6 * E + 2 * hidden) + S * 3 * E + 3 * q_block * S) * 4
    need = wbytes + bbytes + scrbytes + iobytes + actbytes
    try:
        vmem_cap = pltpu.get_tpu_info().vmem_capacity_bytes
    except Exception:
        vmem_cap = 64 * 2 ** 20
    vmem_limit = int(min(0.85 * vmem_cap, max(16 * 2 ** 20, 1.25 * need)))

    kernel = functools.partial(encoder_layer_kernel, num_heads=num_heads,
                               q_block=q_block, compute_dtype=cdt)

    return pl.pallas_call(
        kernel,
        out_shape=jax.ShapeDtypeStruct((B, S, E), jnp.float32),
        grid_spec=pltpu.PrefetchScalarGridSpec(
            num_scalar_prefetch=0,
            grid=(B, nq),
            in_specs=in_specs,
            out_specs=pl.BlockSpec((1, q_block, E), lambda b, qi: (b, qi, 0)),
            scratch_shapes=scratch_shapes,
        ),
        compiler_params=pltpu.CompilerParams(
            # batch axis parallel (megacore / v7x 2-TC split); query-tile axis is
            # "arbitrary" because the cached K/V scratch carries a dependency across qi.
            dimension_semantics=("parallel", "arbitrary"),
            vmem_limit_bytes=vmem_limit,
        ),
    )


def encoder_layer(x, params, num_heads, *, q_block=None, compute_dtype=jnp.bfloat16):
    B, S, E = x.shape
    hidden = params["w1"].shape[1]
    assert E % num_heads == 0
    if q_block is None or q_block > S:
        q_block = S
    assert S % q_block == 0, "q_block must divide the sequence length"
    cdt = jnp.dtype(compute_dtype)

    # Host-side one-time weight packing:
    #  * K and V fused into one (E, 2E) weight -> single wide MXU matmul in the prologue.
    #  * MXU operands cast to compute_dtype (bf16 default); biases / LN params stay f32.
    wq = params["wq"].astype(cdt)
    wkv = jnp.concatenate([params["wk"], params["wv"]], axis=1).astype(cdt)
    bkv = jnp.concatenate([params["bk"], params["bv"]], axis=1)
    wo = params["wo"].astype(cdt)
    w1 = params["w1"].astype(cdt)
    w2 = params["w2"].astype(cdt)

    args = (x,
            params["g1"], params["b1"],
            wq, params["bq"],
            wkv, bkv,
            wo, params["bo"],
            params["g2"], params["b2"],
            w1, params["bb1"], w2, params["bb2"])

    try:
        call = _build_encoder_call(B, S, E, hidden, num_heads, q_block, cdt,
                                   single_buffer_weights=True)
        return call(*args)
    except Exception:
        # TODO(synk): compatibility fallback for JAX versions that reject
        # pipeline_mode=pl.Buffered(1); weights revert to default double-buffering.
        call = _build_encoder_call(B, S, E, hidden, num_heads, q_block, cdt,
                                   single_buffer_weights=False)
        return call(*args)


# ---------------- pure-JAX reference (for correctness check) ----------------
def encoder_layer_ref(x, p, num_heads):
    B, S, E = x.shape
    Dh = E // num_heads

    def ln(x, g, b):
        m = x.mean(-1, keepdims=True)
        v = ((x - m) ** 2).mean(-1, keepdims=True)
        return (x - m) / jnp.sqrt(v + 1e-5) * g + b

    xln = ln(x, p["g1"], p["b1"])
    q = xln @ p["wq"] + p["bq"]
    k = xln @ p["wk"] + p["bk"]
    v = xln @ p["wv"] + p["bv"]
    q = q.reshape(B, S, num_heads, Dh).transpose(0, 2, 1, 3)
    k = k.reshape(B, S, num_heads, Dh).transpose(0, 2, 1, 3)
    v = v.reshape(B, S, num_heads, Dh).transpose(0, 2, 1, 3)
    s = jnp.einsum("bhqd,bhkd->bhqk", q, k) / math.sqrt(Dh)
    a = jax.nn.softmax(s, axis=-1)
    o = jnp.einsum("bhqk,bhkd->bhqd", a, v).transpose(0, 2, 1, 3).reshape(B, S, E)
    z = o @ p["wo"] + p["bo"]
    x1 = z + x
    x2 = ln(x1, p["g2"], p["b2"])
    h = x2 @ p["w1"] + p["bb1"]
    h = 0.5 * h * (1.0 + lax.erf(h / math.sqrt(2.0)))
    y = h @ p["w2"] + p["bb2"]
    return y + x1


def init_params(key, embed_dim, hidden):
    keys = jax.random.split(key, 12)

    def linear(kw, kb, fan_in, fan_out):
        bound = 1.0 / math.sqrt(fan_in)
        w = jax.random.uniform(kw, (fan_in, fan_out), jnp.float32, -bound, bound)
        b = jax.random.uniform(kb, (1, fan_out), jnp.float32, -bound, bound)
        return w, b

    wq, bq = linear(keys[0], keys[1], embed_dim, embed_dim)
    wk, bk = linear(keys[2], keys[3], embed_dim, embed_dim)
    wv, bv = linear(keys[4], keys[5], embed_dim, embed_dim)
    wo, bo = linear(keys[6], keys[7], embed_dim, embed_dim)
    w1, bb1 = linear(keys[8], keys[9], embed_dim, hidden)
    w2, bb2 = linear(keys[10], keys[11], hidden, embed_dim)

    return dict(
        g1=jnp.ones((1, embed_dim), jnp.float32),
        b1=jnp.zeros((1, embed_dim), jnp.float32),
        wq=wq, bq=bq, wk=wk, bk=bk, wv=wv, bv=bv, wo=wo, bo=bo,
        g2=jnp.ones((1, embed_dim), jnp.float32),
        b2=jnp.zeros((1, embed_dim), jnp.float32),
        w1=w1, bb1=bb1, w2=w2, bb2=bb2,
    )


if __name__ == "__main__":
    B, S, E, H, HIDDEN = 2, 16, 32, 4, 64

    key = jax.random.PRNGKey(0)
    kx, kp = jax.random.split(key)
    x = jax.random.normal(kx, (B, S, E), jnp.float32)
    params = init_params(kp, E, HIDDEN)

    ref = encoder_layer_ref(x, params, num_heads=H)

    # f32-MXU path, sequence split into 2 query tiles (exercises the cached-K/V
    # "arbitrary" qi axis + the in-kernel pl.ds query-row slicing).
    out = jax.block_until_ready(
        encoder_layer(x, params, num_heads=H, q_block=8, compute_dtype=jnp.float32))
    assert out.shape == (B, S, E)
    # approx reciprocal in the softmax -> slightly looser than exact-f32 tolerance.
    assert jnp.allclose(out, ref, atol=1e-2, rtol=1e-2), "f32 kernel mismatch vs reference"

    # default bf16-MXU-operand path (recommended on v5e/v6e/v7x); looser tolerance is the
    # expected bf16 precision loss, not a bug.
    out_bf = jax.block_until_ready(encoder_layer(x, params, num_heads=H))
    assert out_bf.shape == (B, S, E)
    assert jnp.allclose(out_bf, ref, atol=8e-2, rtol=8e-2), "bf16 kernel mismatch vs reference"

    print("KERNEL_OK")
</pallas_src>

<mosaic_0001>
module attributes {stable_mosaic.version = 11 : i64} {
  func.func @encoder_layer_kernel(%arg0: i32, %arg1: i32, %arg2: memref<1x16x32xf32, #tpu.memory_space<vmem>>, %arg3: memref<1x32xf32, #tpu.memory_space<vmem>>, %arg4: memref<1x32xf32, #tpu.memory_space<vmem>>, %arg5: memref<32x32xf32, #tpu.memory_space<vmem>>, %arg6: memref<1x32xf32, #tpu.memory_space<vmem>>, %arg7: memref<32x64xf32, #tpu.memory_space<vmem>>, %arg8: memref<1x64xf32, #tpu.memory_space<vmem>>, %arg9: memref<32x32xf32, #tpu.memory_space<vmem>>, %arg10: memref<1x32xf32, #tpu.memory_space<vmem>>, %arg11: memref<1x32xf32, #tpu.memory_space<vmem>>, %arg12: memref<1x32xf32, #tpu.memory_space<vmem>>, %arg13: memref<32x64xf32, #tpu.memory_space<vmem>>, %arg14: memref<1x64xf32, #tpu.memory_space<vmem>>, %arg15: memref<64x32xf32, #tpu.memory_space<vmem>>, %arg16: memref<1x32xf32, #tpu.memory_space<vmem>>, %arg17: memref<1x8x32xf32, #tpu.memory_space<vmem>>, %arg18: memref<16x32xf32, #tpu.memory_space<vmem>>, %arg19: memref<16x64xf32, #tpu.memory_space<vmem>>, %arg20: memref<8x32xf32, #tpu.memory_space<vmem>>) attributes {dimension_semantics = [#tpu.dimension_semantics<parallel>, #tpu.dimension_semantics<arbitrary>], iteration_bounds = array<i64: 2, 2>, scalar_prefetch = 0 : i64, scratch_operands = 3 : i64, tpu.core_type = #tpu.core_type<tc>, window_params = [{transform_indices = @transform_0, window_bounds = array<i64: 1, 16, 32>}, {pipeline_mode = #tpu.pipeline_mode<synchronous>, transform_indices = @transform_1, window_bounds = array<i64: 1, 32>}, {pipeline_mode = #tpu.pipeline_mode<synchronous>, transform_indices = @transform_2, window_bounds = array<i64: 1, 32>}, {pipeline_mode = #tpu.pipeline_mode<synchronous>, transform_indices = @transform_3, window_bounds = array<i64: 32, 32>}, {pipeline_mode = #tpu.pipeline_mode<synchronous>, transform_indices = @transform_4, window_bounds = array<i64: 1, 32>}, {pipeline_mode = #tpu.pipeline_mode<synchronous>, transform_indices = @transform_5, window_bounds = array<i64: 32, 64>}, {pipeline_mode = #tpu.pipeline_mode<synchronous>, transform_indices = @transform_6, window_bounds = array<i64: 1, 64>}, {pipeline_mode = #tpu.pipeline_mode<synchronous>, transform_indices = @transform_7, window_bounds = array<i64: 32, 32>}, {pipeline_mode = #tpu.pipeline_mode<synchronous>, transform_indices = @transform_8, window_bounds = array<i64: 1, 32>}, {pipeline_mode = #tpu.pipeline_mode<synchronous>, transform_indices = @transform_9, window_bounds = array<i64: 1, 32>}, {pipeline_mode = #tpu.pipeline_mode<synchronous>, transform_indices = @transform_10, window_bounds = array<i64: 1, 32>}, {pipeline_mode = #tpu.pipeline_mode<synchronous>, transform_indices = @transform_11, window_bounds = array<i64: 32, 64>}, {pipeline_mode = #tpu.pipeline_mode<synchronous>, transform_indices = @transform_12, window_bounds = array<i64: 1, 64>}, {pipeline_mode = #tpu.pipeline_mode<synchronous>, transform_indices = @transform_13, window_bounds = array<i64: 64, 32>}, {pipeline_mode = #tpu.pipeline_mode<synchronous>, transform_indices = @transform_14, window_bounds = array<i64: 1, 32>}, {transform_indices = @transform_15, window_bounds = array<i64: 1, 8, 32>}]} {
    %c0_i32 = arith.constant 0 : i32
    %0 = arith.cmpi eq, %arg1, %c0_i32 : i32
    %1 = arith.extui %0 : i1 to i32
    %c0_i32_0 = arith.constant 0 : i32
    %2 = arith.cmpi ne, %1, %c0_i32_0 : i32
    scf.if %2 {
      %c0_73 = arith.constant 0 : index
      %c0_74 = arith.constant 0 : index
      %c0_75 = arith.constant 0 : index
      %132 = vector.load %arg2[%c0_73, %c0_74, %c0_75] : memref<1x16x32xf32, #tpu.memory_space<vmem>>, vector<1x16x32xf32>
      %133 = vector.shape_cast %132 : vector<1x16x32xf32> to vector<16x32xf32>
      %c0_76 = arith.constant 0 : index
      %c0_77 = arith.constant 0 : index
      %134 = vector.load %arg3[%c0_76, %c0_77] : memref<1x32xf32, #tpu.memory_space<vmem>>, vector<1x32xf32>
      %c0_78 = arith.constant 0 : index
      %c0_79 = arith.constant 0 : index
      %135 = vector.load %arg4[%c0_78, %c0_79] : memref<1x32xf32, #tpu.memory_space<vmem>>, vector<1x32xf32>
      %cst_80 = arith.constant dense<0.000000e+00> : vector<16xf32>
      %136 = vector.multi_reduction <add>, %133, %cst_80 [1] : vector<16x32xf32> to vector<16xf32>
      %137 = vector.shape_cast %136 : vector<16xf32> to vector<16x1xf32>
      %cst_81 = arith.constant 3.200000e+01 : f32
      %138 = vector.broadcast %cst_81 : f32 to vector<16x1xf32>
      %139 = arith.divf %137, %138 : vector<16x1xf32>
      %140 = vector.broadcast %139 : vector<16x1xf32> to vector<16x32xf32>
      %141 = arith.subf %133, %140 : vector<16x32xf32>
      %142 = arith.mulf %141, %141 : vector<16x32xf32>
      %cst_82 = arith.constant dense<0.000000e+00> : vector<16xf32>
      %143 = vector.multi_reduction <add>, %142, %cst_82 [1] : vector<16x32xf32> to vector<16xf32>
      %144 = vector.shape_cast %143 : vector<16xf32> to vector<16x1xf32>
      %cst_83 = arith.constant 3.200000e+01 : f32
      %145 = vector.broadcast %cst_83 : f32 to vector<16x1xf32>
      %146 = arith.divf %144, %145 : vector<16x1xf32>
      %cst_84 = arith.constant 9.99999974E-6 : f32
      %147 = vector.broadcast %cst_84 : f32 to vector<16x1xf32>
      %148 = arith.addf %146, %147 : vector<16x1xf32>
      %149 = math.rsqrt %148 : vector<16x1xf32>
      %150 = vector.broadcast %149 : vector<16x1xf32> to vector<16x32xf32>
      %151 = arith.mulf %141, %150 : vector<16x32xf32>
      %152 = vector.broadcast %134 : vector<1x32xf32> to vector<16x32xf32>
      %153 = arith.mulf %151, %152 : vector<16x32xf32>
      %154 = vector.broadcast %135 : vector<1x32xf32> to vector<16x32xf32>
      %155 = arith.addf %153, %154 : vector<16x32xf32>
      %c0_85 = arith.constant 0 : index
      %c0_86 = arith.constant 0 : index
      %156 = vector.load %arg18[%c0_85, %c0_86] : memref<16x32xf32, #tpu.memory_space<vmem>>, vector<16x32xf32>
      tpu.vector_store %arg18[%c0_85, %c0_86], %155 {strides = array<i32>} : memref<16x32xf32, #tpu.memory_space<vmem>>, vector<16x32xf32>,
      %c0_87 = arith.constant 0 : index
      %c0_88 = arith.constant 0 : index
      %157 = vector.load %arg7[%c0_87, %c0_88] : memref<32x64xf32, #tpu.memory_space<vmem>>, vector<32x64xf32>
      %cst_89 = arith.constant dense<0.000000e+00> : vector<16x64xf32>
      %158 = tpu.matmul %155, %157, %cst_89 {dimension_numbers = #tpu.dot_dimension_numbers<[1], [0], [0], [1], [0, 0, 1, 1], [], []>} : vector<16x32xf32>, vector<32x64xf32>, vector<16x64xf32> -> vector<16x64xf32>
      %c0_90 = arith.constant 0 : index
      %c0_91 = arith.constant 0 : index
      %159 = vector.load %arg8[%c0_90, %c0_91] : memref<1x64xf32, #tpu.memory_space<vmem>>, vector<1x64xf32>
      %160 = vector.broadcast %159 : vector<1x64xf32> to vector<16x64xf32>
      %161 = arith.addf %158, %160 : vector<16x64xf32>
      %c0_92 = arith.constant 0 : index
      %c0_93 = arith.constant 0 : index
      %162 = vector.load %arg19[%c0_92, %c0_93] : memref<16x64xf32, #tpu.memory_space<vmem>>, vector<16x64xf32>
      tpu.vector_store %arg19[%c0_92, %c0_93], %161 {strides = array<i32>} : memref<16x64xf32, #tpu.memory_space<vmem>>, vector<16x64xf32>,
    } else {
    }
    %c8_i32 = arith.constant 8 : i32
    %3 = arith.muli %arg1, %c8_i32 : i32
    %4 = tpu.assume_multiple %3, 8 : i32
    %c0 = arith.constant 0 : index
    %5 = arith.index_cast %4 : i32 to index
    %c0_1 = arith.constant 0 : index
    %6 = vector.load %arg2[%c0, %5, %c0_1] : memref<1x16x32xf32, #tpu.memory_space<vmem>>, vector<1x8x32xf32>
    %7 = vector.shape_cast %6 : vector<1x8x32xf32> to vector<8x32xf32>
    %8 = arith.index_cast %4 : i32 to index
    %c0_2 = arith.constant 0 : index
    %9 = vector.load %arg18[%8, %c0_2] : memref<16x32xf32, #tpu.memory_space<vmem>>, vector<8x32xf32>
    %c0_3 = arith.constant 0 : index
    %c0_4 = arith.constant 0 : index
    %10 = vector.load %arg5[%c0_3, %c0_4] : memref<32x32xf32, #tpu.memory_space<vmem>>, vector<32x32xf32>
    %cst = arith.constant dense<0.000000e+00> : vector<8x32xf32>
    %11 = tpu.matmul %9, %10, %cst {dimension_numbers = #tpu.dot_dimension_numbers<[1], [0], [0], [1], [0, 0, 1, 1], [], []>} : vector<8x32xf32>, vector<32x32xf32>, vector<8x32xf32> -> vector<8x32xf32>
    %c0_5 = arith.constant 0 : index
    %c0_6 = arith.constant 0 : index
    %12 = vector.load %arg6[%c0_5, %c0_6] : memref<1x32xf32, #tpu.memory_space<vmem>>, vector<1x32xf32>
    %13 = vector.broadcast %12 : vector<1x32xf32> to vector<8x32xf32>
    %14 = arith.addf %11, %13 : vector<8x32xf32>
    %cst_7 = arith.constant 0.353553385 : f32
    %15 = vector.broadcast %cst_7 : f32 to vector<8x32xf32>
    %16 = arith.mulf %14, %15 : vector<8x32xf32>
    %17 = vector.extract_strided_slice %16 {offsets = [0, 0], sizes = [8, 8], strides = [1, 1]} : vector<8x32xf32> to vector<8x8xf32>
    %c0_8 = arith.constant 0 : index
    %c0_9 = arith.constant 0 : index
    %18 = vector.load %arg19[%c0_8, %c0_9] : memref<16x64xf32, #tpu.memory_space<vmem>>, vector<16x8xf32>
    %c0_10 = arith.constant 0 : index
    %c32 = arith.constant 32 : index
    %19 = vector.load %arg19[%c0_10, %c32] : memref<16x64xf32, #tpu.memory_space<vmem>>, vector<16x8xf32>
    %cst_11 = arith.constant dense<0.000000e+00> : vector<8x16xf32>
    %20 = tpu.matmul %17, %18, %cst_11 {dimension_numbers = #tpu.dot_dimension_numbers<[1], [1], [0], [0], [0, 0, 1, 0], [], []>} : vector<8x8xf32>, vector<16x8xf32>, vector<8x16xf32> -> vector<8x16xf32>
    %cst_12 = arith.constant dense<0xFF800000> : vector<8xf32>
    %21 = vector.multi_reduction <maximumf>, %20, %cst_12 [1] : vector<8x16xf32> to vector<8xf32>
    %22 = vector.shape_cast %21 : vector<8xf32> to vector<8x1xf32>
    %23 = vector.broadcast %22 : vector<8x1xf32> to vector<8x16xf32>
    %24 = arith.subf %20, %23 : vector<8x16xf32>
    %25 = math.exp %24 : vector<8x16xf32>
    %cst_13 = arith.constant dense<0.000000e+00> : vector<8xf32>
    %26 = vector.multi_reduction <add>, %25, %cst_13 [1] : vector<8x16xf32> to vector<8xf32>
    %27 = vector.shape_cast %26 : vector<8xf32> to vector<8x1xf32>
    %28 = tpu.reciprocal %27 {approx = true} : vector<8x1xf32> -> vector<8x1xf32>
    %29 = vector.broadcast %28 : vector<8x1xf32> to vector<8x16xf32>
    %30 = arith.mulf %25, %29 : vector<8x16xf32>
    %cst_14 = arith.constant dense<0.000000e+00> : vector<8x8xf32>
    %31 = tpu.matmul %30, %19, %cst_14 {dimension_numbers = #tpu.dot_dimension_numbers<[1], [0], [0], [1], [0, 0, 1, 1], [], []>} : vector<8x16xf32>, vector<16x8xf32>, vector<8x8xf32> -> vector<8x8xf32>
    %c0_15 = arith.constant 0 : index
    %c0_16 = arith.constant 0 : index
    %32 = vector.load %arg20[%c0_15, %c0_16] : memref<8x32xf32, #tpu.memory_space<vmem>>, vector<8x8xf32>
    tpu.vector_store %arg20[%c0_15, %c0_16], %31 {strides = array<i32>} : memref<8x32xf32, #tpu.memory_space<vmem>>, vector<8x8xf32>,
    %33 = vector.extract_strided_slice %16 {offsets = [0, 8], sizes = [8, 8], strides = [1, 1]} : vector<8x32xf32> to vector<8x8xf32>
    %c0_17 = arith.constant 0 : index
    %c8 = arith.constant 8 : index
    %34 = vector.load %arg19[%c0_17, %c8] : memref<16x64xf32, #tpu.memory_space<vmem>>, vector<16x8xf32>
    %c0_18 = arith.constant 0 : index
    %c40 = arith.constant 40 : index
    %35 = vector.load %arg19[%c0_18, %c40] : memref<16x64xf32, #tpu.memory_space<vmem>>, vector<16x8xf32>
    %cst_19 = arith.constant dense<0.000000e+00> : vector<8x16xf32>
    %36 = tpu.matmul %33, %34, %cst_19 {dimension_numbers = #tpu.dot_dimension_numbers<[1], [1], [0], [0], [0, 0, 1, 0], [], []>} : vector<8x8xf32>, vector<16x8xf32>, vector<8x16xf32> -> vector<8x16xf32>
    %cst_20 = arith.constant dense<0xFF800000> : vector<8xf32>
    %37 = vector.multi_reduction <maximumf>, %36, %cst_20 [1] : vector<8x16xf32> to vector<8xf32>
    %38 = vector.shape_cast %37 : vector<8xf32> to vector<8x1xf32>
    %39 = vector.broadcast %38 : vector<8x1xf32> to vector<8x16xf32>
    %40 = arith.subf %36, %39 : vector<8x16xf32>
    %41 = math.exp %40 : vector<8x16xf32>
    %cst_21 = arith.constant dense<0.000000e+00> : vector<8xf32>
    %42 = vector.multi_reduction <add>, %41, %cst_21 [1] : vector<8x16xf32> to vector<8xf32>
    %43 = vector.shape_cast %42 : vector<8xf32> to vector<8x1xf32>
    %44 = tpu.reciprocal %43 {approx = true} : vector<8x1xf32> -> vector<8x1xf32>
    %45 = vector.broadcast %44 : vector<8x1xf32> to vector<8x16xf32>
    %46 = arith.mulf %41, %45 : vector<8x16xf32>
    %cst_22 = arith.constant dense<0.000000e+00> : vector<8x8xf32>
    %47 = tpu.matmul %46, %35, %cst_22 {dimension_numbers = #tpu.dot_dimension_numbers<[1], [0], [0], [1], [0, 0, 1, 1], [], []>} : vector<8x16xf32>, vector<16x8xf32>, vector<8x8xf32> -> vector<8x8xf32>
    %c0_23 = arith.constant 0 : index
    %c8_24 = arith.constant 8 : index
    %48 = vector.load %arg20[%c0_23, %c8_24] : memref<8x32xf32, #tpu.memory_space<vmem>>, vector<8x8xf32>
    tpu.vector_store %arg20[%c0_23, %c8_24], %47 {strides = array<i32>} : memref<8x32xf32, #tpu.memory_space<vmem>>, vector<8x8xf32>,
    %49 = vector.extract_strided_slice %16 {offsets = [0, 16], sizes = [8, 8], strides = [1, 1]} : vector<8x32xf32> to vector<8x8xf32>
    %c0_25 = arith.constant 0 : index
    %c16 = arith.constant 16 : index
    %50 = vector.load %arg19[%c0_25, %c16] : memref<16x64xf32, #tpu.memory_space<vmem>>, vector<16x8xf32>
    %c0_26 = arith.constant 0 : index
    %c48 = arith.constant 48 : index
    %51 = vector.load %arg19[%c0_26, %c48] : memref<16x64xf32, #tpu.memory_space<vmem>>, vector<16x8xf32>
    %cst_27 = arith.constant dense<0.000000e+00> : vector<8x16xf32>
    %52 = tpu.matmul %49, %50, %cst_27 {dimension_numbers = #tpu.dot_dimension_numbers<[1], [1], [0], [0], [0, 0, 1, 0], [], []>} : vector<8x8xf32>, vector<16x8xf32>, vector<8x16xf32> -> vector<8x16xf32>
    %cst_28 = arith.constant dense<0xFF800000> : vector<8xf32>
    %53 = vector.multi_reduction <maximumf>, %52, %cst_28 [1] : vector<8x16xf32> to vector<8xf32>
    %54 = vector.shape_cast %53 : vector<8xf32> to vector<8x1xf32>
    %55 = vector.broadcast %54 : vector<8x1xf32> to vector<8x16xf32>
    %56 = arith.subf %52, %55 : vector<8x16xf32>
    %57 = math.exp %56 : vector<8x16xf32>
    %cst_29 = arith.constant dense<0.000000e+00> : vector<8xf32>
    %58 = vector.multi_reduction <add>, %57, %cst_29 [1] : vector<8x16xf32> to vector<8xf32>
    %59 = vector.shape_cast %58 : vector<8xf32> to vector<8x1xf32>
    %60 = tpu.reciprocal %59 {approx = true} : vector<8x1xf32> -> vector<8x1xf32>
    %61 = vector.broadcast %60 : vector<8x1xf32> to vector<8x16xf32>
    %62 = arith.mulf %57, %61 : vector<8x16xf32>
    %cst_30 = arith.constant dense<0.000000e+00> : vector<8x8xf32>
    %63 = tpu.matmul %62, %51, %cst_30 {dimension_numbers = #tpu.dot_dimension_numbers<[1], [0], [0], [1], [0, 0, 1, 1], [], []>} : vector<8x16xf32>, vector<16x8xf32>, vector<8x8xf32> -> vector<8x8xf32>
    %c0_31 = arith.constant 0 : index
    %c16_32 = arith.constant 16 : index
    %64 = vector.load %arg20[%c0_31, %c16_32] : memref<8x32xf32, #tpu.memory_space<vmem>>, vector<8x8xf32>
    tpu.vector_store %arg20[%c0_31, %c16_32], %63 {strides = array<i32>} : memref<8x32xf32, #tpu.memory_space<vmem>>, vector<8x8xf32>,
    %65 = vector.extract_strided_slice %16 {offsets = [0, 24], sizes = [8, 8], strides = [1, 1]} : vector<8x32xf32> to vector<8x8xf32>
    %c0_33 = arith.constant 0 : index
    %c24 = arith.constant 24 : index
    %66 = vector.load %arg19[%c0_33, %c24] : memref<16x64xf32, #tpu.memory_space<vmem>>, vector<16x8xf32>
    %c0_34 = arith.constant 0 : index
    %c56 = arith.constant 56 : index
    %67 = vector.load %arg19[%c0_34, %c56] : memref<16x64xf32, #tpu.memory_space<vmem>>, vector<16x8xf32>
    %cst_35 = arith.constant dense<0.000000e+00> : vector<8x16xf32>
    %68 = tpu.matmul %65, %66, %cst_35 {dimension_numbers = #tpu.dot_dimension_numbers<[1], [1], [0], [0], [0, 0, 1, 0], [], []>} : vector<8x8xf32>, vector<16x8xf32>, vector<8x16xf32> -> vector<8x16xf32>
    %cst_36 = arith.constant dense<0xFF800000> : vector<8xf32>
    %69 = vector.multi_reduction <maximumf>, %68, %cst_36 [1] : vector<8x16xf32> to vector<8xf32>
    %70 = vector.shape_cast %69 : vector<8xf32> to vector<8x1xf32>
    %71 = vector.broadcast %70 : vector<8x1xf32> to vector<8x16xf32>
    %72 = arith.subf %68, %71 : vector<8x16xf32>
    %73 = math.exp %72 : vector<8x16xf32>
    %cst_37 = arith.constant dense<0.000000e+00> : vector<8xf32>
    %74 = vector.multi_reduction <add>, %73, %cst_37 [1] : vector<8x16xf32> to vector<8xf32>
    %75 = vector.shape_cast %74 : vector<8xf32> to vector<8x1xf32>
    %76 = tpu.reciprocal %75 {approx = true} : vector<8x1xf32> -> vector<8x1xf32>
    %77 = vector.broadcast %76 : vector<8x1xf32> to vector<8x16xf32>
    %78 = arith.mulf %73, %77 : vector<8x16xf32>
    %cst_38 = arith.constant dense<0.000000e+00> : vector<8x8xf32>
    %79 = tpu.matmul %78, %67, %cst_38 {dimension_numbers = #tpu.dot_dimension_numbers<[1], [0], [0], [1], [0, 0, 1, 1], [], []>} : vector<8x16xf32>, vector<16x8xf32>, vector<8x8xf32> -> vector<8x8xf32>
    %c0_39 = arith.constant 0 : index
    %c24_40 = arith.constant 24 : index
    %80 = vector.load %arg20[%c0_39, %c24_40] : memref<8x32xf32, #tpu.memory_space<vmem>>, vector<8x8xf32>
    tpu.vector_store %arg20[%c0_39, %c24_40], %79 {strides = array<i32>} : memref<8x32xf32, #tpu.memory_space<vmem>>, vector<8x8xf32>,
    %c0_41 = arith.constant 0 : index
    %c0_42 = arith.constant 0 : index
    %81 = vector.load %arg20[%c0_41, %c0_42] : memref<8x32xf32, #tpu.memory_space<vmem>>, vector<8x32xf32>
    %c0_43 = arith.constant 0 : index
    %c0_44 = arith.constant 0 : index
    %82 = vector.load %arg9[%c0_43, %c0_44] : memref<32x32xf32, #tpu.memory_space<vmem>>, vector<32x32xf32>
    %cst_45 = arith.constant dense<0.000000e+00> : vector<8x32xf32>
    %83 = tpu.matmul %81, %82, %cst_45 {dimension_numbers = #tpu.dot_dimension_numbers<[1], [0], [0], [1], [0, 0, 1, 1], [], []>} : vector<8x32xf32>, vector<32x32xf32>, vector<8x32xf32> -> vector<8x32xf32>
    %c0_46 = arith.constant 0 : index
    %c0_47 = arith.constant 0 : index
    %84 = vector.load %arg10[%c0_46, %c0_47] : memref<1x32xf32, #tpu.memory_space<vmem>>, vector<1x32xf32>
    %85 = vector.broadcast %84 : vector<1x32xf32> to vector<8x32xf32>
    %86 = arith.addf %83, %85 : vector<8x32xf32>
    %87 = arith.addf %86, %7 : vector<8x32xf32>
    %c0_48 = arith.constant 0 : index
    %c0_49 = arith.constant 0 : index
    %88 = vector.load %arg11[%c0_48, %c0_49] : memref<1x32xf32, #tpu.memory_space<vmem>>, vector<1x32xf32>
    %c0_50 = arith.constant 0 : index
    %c0_51 = arith.constant 0 : index
    %89 = vector.load %arg12[%c0_50, %c0_51] : memref<1x32xf32, #tpu.memory_space<vmem>>, vector<1x32xf32>
    %cst_52 = arith.constant dense<0.000000e+00> : vector<8xf32>
    %90 = vector.multi_reduction <add>, %87, %cst_52 [1] : vector<8x32xf32> to vector<8xf32>
    %91 = vector.shape_cast %90 : vector<8xf32> to vector<8x1xf32>
    %cst_53 = arith.constant 3.200000e+01 : f32
    %92 = vector.broadcast %cst_53 : f32 to vector<8x1xf32>
    %93 = arith.divf %91, %92 : vector<8x1xf32>
    %94 = vector.broadcast %93 : vector<8x1xf32> to vector<8x32xf32>
    %95 = arith.subf %87, %94 : vector<8x32xf32>
    %96 = arith.mulf %95, %95 : vector<8x32xf32>
    %cst_54 = arith.constant dense<0.000000e+00> : vector<8xf32>
    %97 = vector.multi_reduction <add>, %96, %cst_54 [1] : vector<8x32xf32> to vector<8xf32>
    %98 = vector.shape_cast %97 : vector<8xf32> to vector<8x1xf32>
    %cst_55 = arith.constant 3.200000e+01 : f32
    %99 = vector.broadcast %cst_55 : f32 to vector<8x1xf32>
    %100 = arith.divf %98, %99 : vector<8x1xf32>
    %cst_56 = arith.constant 9.99999974E-6 : f32
    %101 = vector.broadcast %cst_56 : f32 to vector<8x1xf32>
    %102 = arith.addf %100, %101 : vector<8x1xf32>
    %103 = math.rsqrt %102 : vector<8x1xf32>
    %104 = vector.broadcast %103 : vector<8x1xf32> to vector<8x32xf32>
    %105 = arith.mulf %95, %104 : vector<8x32xf32>
    %106 = vector.broadcast %88 : vector<1x32xf32> to vector<8x32xf32>
    %107 = arith.mulf %105, %106 : vector<8x32xf32>
    %108 = vector.broadcast %89 : vector<1x32xf32> to vector<8x32xf32>
    %109 = arith.addf %107, %108 : vector<8x32xf32>
    %c0_57 = arith.constant 0 : index
    %c0_58 = arith.constant 0 : index
    %110 = vector.load %arg13[%c0_57, %c0_58] : memref<32x64xf32, #tpu.memory_space<vmem>>, vector<32x64xf32>
    %cst_59 = arith.constant dense<0.000000e+00> : vector<8x64xf32>
    %111 = tpu.matmul %109, %110, %cst_59 {dimension_numbers = #tpu.dot_dimension_numbers<[1], [0], [0], [1], [0, 0, 1, 1], [], []>} : vector<8x32xf32>, vector<32x64xf32>, vector<8x64xf32> -> vector<8x64xf32>
    %c0_60 = arith.constant 0 : index
    %c0_61 = arith.constant 0 : index
    %112 = vector.load %arg14[%c0_60, %c0_61] : memref<1x64xf32, #tpu.memory_space<vmem>>, vector<1x64xf32>
    %113 = vector.broadcast %112 : vector<1x64xf32> to vector<8x64xf32>
    %114 = arith.addf %111, %113 : vector<8x64xf32>
    %cst_62 = arith.constant 5.000000e-01 : f32
    %115 = vector.broadcast %cst_62 : f32 to vector<8x64xf32>
    %116 = arith.mulf %115, %114 : vector<8x64xf32>
    %cst_63 = arith.constant 0.707106769 : f32
    %117 = vector.broadcast %cst_63 : f32 to vector<8x64xf32>
    %118 = arith.mulf %114, %117 : vector<8x64xf32>
    %119 = math.erf %118 : vector<8x64xf32>
    %cst_64 = arith.constant 1.000000e+00 : f32
    %120 = vector.broadcast %cst_64 : f32 to vector<8x64xf32>
    %121 = arith.addf %120, %119 : vector<8x64xf32>
    %122 = arith.mulf %116, %121 : vector<8x64xf32>
    %c0_65 = arith.constant 0 : index
    %c0_66 = arith.constant 0 : index
    %123 = vector.load %arg15[%c0_65, %c0_66] : memref<64x32xf32, #tpu.memory_space<vmem>>, vector<64x32xf32>
    %cst_67 = arith.constant dense<0.000000e+00> : vector<8x32xf32>
    %124 = tpu.matmul %122, %123, %cst_67 {dimension_numbers = #tpu.dot_dimension_numbers<[1], [0], [0], [1], [0, 0, 1, 1], [], []>} : vector<8x64xf32>, vector<64x32xf32>, vector<8x32xf32> -> vector<8x32xf32>
    %c0_68 = arith.constant 0 : index
    %c0_69 = arith.constant 0 : index
    %125 = vector.load %arg16[%c0_68, %c0_69] : memref<1x32xf32, #tpu.memory_space<vmem>>, vector<1x32xf32>
    %126 = vector.broadcast %125 : vector<1x32xf32> to vector<8x32xf32>
    %127 = arith.addf %124, %126 : vector<8x32xf32>
    %128 = arith.addf %127, %87 : vector<8x32xf32>
    %c0_70 = arith.constant 0 : index
    %c0_71 = arith.constant 0 : index
    %c0_72 = arith.constant 0 : index
    %129 = vector.load %arg17[%c0_70, %c0_71, %c0_72] : memref<1x8x32xf32, #tpu.memory_space<vmem>>, vector<1x8x32xf32>
    %130 = vector.shape_cast %129 : vector<1x8x32xf32> to vector<8x32xf32>
    %131 = vector.shape_cast %128 : vector<8x32xf32> to vector<1x8x32xf32>
    tpu.vector_store %arg17[%c0_70, %c0_71, %c0_72], %131 {strides = array<i32>} : memref<1x8x32xf32, #tpu.memory_space<vmem>>, vector<1x8x32xf32>,
    return
  }
  func.func @transform_0(%arg0: i32, %arg1: i32) -> (i32, i32, i32) {
    %c0_i32 = arith.constant 0 : i32
    %c0_i32_0 = arith.constant 0 : i32
    %c0_i32_1 = arith.constant 0 : i32
    return %arg0, %c0_i32, %c0_i32_0 : i32, i32, i32
  }
  func.func @transform_1(%arg0: i32, %arg1: i32) -> (i32, i32) {
    %c0_i32 = arith.constant 0 : i32
    %c0_i32_0 = arith.constant 0 : i32
    %c0_i32_1 = arith.constant 0 : i32
    return %c0_i32, %c0_i32_0 : i32, i32
  }
  func.func @transform_2(%arg0: i32, %arg1: i32) -> (i32, i32) {
    %c0_i32 = arith.constant 0 : i32
    %c0_i32_0 = arith.constant 0 : i32
    %c0_i32_1 = arith.constant 0 : i32
    return %c0_i32, %c0_i32_0 : i32, i32
  }
  func.func @transform_3(%arg0: i32, %arg1: i32) -> (i32, i32) {
    %c0_i32 = arith.constant 0 : i32
    %c0_i32_0 = arith.constant 0 : i32
    %c0_i32_1 = arith.constant 0 : i32
    return %c0_i32, %c0_i32_0 : i32, i32
  }
  func.func @transform_4(%arg0: i32, %arg1: i32) -> (i32, i32) {
    %c0_i32 = arith.constant 0 : i32
    %c0_i32_0 = arith.constant 0 : i32
    %c0_i32_1 = arith.constant 0 : i32
    return %c0_i32, %c0_i32_0 : i32, i32
  }
  func.func @transform_5(%arg0: i32, %arg1: i32) -> (i32, i32) {
    %c0_i32 = arith.constant 0 : i32
    %c0_i32_0 = arith.constant 0 : i32
    %c0_i32_1 = arith.constant 0 : i32
    return %c0_i32, %c0_i32_0 : i32, i32
  }
  func.func @transform_6(%arg0: i32, %arg1: i32) -> (i32, i32) {
    %c0_i32 = arith.constant 0 : i32
    %c0_i32_0 = arith.constant 0 : i32
    %c0_i32_1 = arith.constant 0 : i32
    return %c0_i32, %c0_i32_0 : i32, i32
  }
  func.func @transform_7(%arg0: i32, %arg1: i32) -> (i32, i32) {
    %c0_i32 = arith.constant 0 : i32
    %c0_i32_0 = arith.constant 0 : i32
    %c0_i32_1 = arith.constant 0 : i32
    return %c0_i32, %c0_i32_0 : i32, i32
  }
  func.func @transform_8(%arg0: i32, %arg1: i32) -> (i32, i32) {
    %c0_i32 = arith.constant 0 : i32
    %c0_i32_0 = arith.constant 0 : i32
    %c0_i32_1 = arith.constant 0 : i32
    return %c0_i32, %c0_i32_0 : i32, i32
  }
  func.func @transform_9(%arg0: i32, %arg1: i32) -> (i32, i32) {
    %c0_i32 = arith.constant 0 : i32
    %c0_i32_0 = arith.constant 0 : i32
    %c0_i32_1 = arith.constant 0 : i32
    return %c0_i32, %c0_i32_0 : i32, i32
  }
  func.func @transform_10(%arg0: i32, %arg1: i32) -> (i32, i32) {
    %c0_i32 = arith.constant 0 : i32
    %c0_i32_0 = arith.constant 0 : i32
    %c0_i32_1 = arith.constant 0 : i32
    return %c0_i32, %c0_i32_0 : i32, i32
  }
  func.func @transform_11(%arg0: i32, %arg1: i32) -> (i32, i32) {
    %c0_i32 = arith.constant 0 : i32
    %c0_i32_0 = arith.constant 0 : i32
    %c0_i32_1 = arith.constant 0 : i32
    return %c0_i32, %c0_i32_0 : i32, i32
  }
  func.func @transform_12(%arg0: i32, %arg1: i32) -> (i32, i32) {
    %c0_i32 = arith.constant 0 : i32
    %c0_i32_0 = arith.constant 0 : i32
    %c0_i32_1 = arith.constant 0 : i32
    return %c0_i32, %c0_i32_0 : i32, i32
  }
  func.func @transform_13(%arg0: i32, %arg1: i32) -> (i32, i32) {
    %c0_i32 = arith.constant 0 : i32
    %c0_i32_0 = arith.constant 0 : i32
    %c0_i32_1 = arith.constant 0 : i32
    return %c0_i32, %c0_i32_0 : i32, i32
  }
  func.func @transform_14(%arg0: i32, %arg1: i32) -> (i32, i32) {
    %c0_i32 = arith.constant 0 : i32
    %c0_i32_0 = arith.constant 0 : i32
    %c0_i32_1 = arith.constant 0 : i32
    return %c0_i32, %c0_i32_0 : i32, i32
  }
  func.func @transform_15(%arg0: i32, %arg1: i32) -> (i32, i32, i32) {
    %c0_i32 = arith.constant 0 : i32
    %c0_i32_0 = arith.constant 0 : i32
    return %arg0, %arg1, %c0_i32 : i32, i32, i32
  }
}

module attributes {stable_mosaic.version = 11 : i64} {
  func.func @encoder_layer_kernel(%arg0: i32, %arg1: i32, %arg2: memref<1x16x32xf32, #tpu.memory_space<vmem>>, %arg3: memref<1x32xf32, #tpu.memory_space<vmem>>, %arg4: memref<1x32xf32, #tpu.memory_space<vmem>>, %arg5: memref<32x32xf32, #tpu.memory_space<vmem>>, %arg6: memref<1x32xf32, #tpu.memory_space<vmem>>, %arg7: memref<32x64xf32, #tpu.memory_space<vmem>>, %arg8: memref<1x64xf32, #tpu.memory_space<vmem>>, %arg9: memref<32x32xf32, #tpu.memory_space<vmem>>, %arg10: memref<1x32xf32, #tpu.memory_space<vmem>>, %arg11: memref<1x32xf32, #tpu.memory_space<vmem>>, %arg12: memref<1x32xf32, #tpu.memory_space<vmem>>, %arg13: memref<32x64xf32, #tpu.memory_space<vmem>>, %arg14: memref<1x64xf32, #tpu.memory_space<vmem>>, %arg15: memref<64x32xf32, #tpu.memory_space<vmem>>, %arg16: memref<1x32xf32, #tpu.memory_space<vmem>>, %arg17: memref<1x8x32xf32, #tpu.memory_space<vmem>>, %arg18: memref<16x32xf32, #tpu.memory_space<vmem>>, %arg19: memref<16x64xf32, #tpu.memory_space<vmem>>, %arg20: memref<8x32xf32, #tpu.memory_space<vmem>>) attributes {dimension_semantics = [#tpu.dimension_semantics<parallel>, #tpu.dimension_semantics<arbitrary>], iteration_bounds = array<i64: 2, 2>, scalar_prefetch = 0 : i64, scratch_operands = 3 : i64, tpu.core_type = #tpu.core_type<tc>, window_params = [{transform_indices = @transform_0, window_bounds = array<i64: 1, 16, 32>}, {pipeline_mode = #tpu.pipeline_mode<synchronous>, transform_indices = @transform_1, window_bounds = array<i64: 1, 32>}, {pipeline_mode = #tpu.pipeline_mode<synchronous>, transform_indices = @transform_2, window_bounds = array<i64: 1, 32>}, {pipeline_mode = #tpu.pipeline_mode<synchronous>, transform_indices = @transform_3, window_bounds = array<i64: 32, 32>}, {pipeline_mode = #tpu.pipeline_mode<synchronous>, transform_indices = @transform_4, window_bounds = array<i64: 1, 32>}, {pipeline_mode = #tpu.pipeline_mode<synchronous>, transform_indices = @transform_5, window_bounds = array<i64: 32, 64>}, {pipeline_mode = #tpu.pipeline_mode<synchronous>, transform_indices = @transform_6, window_bounds = array<i64: 1, 64>}, {pipeline_mode = #tpu.pipeline_mode<synchronous>, transform_indices = @transform_7, window_bounds = array<i64: 32, 32>}, {pipeline_mode = #tpu.pipeline_mode<synchronous>, transform_indices = @transform_8, window_bounds = array<i64: 1, 32>}, {pipeline_mode = #tpu.pipeline_mode<synchronous>, transform_indices = @transform_9, window_bounds = array<i64: 1, 32>}, {pipeline_mode = #tpu.pipeline_mode<synchronous>, transform_indices = @transform_10, window_bounds = array<i64: 1, 32>}, {pipeline_mode = #tpu.pipeline_mode<synchronous>, transform_indices = @transform_11, window_bounds = array<i64: 32, 64>}, {pipeline_mode = #tpu.pipeline_mode<synchronous>, transform_indices = @transform_12, window_bounds = array<i64: 1, 64>}, {pipeline_mode = #tpu.pipeline_mode<synchronous>, transform_indices = @transform_13, window_bounds = array<i64: 64, 32>}, {pipeline_mode = #tpu.pipeline_mode<synchronous>, transform_indices = @transform_14, window_bounds = array<i64: 1, 32>}, {transform_indices = @transform_15, window_bounds = array<i64: 1, 8, 32>}]} {
    %c0_i32 = arith.constant 0 : i32
    %0 = arith.cmpi eq, %arg1, %c0_i32 : i32
    %1 = arith.extui %0 : i1 to i32
    %c0_i32_0 = arith.constant 0 : i32
    %2 = arith.cmpi ne, %1, %c0_i32_0 : i32
    scf.if %2 {
      %c0_73 = arith.constant 0 : index
      %c0_74 = arith.constant 0 : index
      %c0_75 = arith.constant 0 : index
      %132 = vector.load %arg2[%c0_73, %c0_74, %c0_75] : memref<1x16x32xf32, #tpu.memory_space<vmem>>, vector<1x16x32xf32>
      %133 = vector.shape_cast %132 : vector<1x16x32xf32> to vector<16x32xf32>
      %c0_76 = arith.constant 0 : index
      %c0_77 = arith.constant 0 : index
      %134 = vector.load %arg3[%c0_76, %c0_77] : memref<1x32xf32, #tpu.memory_space<vmem>>, vector<1x32xf32>
      %c0_78 = arith.constant 0 : index
      %c0_79 = arith.constant 0 : index
      %135 = vector.load %arg4[%c0_78, %c0_79] : memref<1x32xf32, #tpu.memory_space<vmem>>, vector<1x32xf32>
      %cst_80 = arith.constant dense<0.000000e+00> : vector<16xf32>
      %136 = vector.multi_reduction <add>, %133, %cst_80 [1] : vector<16x32xf32> to vector<16xf32>
      %137 = vector.shape_cast %136 : vector<16xf32> to vector<16x1xf32>
      %cst_81 = arith.constant 3.200000e+01 : f32
      %138 = vector.broadcast %cst_81 : f32 to vector<16x1xf32>
      %139 = arith.divf %137, %138 : vector<16x1xf32>
      %140 = vector.broadcast %139 : vector<16x1xf32> to vector<16x32xf32>
      %141 = arith.subf %133, %140 : vector<16x32xf32>
      %142 = arith.mulf %141, %141 : vector<16x32xf32>
      %cst_82 = arith.constant dense<0.000000e+00> : vector<16xf32>
      %143 = vector.multi_reduction <add>, %142, %cst_82 [1] : vector<16x32xf32> to vector<16xf32>
      %144 = vector.shape_cast %143 : vector<16xf32> to vector<16x1xf32>
      %cst_83 = arith.constant 3.200000e+01 : f32
      %145 = vector.broadcast %cst_83 : f32 to vector<16x1xf32>
      %146 = arith.divf %144, %145 : vector<16x1xf32>
      %cst_84 = arith.constant 9.99999974E-6 : f32
      %147 = vector.broadcast %cst_84 : f32 to vector<16x1xf32>
      %148 = arith.addf %146, %147 : vector<16x1xf32>
      %149 = math.rsqrt %148 : vector<16x1xf32>
      %150 = vector.broadcast %149 : vector<16x1xf32> to vector<16x32xf32>
      %151 = arith.mulf %141, %150 : vector<16x32xf32>
      %152 = vector.broadcast %134 : vector<1x32xf32> to vector<16x32xf32>
      %153 = arith.mulf %151, %152 : vector<16x32xf32>
      %154 = vector.broadcast %135 : vector<1x32xf32> to vector<16x32xf32>
      %155 = arith.addf %153, %154 : vector<16x32xf32>
      %c0_85 = arith.constant 0 : index
      %c0_86 = arith.constant 0 : index
      %156 = vector.load %arg18[%c0_85, %c0_86] : memref<16x32xf32, #tpu.memory_space<vmem>>, vector<16x32xf32>
      tpu.vector_store %arg18[%c0_85, %c0_86], %155 {strides = array<i32>} : memref<16x32xf32, #tpu.memory_space<vmem>>, vector<16x32xf32>,
      %c0_87 = arith.constant 0 : index
      %c0_88 = arith.constant 0 : index
      %157 = vector.load %arg7[%c0_87, %c0_88] : memref<32x64xf32, #tpu.memory_space<vmem>>, vector<32x64xf32>
      %cst_89 = arith.constant dense<0.000000e+00> : vector<16x64xf32>
      %158 = tpu.matmul %155, %157, %cst_89 {dimension_numbers = #tpu.dot_dimension_numbers<[1], [0], [0], [1], [0, 0, 1, 1], [], []>} : vector<16x32xf32>, vector<32x64xf32>, vector<16x64xf32> -> vector<16x64xf32>
      %c0_90 = arith.constant 0 : index
      %c0_91 = arith.constant 0 : index
      %159 = vector.load %arg8[%c0_90, %c0_91] : memref<1x64xf32, #tpu.memory_space<vmem>>, vector<1x64xf32>
      %160 = vector.broadcast %159 : vector<1x64xf32> to vector<16x64xf32>
      %161 = arith.addf %158, %160 : vector<16x64xf32>
      %c0_92 = arith.constant 0 : index
      %c0_93 = arith.constant 0 : index
      %162 = vector.load %arg19[%c0_92, %c0_93] : memref<16x64xf32, #tpu.memory_space<vmem>>, vector<16x64xf32>
      tpu.vector_store %arg19[%c0_92, %c0_93], %161 {strides = array<i32>} : memref<16x64xf32, #tpu.memory_space<vmem>>, vector<16x64xf32>,
    } else {
    }
    %c8_i32 = arith.constant 8 : i32
    %3 = arith.muli %arg1, %c8_i32 : i32
    %4 = tpu.assume_multiple %3, 8 : i32
    %c0 = arith.constant 0 : index
    %5 = arith.index_cast %4 : i32 to index
    %c0_1 = arith.constant 0 : index
    %6 = vector.load %arg2[%c0, %5, %c0_1] : memref<1x16x32xf32, #tpu.memory_space<vmem>>, vector<1x8x32xf32>
    %7 = vector.shape_cast %6 : vector<1x8x32xf32> to vector<8x32xf32>
    %8 = arith.index_cast %4 : i32 to index
    %c0_2 = arith.constant 0 : index
    %9 = vector.load %arg18[%8, %c0_2] : memref<16x32xf32, #tpu.memory_space<vmem>>, vector<8x32xf32>
    %c0_3 = arith.constant 0 : index
    %c0_4 = arith.constant 0 : index
    %10 = vector.load %arg5[%c0_3, %c0_4] : memref<32x32xf32, #tpu.memory_space<vmem>>, vector<32x32xf32>
    %cst = arith.constant dense<0.000000e+00> : vector<8x32xf32>
    %11 = tpu.matmul %9, %10, %cst {dimension_numbers = #tpu.dot_dimension_numbers<[1], [0], [0], [1], [0, 0, 1, 1], [], []>} : vector<8x32xf32>, vector<32x32xf32>, vector<8x32xf32> -> vector<8x32xf32>
    %c0_5 = arith.constant 0 : index
    %c0_6 = arith.constant 0 : index
    %12 = vector.load %arg6[%c0_5, %c0_6] : memref<1x32xf32, #tpu.memory_space<vmem>>, vector<1x32xf32>
    %13 = vector.broadcast %12 : vector<1x32xf32> to vector<8x32xf32>
    %14 = arith.addf %11, %13 : vector<8x32xf32>
    %cst_7 = arith.constant 0.353553385 : f32
    %15 = vector.broadcast %cst_7 : f32 to vector<8x32xf32>
    %16 = arith.mulf %14, %15 : vector<8x32xf32>
    %17 = vector.extract_strided_slice %16 {offsets = [0, 0], sizes = [8, 8], strides = [1, 1]} : vector<8x32xf32> to vector<8x8xf32>
    %c0_8 = arith.constant 0 : index
    %c0_9 = arith.constant 0 : index
    %18 = vector.load %arg19[%c0_8, %c0_9] : memref<16x64xf32, #tpu.memory_space<vmem>>, vector<16x8xf32>
    %c0_10 = arith.constant 0 : index
    %c32 = arith.constant 32 : index
    %19 = vector.load %arg19[%c0_10, %c32] : memref<16x64xf32, #tpu.memory_space<vmem>>, vector<16x8xf32>
    %cst_11 = arith.constant dense<0.000000e+00> : vector<8x16xf32>
    %20 = tpu.matmul %17, %18, %cst_11 {dimension_numbers = #tpu.dot_dimension_numbers<[1], [1], [0], [0], [0, 0, 1, 0], [], []>} : vector<8x8xf32>, vector<16x8xf32>, vector<8x16xf32> -> vector<8x16xf32>
    %cst_12 = arith.constant dense<0xFF800000> : vector<8xf32>
    %21 = vector.multi_reduction <maximumf>, %20, %cst_12 [1] : vector<8x16xf32> to vector<8xf32>
    %22 = vector.shape_cast %21 : vector<8xf32> to vector<8x1xf32>
    %23 = vector.broadcast %22 : vector<8x1xf32> to vector<8x16xf32>
    %24 = arith.subf %20, %23 : vector<8x16xf32>
    %25 = math.exp %24 : vector<8x16xf32>
    %cst_13 = arith.constant dense<0.000000e+00> : vector<8xf32>
    %26 = vector.multi_reduction <add>, %25, %cst_13 [1] : vector<8x16xf32> to vector<8xf32>
    %27 = vector.shape_cast %26 : vector<8xf32> to vector<8x1xf32>
    %28 = tpu.reciprocal %27 {approx = true} : vector<8x1xf32> -> vector<8x1xf32>
    %29 = vector.broadcast %28 : vector<8x1xf32> to vector<8x16xf32>
    %30 = arith.mulf %25, %29 : vector<8x16xf32>
    %cst_14 = arith.constant dense<0.000000e+00> : vector<8x8xf32>
    %31 = tpu.matmul %30, %19, %cst_14 {dimension_numbers = #tpu.dot_dimension_numbers<[1], [0], [0], [1], [0, 0, 1, 1], [], []>} : vector<8x16xf32>, vector<16x8xf32>, vector<8x8xf32> -> vector<8x8xf32>
    %c0_15 = arith.constant 0 : index
    %c0_16 = arith.constant 0 : index
    %32 = vector.load %arg20[%c0_15, %c0_16] : memref<8x32xf32, #tpu.memory_space<vmem>>, vector<8x8xf32>
    tpu.vector_store %arg20[%c0_15, %c0_16], %31 {strides = array<i32>} : memref<8x32xf32, #tpu.memory_space<vmem>>, vector<8x8xf32>,
    %33 = vector.extract_strided_slice %16 {offsets = [0, 8], sizes = [8, 8], strides = [1, 1]} : vector<8x32xf32> to vector<8x8xf32>
    %c0_17 = arith.constant 0 : index
    %c8 = arith.constant 8 : index
    %34 = vector.load %arg19[%c0_17, %c8] : memref<16x64xf32, #tpu.memory_space<vmem>>, vector<16x8xf32>
    %c0_18 = arith.constant 0 : index
    %c40 = arith.constant 40 : index
    %35 = vector.load %arg19[%c0_18, %c40] : memref<16x64xf32, #tpu.memory_space<vmem>>, vector<16x8xf32>
    %cst_19 = arith.constant dense<0.000000e+00> : vector<8x16xf32>
    %36 = tpu.matmul %33, %34, %cst_19 {dimension_numbers = #tpu.dot_dimension_numbers<[1], [1], [0], [0], [0, 0, 1, 0], [], []>} : vector<8x8xf32>, vector<16x8xf32>, vector<8x16xf32> -> vector<8x16xf32>
    %cst_20 = arith.constant dense<0xFF800000> : vector<8xf32>
    %37 = vector.multi_reduction <maximumf>, %36, %cst_20 [1] : vector<8x16xf32> to vector<8xf32>
    %38 = vector.shape_cast %37 : vector<8xf32> to vector<8x1xf32>
    %39 = vector.broadcast %38 : vector<8x1xf32> to vector<8x16xf32>
    %40 = arith.subf %36, %39 : vector<8x16xf32>
    %41 = math.exp %40 : vector<8x16xf32>
    %cst_21 = arith.constant dense<0.000000e+00> : vector<8xf32>
    %42 = vector.multi_reduction <add>, %41, %cst_21 [1] : vector<8x16xf32> to vector<8xf32>
    %43 = vector.shape_cast %42 : vector<8xf32> to vector<8x1xf32>
    %44 = tpu.reciprocal %43 {approx = true} : vector<8x1xf32> -> vector<8x1xf32>
    %45 = vector.broadcast %44 : vector<8x1xf32> to vector<8x16xf32>
    %46 = arith.mulf %41, %45 : vector<8x16xf32>
    %cst_22 = arith.constant dense<0.000000e+00> : vector<8x8xf32>
    %47 = tpu.matmul %46, %35, %cst_22 {dimension_numbers = #tpu.dot_dimension_numbers<[1], [0], [0], [1], [0, 0, 1, 1], [], []>} : vector<8x16xf32>, vector<16x8xf32>, vector<8x8xf32> -> vector<8x8xf32>
    %c0_23 = arith.constant 0 : index
    %c8_24 = arith.constant 8 : index
    %48 = vector.load %arg20[%c0_23, %c8_24] : memref<8x32xf32, #tpu.memory_space<vmem>>, vector<8x8xf32>
    tpu.vector_store %arg20[%c0_23, %c8_24], %47 {strides = array<i32>} : memref<8x32xf32, #tpu.memory_space<vmem>>, vector<8x8xf32>,
    %49 = vector.extract_strided_slice %16 {offsets = [0, 16], sizes = [8, 8], strides = [1, 1]} : vector<8x32xf32> to vector<8x8xf32>
    %c0_25 = arith.constant 0 : index
    %c16 = arith.constant 16 : index
    %50 = vector.load %arg19[%c0_25, %c16] : memref<16x64xf32, #tpu.memory_space<vmem>>, vector<16x8xf32>
    %c0_26 = arith.constant 0 : index
    %c48 = arith.constant 48 : index
    %51 = vector.load %arg19[%c0_26, %c48] : memref<16x64xf32, #tpu.memory_space<vmem>>, vector<16x8xf32>
    %cst_27 = arith.constant dense<0.000000e+00> : vector<8x16xf32>
    %52 = tpu.matmul %49, %50, %cst_27 {dimension_numbers = #tpu.dot_dimension_numbers<[1], [1], [0], [0], [0, 0, 1, 0], [], []>} : vector<8x8xf32>, vector<16x8xf32>, vector<8x16xf32> -> vector<8x16xf32>
    %cst_28 = arith.constant dense<0xFF800000> : vector<8xf32>
    %53 = vector.multi_reduction <maximumf>, %52, %cst_28 [1] : vector<8x16xf32> to vector<8xf32>
    %54 = vector.shape_cast %53 : vector<8xf32> to vector<8x1xf32>
    %55 = vector.broadcast %54 : vector<8x1xf32> to vector<8x16xf32>
    %56 = arith.subf %52, %55 : vector<8x16xf32>
    %57 = math.exp %56 : vector<8x16xf32>
    %cst_29 = arith.constant dense<0.000000e+00> : vector<8xf32>
    %58 = vector.multi_reduction <add>, %57, %cst_29 [1] : vector<8x16xf32> to vector<8xf32>
    %59 = vector.shape_cast %58 : vector<8xf32> to vector<8x1xf32>
    %60 = tpu.reciprocal %59 {approx = true} : vector<8x1xf32> -> vector<8x1xf32>
    %61 = vector.broadcast %60 : vector<8x1xf32> to vector<8x16xf32>
    %62 = arith.mulf %57, %61 : vector<8x16xf32>
    %cst_30 = arith.constant dense<0.000000e+00> : vector<8x8xf32>
    %63 = tpu.matmul %62, %51, %cst_30 {dimension_numbers = #tpu.dot_dimension_numbers<[1], [0], [0], [1], [0, 0, 1, 1], [], []>} : vector<8x16xf32>, vector<16x8xf32>, vector<8x8xf32> -> vector<8x8xf32>
    %c0_31 = arith.constant 0 : index
    %c16_32 = arith.constant 16 : index
    %64 = vector.load %arg20[%c0_31, %c16_32] : memref<8x32xf32, #tpu.memory_space<vmem>>, vector<8x8xf32>
    tpu.vector_store %arg20[%c0_31, %c16_32], %63 {strides = array<i32>} : memref<8x32xf32, #tpu.memory_space<vmem>>, vector<8x8xf32>,
    %65 = vector.extract_strided_slice %16 {offsets = [0, 24], sizes = [8, 8], strides = [1, 1]} : vector<8x32xf32> to vector<8x8xf32>
    %c0_33 = arith.constant 0 : index
    %c24 = arith.constant 24 : index
    %66 = vector.load %arg19[%c0_33, %c24] : memref<16x64xf32, #tpu.memory_space<vmem>>, vector<16x8xf32>
    %c0_34 = arith.constant 0 : index
    %c56 = arith.constant 56 : index
    %67 = vector.load %arg19[%c0_34, %c56] : memref<16x64xf32, #tpu.memory_space<vmem>>, vector<16x8xf32>
    %cst_35 = arith.constant dense<0.000000e+00> : vector<8x16xf32>
    %68 = tpu.matmul %65, %66, %cst_35 {dimension_numbers = #tpu.dot_dimension_numbers<[1], [1], [0], [0], [0, 0, 1, 0], [], []>} : vector<8x8xf32>, vector<16x8xf32>, vector<8x16xf32> -> vector<8x16xf32>
    %cst_36 = arith.constant dense<0xFF800000> : vector<8xf32>
    %69 = vector.multi_reduction <maximumf>, %68, %cst_36 [1] : vector<8x16xf32> to vector<8xf32>
    %70 = vector.shape_cast %69 : vector<8xf32> to vector<8x1xf32>
    %71 = vector.broadcast %70 : vector<8x1xf32> to vector<8x16xf32>
    %72 = arith.subf %68, %71 : vector<8x16xf32>
    %73 = math.exp %72 : vector<8x16xf32>
    %cst_37 = arith.constant dense<0.000000e+00> : vector<8xf32>
    %74 = vector.multi_reduction <add>, %73, %cst_37 [1] : vector<8x16xf32> to vector<8xf32>
    %75 = vector.shape_cast %74 : vector<8xf32> to vector<8x1xf32>
    %76 = tpu.reciprocal %75 {approx = true} : vector<8x1xf32> -> vector<8x1xf32>
    %77 = vector.broadcast %76 : vector<8x1xf32> to vector<8x16xf32>
    %78 = arith.mulf %73, %77 : vector<8x16xf32>
    %cst_38 = arith.constant dense<0.000000e+00> : vector<8x8xf32>
    %79 = tpu.matmul %78, %67, %cst_38 {dimension_numbers = #tpu.dot_dimension_numbers<[1], [0], [0], [1], [0, 0, 1, 1], [], []>} : vector<8x16xf32>, vector<16x8xf32>, vector<8x8xf32> -> vector<8x8xf32>
    %c0_39 = arith.constant 0 : index
    %c24_40 = arith.constant 24 : index
    %80 = vector.load %arg20[%c0_39, %c24_40] : memref<8x32xf32, #tpu.memory_space<vmem>>, vector<8x8xf32>
    tpu.vector_store %arg20[%c0_39, %c24_40], %79 {strides = array<i32>} : memref<8x32xf32, #tpu.memory_space<vmem>>, vector<8x8xf32>,
    %c0_41 = arith.constant 0 : index
    %c0_42 = arith.constant 0 : index
    %81 = vector.load %arg20[%c0_41, %c0_42] : memref<8x32xf32, #tpu.memory_space<vmem>>, vector<8x32xf32>
    %c0_43 = arith.constant 0 : index
    %c0_44 = arith.constant 0 : index
    %82 = vector.load %arg9[%c0_43, %c0_44] : memref<32x32xf32, #tpu.memory_space<vmem>>, vector<32x32xf32>
    %cst_45 = arith.constant dense<0.000000e+00> : vector<8x32xf32>
    %83 = tpu.matmul %81, %82, %cst_45 {dimension_numbers = #tpu.dot_dimension_numbers<[1], [0], [0], [1], [0, 0, 1, 1], [], []>} : vector<8x32xf32>, vector<32x32xf32>, vector<8x32xf32> -> vector<8x32xf32>
    %c0_46 = arith.constant 0 : index
    %c0_47 = arith.constant 0 : index
    %84 = vector.load %arg10[%c0_46, %c0_47] : memref<1x32xf32, #tpu.memory_space<vmem>>, vector<1x32xf32>
    %85 = vector.broadcast %84 : vector<1x32xf32> to vector<8x32xf32>
    %86 = arith.addf %83, %85 : vector<8x32xf32>
    %87 = arith.addf %86, %7 : vector<8x32xf32>
    %c0_48 = arith.constant 0 : index
    %c0_49 = arith.constant 0 : index
    %88 = vector.load %arg11[%c0_48, %c0_49] : memref<1x32xf32, #tpu.memory_space<vmem>>, vector<1x32xf32>
    %c0_50 = arith.constant 0 : index
    %c0_51 = arith.constant 0 : index
    %89 = vector.load %arg12[%c0_50, %c0_51] : memref<1x32xf32, #tpu.memory_space<vmem>>, vector<1x32xf32>
    %cst_52 = arith.constant dense<0.000000e+00> : vector<8xf32>
    %90 = vector.multi_reduction <add>, %87, %cst_52 [1] : vector<8x32xf32> to vector<8xf32>
    %91 = vector.shape_cast %90 : vector<8xf32> to vector<8x1xf32>
    %cst_53 = arith.constant 3.200000e+01 : f32
    %92 = vector.broadcast %cst_53 : f32 to vector<8x1xf32>
    %93 = arith.divf %91, %92 : vector<8x1xf32>
    %94 = vector.broadcast %93 : vector<8x1xf32> to vector<8x32xf32>
    %95 = arith.subf %87, %94 : vector<8x32xf32>
    %96 = arith.mulf %95, %95 : vector<8x32xf32>
    %cst_54 = arith.constant dense<0.000000e+00> : vector<8xf32>
    %97 = vector.multi_reduction <add>, %96, %cst_54 [1] : vector<8x32xf32> to vector<8xf32>
    %98 = vector.shape_cast %97 : vector<8xf32> to vector<8x1xf32>
    %cst_55 = arith.constant 3.200000e+01 : f32
    %99 = vector.broadcast %cst_55 : f32 to vector<8x1xf32>
    %100 = arith.divf %98, %99 : vector<8x1xf32>
    %cst_56 = arith.constant 9.99999974E-6 : f32
    %101 = vector.broadcast %cst_56 : f32 to vector<8x1xf32>
    %102 = arith.addf %100, %101 : vector<8x1xf32>
    %103 = math.rsqrt %102 : vector<8x1xf32>
    %104 = vector.broadcast %103 : vector<8x1xf32> to vector<8x32xf32>
    %105 = arith.mulf %95, %104 : vector<8x32xf32>
    %106 = vector.broadcast %88 : vector<1x32xf32> to vector<8x32xf32>
    %107 = arith.mulf %105, %106 : vector<8x32xf32>
    %108 = vector.broadcast %89 : vector<1x32xf32> to vector<8x32xf32>
    %109 = arith.addf %107, %108 : vector<8x32xf32>
    %c0_57 = arith.constant 0 : index
    %c0_58 = arith.constant 0 : index
    %110 = vector.load %arg13[%c0_57, %c0_58] : memref<32x64xf32, #tpu.memory_space<vmem>>, vector<32x64xf32>
    %cst_59 = arith.constant dense<0.000000e+00> : vector<8x64xf32>
    %111 = tpu.matmul %109, %110, %cst_59 {dimension_numbers = #tpu.dot_dimension_numbers<[1], [0], [0], [1], [0, 0, 1, 1], [], []>} : vector<8x32xf32>, vector<32x64xf32>, vector<8x64xf32> -> vector<8x64xf32>
    %c0_60 = arith.constant 0 : index
    %c0_61 = arith.constant 0 : index
    %112 = vector.load %arg14[%c0_60, %c0_61] : memref<1x64xf32, #tpu.memory_space<vmem>>, vector<1x64xf32>
    %113 = vector.broadcast %112 : vector<1x64xf32> to vector<8x64xf32>
    %114 = arith.addf %111, %113 : vector<8x64xf32>
    %cst_62 = arith.constant 5.000000e-01 : f32
    %115 = vector.broadcast %cst_62 : f32 to vector<8x64xf32>
    %116 = arith.mulf %115, %114 : vector<8x64xf32>
    %cst_63 = arith.constant 0.707106769 : f32
    %117 = vector.broadcast %cst_63 : f32 to vector<8x64xf32>
    %118 = arith.mulf %114, %117 : vector<8x64xf32>
    %119 = math.erf %118 : vector<8x64xf32>
    %cst_64 = arith.constant 1.000000e+00 : f32
    %120 = vector.broadcast %cst_64 : f32 to vector<8x64xf32>
    %121 = arith.addf %120, %119 : vector<8x64xf32>
    %122 = arith.mulf %116, %121 : vector<8x64xf32>
    %c0_65 = arith.constant 0 : index
    %c0_66 = arith.constant 0 : index
    %123 = vector.load %arg15[%c0_65, %c0_66] : memref<64x32xf32, #tpu.memory_space<vmem>>, vector<64x32xf32>
    %cst_67 = arith.constant dense<0.000000e+00> : vector<8x32xf32>
    %124 = tpu.matmul %122, %123, %cst_67 {dimension_numbers = #tpu.dot_dimension_numbers<[1], [0], [0], [1], [0, 0, 1, 1], [], []>} : vector<8x64xf32>, vector<64x32xf32>, vector<8x32xf32> -> vector<8x32xf32>
    %c0_68 = arith.constant 0 : index
    %c0_69 = arith.constant 0 : index
    %125 = vector.load %arg16[%c0_68, %c0_69] : memref<1x32xf32, #tpu.memory_space<vmem>>, vector<1x32xf32>
    %126 = vector.broadcast %125 : vector<1x32xf32> to vector<8x32xf32>
    %127 = arith.addf %124, %126 : vector<8x32xf32>
    %128 = arith.addf %127, %87 : vector<8x32xf32>
    %c0_70 = arith.constant 0 : index
    %c0_71 = arith.constant 0 : index
    %c0_72 = arith.constant 0 : index
    %129 = vector.load %arg17[%c0_70, %c0_71, %c0_72] : memref<1x8x32xf32, #tpu.memory_space<vmem>>, vector<1x8x32xf32>
    %130 = vector.shape_cast %129 : vector<1x8x32xf32> to vector<8x32xf32>
    %131 = vector.shape_cast %128 : vector<8x32xf32> to vector<1x8x32xf32>
    tpu.vector_store %arg17[%c0_70, %c0_71, %c0_72], %131 {strides = array<i32>} : memref<1x8x32xf32, #tpu.memory_space<vmem>>, vector<1x8x32xf32>,
    return
  }
  func.func @transform_0(%arg0: i32, %arg1: i32) -> (i32, i32, i32) {
    %c0_i32 = arith.constant 0 : i32
    %c0_i32_0 = arith.constant 0 : i32
    %c0_i32_1 = arith.constant 0 : i32
    return %arg0, %c0_i32, %c0_i32_0 : i32, i32, i32
  }
  func.func @transform_1(%arg0: i32, %arg1: i32) -> (i32, i32) {
    %c0_i32 = arith.constant 0 : i32
    %c0_i32_0 = arith.constant 0 : i32
    %c0_i32_1 = arith.constant 0 : i32
    return %c0_i32, %c0_i32_0 : i32, i32
  }
  func.func @transform_2(%arg0: i32, %arg1: i32) -> (i32, i32) {
    %c0_i32 = arith.constant 0 : i32
    %c0_i32_0 = arith.constant 0 : i32
    %c0_i32_1 = arith.constant 0 : i32
    return %c0_i32, %c0_i32_0 : i32, i32
  }
  func.func @transform_3(%arg0: i32, %arg1: i32) -> (i32, i32) {
    %c0_i32 = arith.constant 0 : i32
    %c0_i32_0 = arith.constant 0 : i32
    %c0_i32_1 = arith.constant 0 : i32
    return %c0_i32, %c0_i32_0 : i32, i32
  }
  func.func @transform_4(%arg0: i32, %arg1: i32) -> (i32, i32) {
    %c0_i32 = arith.constant 0 : i32
    %c0_i32_0 = arith.constant 0 : i32
    %c0_i32_1 = arith.constant 0 : i32
    return %c0_i32, %c0_i32_0 : i32, i32
  }
  func.func @transform_5(%arg0: i32, %arg1: i32) -> (i32, i32) {
    %c0_i32 = arith.constant 0 : i32
    %c0_i32_0 = arith.constant 0 : i32
    %c0_i32_1 = arith.constant 0 : i32
    return %c0_i32, %c0_i32_0 : i32, i32
  }
  func.func @transform_6(%arg0: i32, %arg1: i32) -> (i32, i32) {
    %c0_i32 = arith.constant 0 : i32
    %c0_i32_0 = arith.constant 0 : i32
    %c0_i32_1 = arith.constant 0 : i32
    return %c0_i32, %c0_i32_0 : i32, i32
  }
  func.func @transform_7(%arg0: i32, %arg1: i32) -> (i32, i32) {
    %c0_i32 = arith.constant 0 : i32
    %c0_i32_0 = arith.constant 0 : i32
    %c0_i32_1 = arith.constant 0 : i32
    return %c0_i32, %c0_i32_0 : i32, i32
  }
  func.func @transform_8(%arg0: i32, %arg1: i32) -> (i32, i32) {
    %c0_i32 = arith.constant 0 : i32
    %c0_i32_0 = arith.constant 0 : i32
    %c0_i32_1 = arith.constant 0 : i32
    return %c0_i32, %c0_i32_0 : i32, i32
  }
  func.func @transform_9(%arg0: i32, %arg1: i32) -> (i32, i32) {
    %c0_i32 = arith.constant 0 : i32
    %c0_i32_0 = arith.constant 0 : i32
    %c0_i32_1 = arith.constant 0 : i32
    return %c0_i32, %c0_i32_0 : i32, i32
  }
  func.func @transform_10(%arg0: i32, %arg1: i32) -> (i32, i32) {
    %c0_i32 = arith.constant 0 : i32
    %c0_i32_0 = arith.constant 0 : i32
    %c0_i32_1 = arith.constant 0 : i32
    return %c0_i32, %c0_i32_0 : i32, i32
  }
  func.func @transform_11(%arg0: i32, %arg1: i32) -> (i32, i32) {
    %c0_i32 = arith.constant 0 : i32
    %c0_i32_0 = arith.constant 0 : i32
    %c0_i32_1 = arith.constant 0 : i32
    return %c0_i32, %c0_i32_0 : i32, i32
  }
  func.func @transform_12(%arg0: i32, %arg1: i32) -> (i32, i32) {
    %c0_i32 = arith.constant 0 : i32
    %c0_i32_0 = arith.constant 0 : i32
    %c0_i32_1 = arith.constant 0 : i32
    return %c0_i32, %c0_i32_0 : i32, i32
  }
  func.func @transform_13(%arg0: i32, %arg1: i32) -> (i32, i32) {
    %c0_i32 = arith.constant 0 : i32
    %c0_i32_0 = arith.constant 0 : i32
    %c0_i32_1 = arith.constant 0 : i32
    return %c0_i32, %c0_i32_0 : i32, i32
  }
  func.func @transform_14(%arg0: i32, %arg1: i32) -> (i32, i32) {
    %c0_i32 = arith.constant 0 : i32
    %c0_i32_0 = arith.constant 0 : i32
    %c0_i32_1 = arith.constant 0 : i32
    return %c0_i32, %c0_i32_0 : i32, i32
  }
  func.func @transform_15(%arg0: i32, %arg1: i32) -> (i32, i32, i32) {
    %c0_i32 = arith.constant 0 : i32
    %c0_i32_0 = arith.constant 0 : i32
    return %arg0, %arg1, %c0_i32 : i32, i32, i32
  }
}

</mosaic_0001>

<llo_original>
// kernel: tpu_custom_call.1
$region0: #{tpu_custom_call.1}
  #allocation0 [shape = 'u32[]', space=smem, size = 0x4, offset = 0x4, fixed_abs, tag = 'smem constant byte address 0x4 - core index']
  #allocation1 [shape = 'u32[72,128]{1,0:T(1,128)}', space=vmem, size = 0x9000, scoped, tag = 'internal scratch']
  #allocation2 [shape = 'f32[16,32]{1,0:T(8,128)}', space=vmem, size = 0x2000, scoped, tag = 'scratch operand']
  #allocation3 [shape = 'f32[16,64]{1,0:T(8,128)}', space=vmem, size = 0x2000, scoped, tag = 'scratch operand']
  #allocation4 [shape = 'f32[8,32]{1,0:T(8,128)}', space=vmem, size = 0x1000, scoped, tag = 'scratch operand']
  %s0 = inlined_call_operand.vmem [shape: f32[2,16,32], index: 0, kind: input, shape index: {}]
  %s1 = inlined_call_operand.hbm [shape: f32[1,32], index: 1, kind: input, shape index: {}]
  %s2 = inlined_call_operand.vmem [shape: f32[1,32], index: 2, kind: input, shape index: {}]
  %s3 = inlined_call_operand.vmem [shape: f32[32,32], index: 3, kind: input, shape index: {}]
  %s4 = inlined_call_operand.vmem [shape: f32[1,32], index: 4, kind: input, shape index: {}]
  %s5 = inlined_call_operand.vmem [shape: f32[32,64], index: 5, kind: input, shape index: {}]
  %s6 = inlined_call_operand.vmem [shape: f32[1,64], index: 6, kind: input, shape index: {}]
  %s7 = inlined_call_operand.hbm [shape: f32[32,32], index: 7, kind: input, shape index: {}]
  %s8 = inlined_call_operand.vmem [shape: f32[1,32], index: 8, kind: input, shape index: {}]
  %s9 = inlined_call_operand.vmem [shape: f32[1,32], index: 9, kind: input, shape index: {}]
  %s10 = inlined_call_operand.vmem [shape: f32[1,32], index: 10, kind: input, shape index: {}]
  %s11 = inlined_call_operand.hbm [shape: f32[32,64], index: 11, kind: input, shape index: {}]
  %s12 = inlined_call_operand.vmem [shape: f32[1,64], index: 12, kind: input, shape index: {}]
  %s13 = inlined_call_operand.vmem [shape: f32[64,32], index: 13, kind: input, shape index: {}]
  %s14 = inlined_call_operand.vmem [shape: f32[1,32], index: 14, kind: input, shape index: {}]
  %s15 = inlined_call_operand.hbm [shape: f32[2,16,32], index: 15, kind: output, shape index: {}]
  %s16 = sld [smem:[#allocation0]]
  $region109: #{tpu_custom_call.1} parent=0
    _
  %s18 = ssub.s32 1, %s16
  %s19 = scalar_select 0, %s18, %s16
  $region1: #{tpu_custom_call.1} parent=0
    #allocation5 [shape = 'u8[512]{0}', space=vmem, size = 0x400, scoped, tag = 'input window, operand 1, single buffered']
    #allocation6 [shape = 's32[2]{0}', space=sflag, size = 0x8, scoped, tag = 'scoped memory for tpu_custom_call.1']
    #allocation7 [shape = 's32[2]{0}', space=sflag, size = 0x8, scoped, tag = 'scoped memory for tpu_custom_call.1']
    #allocation8 [shape = 'u8[16384]{0}', space=vmem, size = 0x4000, scoped, tag = 'input window, operand 7, single buffered']
    #allocation9 [shape = 's32[1]{0}', space=sflag, size = 0x4, scoped, tag = 'scoped memory for tpu_custom_call.1']
    #allocation10 [shape = 'u8[16384]{0}', space=vmem, size = 0x4000, scoped, tag = 'input window, operand 11, single buffered']
    #allocation11 [shape = 'u8[8192]{0}', space=vmem, size = 0x2000, scoped, tag = 'output window, operand 0']
    %20 = vsyncpa [#allocation6], 0
    %21 = vsyncpa [#allocation9], 0
    %22 = vsyncpa [#allocation7], 0
    %s23 = scalar_lea.sflag [#allocation7], 1
    %24 = vsyncpa %s23, 0
    loop: start=0, step=1, limit=6
    $region2: #{tpu_custom_call.1} parent=1 // loop_pre_header
      _
    $region3: #{tpu_custom_call.1} parent=1 // loop_header
      %s26 = sphi 0, %s30
      %p27 = scmp.ge.s32.totalorder %s26, 6
      %s33 = sphi 0, %s45
      %s34 = sphi 0, %s41
      %s35 = sphi 0, %s33
      %s36 = sphi 0, %s34
      %s37 = sphi 0, %s35
      %s38 = sphi 0, %s36
      %s48 = sphi 0, %s50
      %s51 = sphi 0, %s48
      %s52 = sphi 0, %s51
      %s68 = sphi 0, %s52
      %s72 = sphi 0, %s72
      %s74 = sphi 0, %s72
      %s75 = sphi 0, %s74
      %s89 = sphi 0, %s75
      %s93 = sphi 0, %s93
      %s95 = sphi 0, %s93
      %s96 = sphi 0, %s95
      %s110 = sphi 0, %s96
      %s114 = sphi 0, %s114
      %s116 = sphi 0, %s114
      %s117 = sphi 0, %s116
      %s131 = sphi 0, %s117
      %s135 = sphi 0, %s135
      %s137 = sphi 0, %s135
      %s138 = sphi 0, %s137
      %s152 = sphi 0, %s138
      %s156 = sphi 0, %s156
      %s158 = sphi 0, %s156
      %s159 = sphi 0, %s158
      %s173 = sphi 0, %s159
      %s177 = sphi 0, %s177
      %s179 = sphi 0, %s177
      %s180 = sphi 0, %s179
      %s194 = sphi 0, %s180
      %s198 = sphi 0, %s198
      %s200 = sphi 0, %s198
      %s201 = sphi 0, %s200
      %s215 = sphi 0, %s201
      %s219 = sphi 0, %s219
      %s221 = sphi 0, %s219
      %s222 = sphi 0, %s221
      %s236 = sphi 0, %s222
      %s240 = sphi 0, %s240
      %s242 = sphi 0, %s240
      %s243 = sphi 0, %s242
      %s257 = sphi 0, %s243
      %s261 = sphi 0, %s261
      %s263 = sphi 0, %s261
      %s264 = sphi 0, %s263
      %s278 = sphi 0, %s264
      %s282 = sphi 0, %s282
      %s284 = sphi 0, %s282
      %s285 = sphi 0, %s284
      %s299 = sphi 0, %s285
      %s303 = sphi 0, %s303
      %s305 = sphi 0, %s303
      %s306 = sphi 0, %s305
      %s320 = sphi 0, %s306
      %s324 = sphi 0, %s324
      %s326 = sphi 0, %s324
      %s327 = sphi 0, %s326
      %s341 = sphi 0, %s327
      %s345 = sphi 0, %s345
      %s347 = sphi 0, %s345
      %s348 = sphi 0, %s347
      %s362 = sphi 0, %s348
      %s370 = sphi 0, %s372
      %s373 = sphi 0, %s370
      %s374 = sphi 0, %s373
      %s390 = sphi 0, %s374
    $region4: #{tpu_custom_call.1} parent=1 // loop_header_branch
      %29 = sbr.rel (%p27) target = $region8
    $region5: #{tpu_custom_call.1} parent=1 // loop_body
      %s31 = ssub.s32 %s26, 1
      %s32 = ssub.s32 %s26, 2
      %s39 = sadd.s32 1, %s34
      %p40 = scmp.ge.s32.totalorder %s39, 2
      %s41 = scalar_select %p40, 0, %s39
      %s42 = sadd.s32 1, %s33
      %s43 = scalar_select %p40, %s42, %s33
      %p44 = scmp.ge.s32.totalorder %s43, 2
      %s45 = scalar_select %p44, 0, %s43
      %s46 = ssub.s32 %s33, %s45
      %p47 = scmp.eq.s32.totalorder %s46, 0
      %s49 = sadd.s32 %s48, 1
      %s50 = scalar_select %p47, %s48, %s49
      %p53 = pneg %p47
      %p54 = scmp.eq.s32.totalorder %s26, 3
      %p55 = por %p53, %p54
      %p56 = scmp.ne.s32.totalorder %s48, %s51
      %p57 = scmp.eq.s32.totalorder %s26, 0
      %p58 = por %p56, %p57
      %p59 = scmp.ne.s32.totalorder %s48, %s51
      %p60 = scmp.eq.s32.totalorder %s31, 3
      %p61 = por %p59, %p60
      %p62 = scmp.ne.s32.totalorder %s51, %s52
      %p63 = scmp.eq.s32.totalorder %s31, 0
      %p64 = por %p62, %p63
      %p65 = scmp.ne.s32.totalorder %s51, %s52
      %p66 = scmp.eq.s32.totalorder %s32, 3
      %p67 = por %p65, %p66
      %p69 = scmp.ne.s32.totalorder %s52, %s68
      %p70 = scmp.eq.s32.totalorder %s32, 0
      %p71 = por %p69, %p70
      %s73 = sadd.s32 %s72, 1
      %p76 = scmp.eq.s32.totalorder %s26, 3
      %p77 = scmp.ne.s32.totalorder %s72, %s74
      %p78 = scmp.eq.s32.totalorder %s26, 0
      %p79 = por %p77, %p78
      %p80 = scmp.ne.s32.totalorder %s72, %s74
      %p81 = scmp.eq.s32.totalorder %s31, 3
      %p82 = por %p80, %p81
      %p83 = scmp.ne.s32.totalorder %s74, %s75
      %p84 = scmp.eq.s32.totalorder %s31, 0
      %p85 = por %p83, %p84
      %p86 = scmp.ne.s32.totalorder %s74, %s75
      %p87 = scmp.eq.s32.totalorder %s32, 3
      %p88 = por %p86, %p87
      %p90 = scmp.ne.s32.totalorder %s75, %s89
      %p91 = scmp.eq.s32.totalorder %s32, 0
      %p92 = por %p90, %p91
      %s94 = sadd.s32 %s93, 1
      %p97 = scmp.eq.s32.totalorder %s26, 3
      %p98 = scmp.ne.s32.totalorder %s93, %s95
      %p99 = scmp.eq.s32.totalorder %s26, 0
      %p100 = por %p98, %p99
      %p101 = scmp.ne.s32.totalorder %s93, %s95
      %p102 = scmp.eq.s32.totalorder %s31, 3
      %p103 = por %p101, %p102
      %p104 = scmp.ne.s32.totalorder %s95, %s96
      %p105 = scmp.eq.s32.totalorder %s31, 0
      %p106 = por %p104, %p105
      %p107 = scmp.ne.s32.totalorder %s95, %s96
      %p108 = scmp.eq.s32.totalorder %s32, 3
      %p109 = por %p107, %p108
      %p111 = scmp.ne.s32.totalorder %s96, %s110
      %p112 = scmp.eq.s32.totalorder %s32, 0
      %p113 = por %p111, %p112
      %s115 = sadd.s32 %s114, 1
      %p118 = scmp.eq.s32.totalorder %s26, 3
      %p119 = scmp.ne.s32.totalorder %s114, %s116
      %p120 = scmp.eq.s32.totalorder %s26, 0
      %p121 = por %p119, %p120
      %p122 = scmp.ne.s32.totalorder %s114, %s116
      %p123 = scmp.eq.s32.totalorder %s31, 3
      %p124 = por %p122, %p123
      %p125 = scmp.ne.s32.totalorder %s116, %s117
      %p126 = scmp.eq.s32.totalorder %s31, 0
      %p127 = por %p125, %p126
      %p128 = scmp.ne.s32.totalorder %s116, %s117
      %p129 = scmp.eq.s32.totalorder %s32, 3
      %p130 = por %p128, %p129
      %p132 = scmp.ne.s32.totalorder %s117, %s131
      %p133 = scmp.eq.s32.totalorder %s32, 0
      %p134 = por %p132, %p133
      %s136 = sadd.s32 %s135, 1
      %p139 = scmp.eq.s32.totalorder %s26, 3
      %p140 = scmp.ne.s32.totalorder %s135, %s137
      %p141 = scmp.eq.s32.totalorder %s26, 0
      %p142 = por %p140, %p141
      %p143 = scmp.ne.s32.totalorder %s135, %s137
      %p144 = scmp.eq.s32.totalorder %s31, 3
      %p145 = por %p143, %p144
      %p146 = scmp.ne.s32.totalorder %s137, %s138
      %p147 = scmp.eq.s32.totalorder %s31, 0
      %p148 = por %p146, %p147
      %p149 = scmp.ne.s32.totalorder %s137, %s138
      %p150 = scmp.eq.s32.totalorder %s32, 3
      %p151 = por %p149, %p150
      %p153 = scmp.ne.s32.totalorder %s138, %s152
      %p154 = scmp.eq.s32.totalorder %s32, 0
      %p155 = por %p153, %p154
      %s157 = sadd.s32 %s156, 1
      %p160 = scmp.eq.s32.totalorder %s26, 3
      %p161 = scmp.ne.s32.totalorder %s156, %s158
      %p162 = scmp.eq.s32.totalorder %s26, 0
      %p163 = por %p161, %p162
      %p164 = scmp.ne.s32.totalorder %s156, %s158
      %p165 = scmp.eq.s32.totalorder %s31, 3
      %p166 = por %p164, %p165
      %p167 = scmp.ne.s32.totalorder %s158, %s159
      %p168 = scmp.eq.s32.totalorder %s31, 0
      %p169 = por %p167, %p168
      %p170 = scmp.ne.s32.totalorder %s158, %s159
      %p171 = scmp.eq.s32.totalorder %s32, 3
      %p172 = por %p170, %p171
      %p174 = scmp.ne.s32.totalorder %s159, %s173
      %p175 = scmp.eq.s32.totalorder %s32, 0
      %p176 = por %p174, %p175
      %s178 = sadd.s32 %s177, 1
      %p181 = scmp.eq.s32.totalorder %s26, 3
      %p182 = scmp.ne.s32.totalorder %s177, %s179
      %p183 = scmp.eq.s32.totalorder %s26, 0
      %p184 = por %p182, %p183
      %p185 = scmp.ne.s32.totalorder %s177, %s179
      %p186 = scmp.eq.s32.totalorder %s31, 3
      %p187 = por %p185, %p186
      %p188 = scmp.ne.s32.totalorder %s179, %s180
      %p189 = scmp.eq.s32.totalorder %s31, 0
      %p190 = por %p188, %p189
      %p191 = scmp.ne.s32.totalorder %s179, %s180
      %p192 = scmp.eq.s32.totalorder %s32, 3
      %p193 = por %p191, %p192
      %p195 = scmp.ne.s32.totalorder %s180, %s194
      %p196 = scmp.eq.s32.totalorder %s32, 0
      %p197 = por %p195, %p196
      %s199 = sadd.s32 %s198, 1
      %p202 = scmp.eq.s32.totalorder %s26, 3
      %p203 = scmp.ne.s32.totalorder %s198, %s200
      %p204 = scmp.eq.s32.totalorder %s26, 0
      %p205 = por %p203, %p204
      %p206 = scmp.ne.s32.totalorder %s198, %s200
      %p207 = scmp.eq.s32.totalorder %s31, 3
      %p208 = por %p206, %p207
      %p209 = scmp.ne.s32.totalorder %s200, %s201
      %p210 = scmp.eq.s32.totalorder %s31, 0
      %p211 = por %p209, %p210
      %p212 = scmp.ne.s32.totalorder %s200, %s201
      %p213 = scmp.eq.s32.totalorder %s32, 3
      %p214 = por %p212, %p213
      %p216 = scmp.ne.s32.totalorder %s201, %s215
      %p217 = scmp.eq.s32.totalorder %s32, 0
      %p218 = por %p216, %p217
      %s220 = sadd.s32 %s219, 1
      %p223 = scmp.eq.s32.totalorder %s26, 3
      %p224 = scmp.ne.s32.totalorder %s219, %s221
      %p225 = scmp.eq.s32.totalorder %s26, 0
      %p226 = por %p224, %p225
      %p227 = scmp.ne.s32.totalorder %s219, %s221
      %p228 = scmp.eq.s32.totalorder %s31, 3
      %p229 = por %p227, %p228
      %p230 = scmp.ne.s32.totalorder %s221, %s222
      %p231 = scmp.eq.s32.totalorder %s31, 0
      %p232 = por %p230, %p231
      %p233 = scmp.ne.s32.totalorder %s221, %s222
      %p234 = scmp.eq.s32.totalorder %s32, 3
      %p235 = por %p233, %p234
      %p237 = scmp.ne.s32.totalorder %s222, %s236
      %p238 = scmp.eq.s32.totalorder %s32, 0
      %p239 = por %p237, %p238
      %s241 = sadd.s32 %s240, 1
      %p244 = scmp.eq.s32.totalorder %s26, 3
      %p245 = scmp.ne.s32.totalorder %s240, %s242
      %p246 = scmp.eq.s32.totalorder %s26, 0
      %p247 = por %p245, %p246
      %p248 = scmp.ne.s32.totalorder %s240, %s242
      %p249 = scmp.eq.s32.totalorder %s31, 3
      %p250 = por %p248, %p249
      %p251 = scmp.ne.s32.totalorder %s242, %s243
      %p252 = scmp.eq.s32.totalorder %s31, 0
      %p253 = por %p251, %p252
      %p254 = scmp.ne.s32.totalorder %s242, %s243
      %p255 = scmp.eq.s32.totalorder %s32, 3
      %p256 = por %p254, %p255
      %p258 = scmp.ne.s32.totalorder %s243, %s257
      %p259 = scmp.eq.s32.totalorder %s32, 0
      %p260 = por %p258, %p259
      %s262 = sadd.s32 %s261, 1
      %p265 = scmp.eq.s32.totalorder %s26, 3
      %p266 = scmp.ne.s32.totalorder %s261, %s263
      %p267 = scmp.eq.s32.totalorder %s26, 0
      %p268 = por %p266, %p267
      %p269 = scmp.ne.s32.totalorder %s261, %s263
      %p270 = scmp.eq.s32.totalorder %s31, 3
      %p271 = por %p269, %p270
      %p272 = scmp.ne.s32.totalorder %s263, %s264
      %p273 = scmp.eq.s32.totalorder %s31, 0
      %p274 = por %p272, %p273
      %p275 = scmp.ne.s32.totalorder %s263, %s264
      %p276 = scmp.eq.s32.totalorder %s32, 3
      %p277 = por %p275, %p276
      %p279 = scmp.ne.s32.totalorder %s264, %s278
      %p280 = scmp.eq.s32.totalorder %s32, 0
      %p281 = por %p279, %p280
      %s283 = sadd.s32 %s282, 1
      %p286 = scmp.eq.s32.totalorder %s26, 3
      %p287 = scmp.ne.s32.totalorder %s282, %s284
      %p288 = scmp.eq.s32.totalorder %s26, 0
      %p289 = por %p287, %p288
      %p290 = scmp.ne.s32.totalorder %s282, %s284
      %p291 = scmp.eq.s32.totalorder %s31, 3
      %p292 = por %p290, %p291
      %p293 = scmp.ne.s32.totalorder %s284, %s285
      %p294 = scmp.eq.s32.totalorder %s31, 0
      %p295 = por %p293, %p294
      %p296 = scmp.ne.s32.totalorder %s284, %s285
      %p297 = scmp.eq.s32.totalorder %s32, 3
      %p298 = por %p296, %p297
      %p300 = scmp.ne.s32.totalorder %s285, %s299
      %p301 = scmp.eq.s32.totalorder %s32, 0
      %p302 = por %p300, %p301
      %s304 = sadd.s32 %s303, 1
      %p307 = scmp.eq.s32.totalorder %s26, 3
      %p308 = scmp.ne.s32.totalorder %s303, %s305
      %p309 = scmp.eq.s32.totalorder %s26, 0
      %p310 = por %p308, %p309
      %p311 = scmp.ne.s32.totalorder %s303, %s305
      %p312 = scmp.eq.s32.totalorder %s31, 3
      %p313 = por %p311, %p312
      %p314 = scmp.ne.s32.totalorder %s305, %s306
      %p315 = scmp.eq.s32.totalorder %s31, 0
      %p316 = por %p314, %p315
      %p317 = scmp.ne.s32.totalorder %s305, %s306
      %p318 = scmp.eq.s32.totalorder %s32, 3
      %p319 = por %p317, %p318
      %p321 = scmp.ne.s32.totalorder %s306, %s320
      %p322 = scmp.eq.s32.totalorder %s32, 0
      %p323 = por %p321, %p322
      %s325 = sadd.s32 %s324, 1
      %p328 = scmp.eq.s32.totalorder %s26, 3
      %p329 = scmp.ne.s32.totalorder %s324, %s326
      %p330 = scmp.eq.s32.totalorder %s26, 0
      %p331 = por %p329, %p330
      %p332 = scmp.ne.s32.totalorder %s324, %s326
      %p333 = scmp.eq.s32.totalorder %s31, 3
      %p334 = por %p332, %p333
      %p335 = scmp.ne.s32.totalorder %s326, %s327
      %p336 = scmp.eq.s32.totalorder %s31, 0
      %p337 = por %p335, %p336
      %p338 = scmp.ne.s32.totalorder %s326, %s327
      %p339 = scmp.eq.s32.totalorder %s32, 3
      %p340 = por %p338, %p339
      %p342 = scmp.ne.s32.totalorder %s327, %s341
      %p343 = scmp.eq.s32.totalorder %s32, 0
      %p344 = por %p342, %p343
      %s346 = sadd.s32 %s345, 1
      %p349 = scmp.eq.s32.totalorder %s26, 3
      %p350 = scmp.ne.s32.totalorder %s345, %s347
      %p351 = scmp.eq.s32.totalorder %s26, 0
      %p352 = por %p350, %p351
      %p353 = scmp.ne.s32.totalorder %s345, %s347
      %p354 = scmp.eq.s32.totalorder %s31, 3
      %p355 = por %p353, %p354
      %p356 = scmp.ne.s32.totalorder %s347, %s348
      %p357 = scmp.eq.s32.totalorder %s31, 0
      %p358 = por %p356, %p357
      %p359 = scmp.ne.s32.totalorder %s347, %s348
      %p360 = scmp.eq.s32.totalorder %s32, 3
      %p361 = por %p359, %p360
      %p363 = scmp.ne.s32.totalorder %s348, %s362
      %p364 = scmp.eq.s32.totalorder %s32, 0
      %p365 = por %p363, %p364
      %s366 = ssub.s32 %s33, %s45
      %s367 = ssub.s32 %s34, %s41
      %s368 = sor.u32 %s366, %s367
      %p369 = scmp.eq.s32.totalorder %s368, 0
      %s371 = sadd.s32 %s370, 1
      %s372 = scalar_select %p369, %s370, %s371
      %p375 = pneg %p369
      %p376 = scmp.eq.s32.totalorder %s26, 3
      %p377 = por %p375, %p376
      %p378 = scmp.ne.s32.totalorder %s370, %s373
      %p379 = scmp.eq.s32.totalorder %s26, 0
      %p380 = por %p378, %p379
      %p381 = scmp.ne.s32.totalorder %s370, %s373
      %p382 = scmp.eq.s32.totalorder %s31, 3
      %p383 = por %p381, %p382
      %p384 = scmp.ne.s32.totalorder %s373, %s374
      %p385 = scmp.eq.s32.totalorder %s31, 0
      %p386 = por %p384, %p385
      %p387 = scmp.ne.s32.totalorder %s373, %s374
      %p388 = scmp.eq.s32.totalorder %s32, 3
      %p389 = por %p387, %p388
      %p391 = scmp.ne.s32.totalorder %s374, %s390
      %p392 = scmp.eq.s32.totalorder %s32, 0
      %p393 = por %p391, %p392
      %p394 = scmp.le.s32.totalorder 1, %s26
      %p395 = scmp.lt.s32.totalorder %s26, 5
      %p396 = pnand %p394, %p395
      %p397 = pneg %p396
      // Predicated region
      $region9: #{tpu_custom_call.1} parent=5 // pred_check
        _
      $region10: #{tpu_custom_call.1} parent=5 // pred_check_branch
        %399 = sbr.rel (%p396) target = $region12
      $region11: #{tpu_custom_call.1} parent=5 // pred_region
        %s400 = ssub.s32 %s26, 1
        // Predicated region
        $region13: #{tpu_custom_call.1} parent=11 // pred_check
          %p401 = pneg %p85
        $region14: #{tpu_custom_call.1} parent=11 // pred_check_branch
          %403 = sbr.rel (%p401) target = $region16
        $region15: #{tpu_custom_call.1} parent=11 // pred_region
          %405 = vsyncadd [#allocation6], 0
          %s407 = sshll.u32 %s1, 4
          %s408 = int_to_ptr.hbm [resolvable:$true] %s407
          %s409 = sshll.u32 [#allocation5], 4
          %s410 = int_to_ptr.vmem [resolvable:$true] %s409
          %412 = dma.hbm_to_vmem [thread:$0]  %s408, 16, %s410, [#allocation6]
        $region16: #{tpu_custom_call.1} parent=11 // pred_fallthru
          _
        // Predicated region
        $region17: #{tpu_custom_call.1} parent=11 // pred_check
          %p413 = pneg %p106
        $region18: #{tpu_custom_call.1} parent=11 // pred_check_branch
          %415 = sbr.rel (%p413) target = $region20
        $region19: #{tpu_custom_call.1} parent=11 // pred_region
          _
        $region20: #{tpu_custom_call.1} parent=11 // pred_fallthru
          _
        // Predicated region
        $region21: #{tpu_custom_call.1} parent=11 // pred_check
          %p416 = pneg %p127
        $region22: #{tpu_custom_call.1} parent=11 // pred_check_branch
          %418 = sbr.rel (%p416) target = $region24
        $region23: #{tpu_custom_call.1} parent=11 // pred_region
          _
        $region24: #{tpu_custom_call.1} parent=11 // pred_fallthru
          _
        // Predicated region
        $region25: #{tpu_custom_call.1} parent=11 // pred_check
          %p419 = pneg %p148
        $region26: #{tpu_custom_call.1} parent=11 // pred_check_branch
          %421 = sbr.rel (%p419) target = $region28
        $region27: #{tpu_custom_call.1} parent=11 // pred_region
          _
        $region28: #{tpu_custom_call.1} parent=11 // pred_fallthru
          _
        // Predicated region
        $region29: #{tpu_custom_call.1} parent=11 // pred_check
          %p422 = pneg %p169
        $region30: #{tpu_custom_call.1} parent=11 // pred_check_branch
          %424 = sbr.rel (%p422) target = $region32
        $region31: #{tpu_custom_call.1} parent=11 // pred_region
          _
        $region32: #{tpu_custom_call.1} parent=11 // pred_fallthru
          _
        // Predicated region
        $region33: #{tpu_custom_call.1} parent=11 // pred_check
          %p425 = pneg %p190
        $region34: #{tpu_custom_call.1} parent=11 // pred_check_branch
          %427 = sbr.rel (%p425) target = $region36
        $region35: #{tpu_custom_call.1} parent=11 // pred_region
          _
        $region36: #{tpu_custom_call.1} parent=11 // pred_fallthru
          _
        // Predicated region
        $region37: #{tpu_custom_call.1} parent=11 // pred_check
          %p428 = pneg %p211
        $region38: #{tpu_custom_call.1} parent=11 // pred_check_branch
          %430 = sbr.rel (%p428) target = $region40
        $region39: #{tpu_custom_call.1} parent=11 // pred_region
          %432 = vsyncadd [#allocation9], 0
          %s433 = sshll.u32 %s7, 4
          %s434 = int_to_ptr.hbm [resolvable:$true] %s433
          %s435 = sshll.u32 [#allocation8], 4
          %s436 = int_to_ptr.vmem [resolvable:$true] %s435
          %441 = dma.hbm_to_vmem [thread:$0]  %s434, 512, %s436, [#allocation9], 128, 128, 8
        $region40: #{tpu_custom_call.1} parent=11 // pred_fallthru
          _
        // Predicated region
        $region41: #{tpu_custom_call.1} parent=11 // pred_check
          %p442 = pneg %p232
        $region42: #{tpu_custom_call.1} parent=11 // pred_check_branch
          %444 = sbr.rel (%p442) target = $region44
        $region43: #{tpu_custom_call.1} parent=11 // pred_region
          _
        $region44: #{tpu_custom_call.1} parent=11 // pred_fallthru
          _
        // Predicated region
        $region45: #{tpu_custom_call.1} parent=11 // pred_check
          %p445 = pneg %p253
        $region46: #{tpu_custom_call.1} parent=11 // pred_check_branch
          %447 = sbr.rel (%p445) target = $region48
        $region47: #{tpu_custom_call.1} parent=11 // pred_region
          _
        $region48: #{tpu_custom_call.1} parent=11 // pred_fallthru
          _
        // Predicated region
        $region49: #{tpu_custom_call.1} parent=11 // pred_check
          %p448 = pneg %p274
        $region50: #{tpu_custom_call.1} parent=11 // pred_check_branch
          %450 = sbr.rel (%p448) target = $region52
        $region51: #{tpu_custom_call.1} parent=11 // pred_region
          _
        $region52: #{tpu_custom_call.1} parent=11 // pred_fallthru
          _
        // Predicated region
        $region53: #{tpu_custom_call.1} parent=11 // pred_check
          %p451 = pneg %p295
        $region54: #{tpu_custom_call.1} parent=11 // pred_check_branch
          %453 = sbr.rel (%p451) target = $region56
        $region55: #{tpu_custom_call.1} parent=11 // pred_region
          %455 = vsyncadd [#allocation9], 0
          %s456 = sshll.u32 %s11, 4
          %s457 = int_to_ptr.hbm [resolvable:$true] %s456
          %s458 = sshll.u32 [#allocation10], 4
          %s459 = int_to_ptr.vmem [resolvable:$true] %s458
          %464 = dma.hbm_to_vmem [thread:$0]  %s457, 512, %s459, [#allocation9], 128, 128, 8
        $region56: #{tpu_custom_call.1} parent=11 // pred_fallthru
          _
        // Predicated region
        $region57: #{tpu_custom_call.1} parent=11 // pred_check
          %p465 = pneg %p316
        $region58: #{tpu_custom_call.1} parent=11 // pred_check_branch
          %467 = sbr.rel (%p465) target = $region60
        $region59: #{tpu_custom_call.1} parent=11 // pred_region
          _
        $region60: #{tpu_custom_call.1} parent=11 // pred_fallthru
          _
        // Predicated region
        $region61: #{tpu_custom_call.1} parent=11 // pred_check
          %p468 = pneg %p337
        $region62: #{tpu_custom_call.1} parent=11 // pred_check_branch
          %470 = sbr.rel (%p468) target = $region64
        $region63: #{tpu_custom_call.1} parent=11 // pred_region
          _
        $region64: #{tpu_custom_call.1} parent=11 // pred_fallthru
          _
        // Predicated region
        $region65: #{tpu_custom_call.1} parent=11 // pred_check
          %p471 = pneg %p358
        $region66: #{tpu_custom_call.1} parent=11 // pred_check_branch
          %473 = sbr.rel (%p471) target = $region68
        $region67: #{tpu_custom_call.1} parent=11 // pred_region
          _
        $region68: #{tpu_custom_call.1} parent=11 // pred_fallthru
          _
      $region12: #{tpu_custom_call.1} parent=5 // pred_fallthru
        _
      %p474 = scmp.lt.s32.totalorder %s26, 4
      // Predicated region
      $region69: #{tpu_custom_call.1} parent=5 // pred_check
        %p475 = pneg %p474
      $region70: #{tpu_custom_call.1} parent=5 // pred_check_branch
        %477 = sbr.rel (%p475) target = $region72
      $region71: #{tpu_custom_call.1} parent=5 // pred_region
        // Predicated region
        $region73: #{tpu_custom_call.1} parent=71 // pred_check
          %p478 = pneg %p58
        $region74: #{tpu_custom_call.1} parent=71 // pred_check_branch
          %480 = sbr.rel (%p478) target = $region76
        $region75: #{tpu_custom_call.1} parent=71 // pred_region
          %p481 = scmp.lt.s32.totalorder %s33, 1
          %s482 = scalar_select %p481, %s33, 1
          %s483 = smul.addr %s482, 2
          %s484 = smul.addr %s483, 8
          %s485 = scalar_lea.vmem %s0, %s484
        $region76: #{tpu_custom_call.1} parent=71 // pred_fallthru
          _
      $region72: #{tpu_custom_call.1} parent=5 // pred_fallthru
        _
      %p486 = scmp.le.s32.totalorder 1, %s26
      %p487 = scmp.lt.s32.totalorder %s26, 5
      %p488 = pnand %p486, %p487
      %p489 = pneg %p488
      // Predicated region
      $region77: #{tpu_custom_call.1} parent=5 // pred_check
        _
      $region78: #{tpu_custom_call.1} parent=5 // pred_check_branch
        %491 = sbr.rel (%p488) target = $region80
      $region79: #{tpu_custom_call.1} parent=5 // pred_region
        %s492 = ssub.s32 %s26, 1
        // Predicated region
        $region81: #{tpu_custom_call.1} parent=79 // pred_check
          %p493 = pneg %p85
        $region82: #{tpu_custom_call.1} parent=79 // pred_check_branch
          %495 = sbr.rel (%p493) target = $region84
        $region83: #{tpu_custom_call.1} parent=79 // pred_region
          %497 = dma.done [#allocation6], 16
        $region84: #{tpu_custom_call.1} parent=79 // pred_fallthru
          _
        // Predicated region
        $region85: #{tpu_custom_call.1} parent=79 // pred_check
          %p498 = pneg %p211
        $region86: #{tpu_custom_call.1} parent=79 // pred_check_branch
          %500 = sbr.rel (%p498) target = $region88
        $region87: #{tpu_custom_call.1} parent=79 // pred_region
          %502 = dma.done [#allocation9], 512
        $region88: #{tpu_custom_call.1} parent=79 // pred_fallthru
          _
        // Predicated region
        $region89: #{tpu_custom_call.1} parent=79 // pred_check
          %p503 = pneg %p295
        $region90: #{tpu_custom_call.1} parent=79 // pred_check_branch
          %505 = sbr.rel (%p503) target = $region92
        $region91: #{tpu_custom_call.1} parent=79 // pred_region
          %507 = dma.done [#allocation9], 512
        $region92: #{tpu_custom_call.1} parent=79 // pred_fallthru
          _
        %p508 = scmp.lt.s32.totalorder %s35, 1
        %s509 = scalar_select %p508, %s35, 1
        %s510 = smul.addr %s509, 2
        %s511 = smul.addr %s510, 8
        %s512 = scalar_lea.vmem %s0, %s511
        %p513 = pneg %p64
        %p514 = pneg %p61
        %p515 = pneg %p85
        %p516 = pneg %p82
        %p517 = pneg %p106
        %p518 = pneg %p103
        %p519 = pneg %p127
        %p520 = pneg %p124
        %p521 = pneg %p148
        %p522 = pneg %p145
        %p523 = pneg %p169
        %p524 = pneg %p166
        %p525 = pneg %p190
        %p526 = pneg %p187
        %p527 = pneg %p211
        %p528 = pneg %p208
        %p529 = pneg %p232
        %p530 = pneg %p229
        %p531 = pneg %p253
        %p532 = pneg %p250
        %p533 = pneg %p274
        %p534 = pneg %p271
        %p535 = pneg %p295
        %p536 = pneg %p292
        %p537 = pneg %p316
        %p538 = pneg %p313
        %p539 = pneg %p337
        %p540 = pneg %p334
        %p541 = pneg %p358
        %p542 = pneg %p355
        %p543 = pneg %p386
        %p544 = pneg %p383
        %s545 = sand.u32 %s373, 1
        %s546 = scalar_lea.sflag [#allocation7], %s545
        %s547 = sand.u32 %s373, 1
        %s548 = smul.addr %s547, 8
        %s549 = scalar_lea.vmem [#allocation11], %s548
        %p550 = scmp.lt.s32.totalorder %s35, 1
        %s551 = scalar_select %p550, %s35, 1
        %s552 = smul.addr %s551, 2
        %s553 = smul.addr %s552, 8
        %s554 = scalar_lea.vmem %s0, %s553
        %p555 = scmp.eq.s32.totalorder %s36, 0
        // Predicated region
        $region93: #{tpu_custom_call.1} parent=79 // pred_check
          %p556 = pneg %p555
        $region94: #{tpu_custom_call.1} parent=79 // pred_check_branch
          %558 = sbr.rel (%p556) target = $region96
        $region95: #{tpu_custom_call.1} parent=79 // pred_region
          %v559 = vld [vmem:[%s554] sm:$0xff]
          %v560 = vld [vmem:[%s554 + $0x8] sm:$0xff]
          %v561 = vld [vmem:[#allocation5] sm:$0x1]
          %v562 = vld [vmem:[%s2] sm:$0x1]
          %vm563 = vcmask 261120
          %v564 = vsel %vm563, %v559, 0.0
          %565 = vadd.xlane.f32.xlu0 %v564
          %v566 = vpop.xlane.xlu0 %565
          %v567 = vsel %vm563, %v560, 0.0
          %568 = vadd.xlane.f32.xlu0 %v567
          %v569 = vpop.xlane.xlu0 %568
          %v570 = vrcp.pop 32.0
          %v571 = vmul.f32 32.0, %v570
          %v572 = vsub.f32 1.0, %v571
          %v573 = vmul.f32 %v570, %v572
          %v574 = vadd.f32 %v570, %v573
          %vm575 = vweird.f32 %v570
          %v576 = vsel %vm575, %v570, %v574
          %v577 = vmul.f32 %v566, %v576
          %v578 = vmul.f32 %v569, %v576
          %v579 = vsub.f32 %v559, %v577
          %v580 = vsub.f32 %v560, %v578
          %v581 = vmul.f32 %v579, %v579
          %v582 = vmul.f32 %v580, %v580
          %v583 = vsel %vm563, %v581, 0.0
          %584 = vadd.xlane.f32.xlu0 %v583
          %v585 = vpop.xlane.xlu0 %584
          %v586 = vsel %vm563, %v582, 0.0
          %587 = vadd.xlane.f32.xlu0 %v586
          %v588 = vpop.xlane.xlu0 %587
          %v589 = vmul.f32 %v585, %v576
          %v590 = vmul.f32 %v588, %v576
          %v591 = vadd.f32 %v589, 1e-05
          %v592 = vadd.f32 %v590, 1e-05
          %v593 = vrsqrt.pop %v591
          %v594 = vmul.f32 %v593, %v591
          %v595 = vmul.f32 %v594, %v593
          %v596 = vmul.f32 0.5, %v595
          %v597 = vsub.f32 1.5, %v596
          %v598 = vmul.f32 %v593, %v597
          %vm599 = vweird.f32 %v591
          %vm600 = vweird.f32 %v593
          %vm601 = vmor %vm599, %vm600
          %v602 = vsel %vm601, %v593, %v598
          %v603 = vrsqrt.pop %v592
          %v604 = vmul.f32 %v603, %v592
          %v605 = vmul.f32 %v604, %v603
          %v606 = vmul.f32 0.5, %v605
          %v607 = vsub.f32 1.5, %v606
          %v608 = vmul.f32 %v603, %v607
          %vm609 = vweird.f32 %v592
          %vm610 = vweird.f32 %v603
          %vm611 = vmor %vm609, %vm610
          %v612 = vsel %vm611, %v603, %v608
          %v613 = vmul.f32 %v579, %v602
          %v614 = vmul.f32 %v580, %v612
          %v616 = vperm.slane %v561, 0
          %v618 = vmul.f32 %v613, %v616
          %v619 = vmul.f32 %v614, %v616
          %v621 = vperm.slane %v562, 0
          %v623 = vadd.f32 %v618, %v621
          %v624 = vadd.f32 %v619, %v621
          %625 = vst.msk [vmem:[#allocation2] sm:$0xff] %vm563, %v623
          %626 = vst.msk [vmem:[#allocation2 + $0x8] sm:$0xff] %vm563, %v624
          %v627 = vld [vmem:[%s5] sm:$0xff]
          %v628 = vld [vmem:[%s5 + $0x8] sm:$0xff]
          %v629 = vld [vmem:[%s5 + $0x10] sm:$0xff]
          %v630 = vld [vmem:[%s5 + $0x18] sm:$0xff]
          %v631 = vld [vmem:[%s6] sm:$0x1]
          %v633 = vperm.slane %v631, 0
          %v636 = vsel %vm563, %v623, 0
          %v639 = vsel %vm563, %v624, 0
          %641 = vmatpush.msra.mxu0 0.0
          %642 = vmatpush.msra.mxu0 0.0
          %643 = vmatpush.msra.mxu0 0.0
          %644 = vmatpush.msra.mxu0 0.0
          %645 = vmatpush.msra.mxu0 0.0
          %646 = vmatpush.msra.mxu0 0.0
          %647 = vmatpush.msra.mxu0 0.0
          %648 = vmatpush.msra.mxu0 0.0
          %649 = vmatpush.msra.mxu0 0.0
          %650 = vmatpush.msra.mxu0 0.0
          %651 = vmatpush.msra.mxu0 0.0
          %652 = vmatpush.msra.mxu0 0.0
          %653 = vmatpush.msra.mxu0 %v630
          %654 = vmatpush.msra.mxu0 %v629
          %655 = vmatpush.msra.mxu0 %v628
          %656 = vmatpush.msra.mxu0 %v627
          %657 = vmatmul.f32.gmra.mxu0 %v636
          %v658 = vpop.f32.mrf.mxu0
          %v659 = vadd.f32 %v633, %v658
          %660 = vmatmul.f32.gmra.mxu0 %v639
          %v661 = vpop.f32.mrf.mxu0
          %v662 = vadd.f32 %v633, %v661
          %663 = vdwg.mxu0
          %vm664 = vcmask 523264
          %665 = vst.msk [vmem:[#allocation3] sm:$0xff] %vm664, %v659
          %666 = vst.msk [vmem:[#allocation3 + $0x8] sm:$0xff] %vm664, %v662
        $region96: #{tpu_custom_call.1} parent=79 // pred_fallthru
          _
        %s667 = smul.u32 %s36, 8
        %s668 = scalar_lea.vmem %s554, %s667
        %v669 = vld [vmem:[%s668] sm:$0xff]
        %s670 = scalar_lea.vmem [#allocation2], %s667
        %v671 = vld [vmem:[%s670] sm:$0xff]
        %v672 = vld [vmem:[%s3] sm:$0xff]
        %v673 = vld [vmem:[%s3 + $0x8] sm:$0xff]
        %v674 = vld [vmem:[%s3 + $0x10] sm:$0xff]
        %v675 = vld [vmem:[%s3 + $0x18] sm:$0xff]
        %v676 = vld [vmem:[%s4] sm:$0x1]
        %v678 = vperm.slane %v676, 0
        %vm680 = vcmask 261120
        %v682 = vsel %vm680, %v671, 0
        %684 = vmatpush.msra.mxu0 0.0
        %685 = vmatpush.msra.mxu0 0.0
        %686 = vmatpush.msra.mxu0 0.0
        %687 = vmatpush.msra.mxu0 0.0
        %688 = vmatpush.msra.mxu0 0.0
        %689 = vmatpush.msra.mxu0 0.0
        %690 = vmatpush.msra.mxu0 0.0
        %691 = vmatpush.msra.mxu0 0.0
        %692 = vmatpush.msra.mxu0 0.0
        %693 = vmatpush.msra.mxu0 0.0
        %694 = vmatpush.msra.mxu0 0.0
        %695 = vmatpush.msra.mxu0 0.0
        %696 = vmatpush.msra.mxu0 %v675
        %697 = vmatpush.msra.mxu0 %v674
        %698 = vmatpush.msra.mxu0 %v673
        %699 = vmatpush.msra.mxu0 %v672
        %700 = vmatmul.f32.gmra.mxu0 %v682
        %v701 = vpop.f32.mrf.mxu0
        %v702 = vadd.f32 %v678, %v701
        %703 = vdwg.mxu0
        %v704 = vmul.f32 %v702, 0.35355338
        %v705 = vld [vmem:[#allocation3] sm:$0xff]
        %v706 = vld [vmem:[#allocation3 + $0x8] sm:$0xff]
        %vm707 = vcmask 64512
        %v709 = vsel %vm707, %v704, 0
        %v712 = vsel %vm707, %v705, 0
        %v715 = vsel %vm707, %v706, 0
        %717 = vmatpush.xpose.msra.mxu0 0.0
        %718 = vmatpush.xpose.msra.mxu0 0.0
        %719 = vmatpush.xpose.msra.mxu0 0.0
        %720 = vmatpush.xpose.msra.mxu0 0.0
        %721 = vmatpush.xpose.msra.mxu0 0.0
        %722 = vmatpush.xpose.msra.mxu0 0.0
        %723 = vmatpush.xpose.msra.mxu0 0.0
        %724 = vmatpush.xpose.msra.mxu0 0.0
        %725 = vmatpush.xpose.msra.mxu0 0.0
        %726 = vmatpush.xpose.msra.mxu0 0.0
        %727 = vmatpush.xpose.msra.mxu0 0.0
        %728 = vmatpush.xpose.msra.mxu0 0.0
        %729 = vmatpush.xpose.msra.mxu0 0.0
        %730 = vmatpush.xpose.msra.mxu0 0.0
        %731 = vmatpush.xpose.msra.mxu0 %v715
        %732 = vmatpush.xpose.msra.mxu0 %v712
        %733 = vmatmul.f32.gmra.mxu0 %v709
        %v734 = vpop.f32.mrf.mxu0
        %v735 = vadd.f32 0.0, %v734
        %736 = vdwg.mxu0
        %vm737 = vcmask 130048
        %v738 = vsel %vm737, %v735, -inf
        %739 = vmax.xlane.f32.xlu0 %v738
        %v740 = vpop.xlane.xlu0 %739
        %v741 = vsub.f32 %v735, %v740
        %v742 = vmul.f32 %v741, 1.442695
        %v743 = vpow.pop %v742
        %v744 = vsel %vm737, %v743, 0.0
        %745 = vadd.xlane.f32.xlu0 %v744
        %v746 = vpop.xlane.xlu0 %745
        %v747 = vrcp.pop %v746
        %v748 = vmul.f32 %v743, %v747
        %749 = vrot.lane.b32.xlu0 %v705, 96
        %v750 = vpop.permute.xlu0 %749
        %751 = vrot.lane.b32.xlu0 %v706, 96
        %v752 = vpop.permute.xlu0 %751
        %v756 = vsel %vm737, %v748, 0
        %758 = vmatpush.msra.mxu0 0.0
        %759 = vmatpush.msra.mxu0 0.0
        %760 = vmatpush.msra.mxu0 0.0
        %761 = vmatpush.msra.mxu0 0.0
        %762 = vmatpush.msra.mxu0 0.0
        %763 = vmatpush.msra.mxu0 0.0
        %764 = vmatpush.msra.mxu0 0.0
        %765 = vmatpush.msra.mxu0 0.0
        %766 = vmatpush.msra.mxu0 0.0
        %767 = vmatpush.msra.mxu0 0.0
        %768 = vmatpush.msra.mxu0 0.0
        %769 = vmatpush.msra.mxu0 0.0
        %770 = vmatpush.msra.mxu0 0.0
        %771 = vmatpush.msra.mxu0 0.0
        %772 = vmatpush.msra.mxu0 %v752
        %773 = vmatpush.msra.mxu0 %v750
        %774 = vmatmul.f32.gmra.mxu0 %v756
        %v775 = vpop.f32.mrf.mxu0
        %v776 = vadd.f32 0.0, %v775
        %777 = vdwg.mxu0
        %778 = vst.msk [vmem:[#allocation4] sm:$0xff] %vm707, %v776
        %v779 = vld [vmem:[#allocation3] sm:$0xff]
        %v780 = vld [vmem:[#allocation3 + $0x8] sm:$0xff]
        %781 = vrot.lane.b32.xlu0 %v704, 120
        %v782 = vpop.permute.xlu0 %781
        %785 = vrot.lane.b32.xlu0 %v779, 120
        %v786 = vpop.permute.xlu0 %785
        %787 = vrot.lane.b32.xlu0 %v780, 120
        %v788 = vpop.permute.xlu0 %787
        %v789 = vsel %vm707, %v782, 0
        %v791 = vsel %vm707, %v786, 0
        %v793 = vsel %vm707, %v788, 0
        %795 = vmatpush.xpose.msra.mxu0 0.0
        %796 = vmatpush.xpose.msra.mxu0 0.0
        %797 = vmatpush.xpose.msra.mxu0 0.0
        %798 = vmatpush.xpose.msra.mxu0 0.0
        %799 = vmatpush.xpose.msra.mxu0 0.0
        %800 = vmatpush.xpose.msra.mxu0 0.0
        %801 = vmatpush.xpose.msra.mxu0 0.0
        %802 = vmatpush.xpose.msra.mxu0 0.0
        %803 = vmatpush.xpose.msra.mxu0 0.0
        %804 = vmatpush.xpose.msra.mxu0 0.0
        %805 = vmatpush.xpose.msra.mxu0 0.0
        %806 = vmatpush.xpose.msra.mxu0 0.0
        %807 = vmatpush.xpose.msra.mxu0 0.0
        %808 = vmatpush.xpose.msra.mxu0 0.0
        %809 = vmatpush.xpose.msra.mxu0 %v793
        %810 = vmatpush.xpose.msra.mxu0 %v791
        %811 = vmatmul.f32.gmra.mxu0 %v789
        %v812 = vpop.f32.mrf.mxu0
        %v813 = vadd.f32 0.0, %v812
        %814 = vdwg.mxu0
        %v815 = vsel %vm737, %v813, -inf
        %816 = vmax.xlane.f32.xlu0 %v815
        %v817 = vpop.xlane.xlu0 %816
        %v818 = vsub.f32 %v813, %v817
        %v819 = vmul.f32 %v818, 1.442695
        %v820 = vpow.pop %v819
        %v821 = vsel %vm737, %v820, 0.0
        %822 = vadd.xlane.f32.xlu0 %v821
        %v823 = vpop.xlane.xlu0 %822
        %v824 = vrcp.pop %v823
        %v825 = vmul.f32 %v820, %v824
        %826 = vrot.lane.b32.xlu0 %v779, 88
        %v827 = vpop.permute.xlu0 %826
        %828 = vrot.lane.b32.xlu0 %v780, 88
        %v829 = vpop.permute.xlu0 %828
        %v833 = vsel %vm737, %v825, 0
        %835 = vmatpush.msra.mxu0 0.0
        %836 = vmatpush.msra.mxu0 0.0
        %837 = vmatpush.msra.mxu0 0.0
        %838 = vmatpush.msra.mxu0 0.0
        %839 = vmatpush.msra.mxu0 0.0
        %840 = vmatpush.msra.mxu0 0.0
        %841 = vmatpush.msra.mxu0 0.0
        %842 = vmatpush.msra.mxu0 0.0
        %843 = vmatpush.msra.mxu0 0.0
        %844 = vmatpush.msra.mxu0 0.0
        %845 = vmatpush.msra.mxu0 0.0
        %846 = vmatpush.msra.mxu0 0.0
        %847 = vmatpush.msra.mxu0 0.0
        %848 = vmatpush.msra.mxu0 0.0
        %849 = vmatpush.msra.mxu0 %v829
        %850 = vmatpush.msra.mxu0 %v827
        %851 = vmatmul.f32.gmra.mxu0 %v833
        %v852 = vpop.f32.mrf.mxu0
        %v853 = vadd.f32 0.0, %v852
        %854 = vdwg.mxu0
        %856 = vrot.lane.b32.xlu0 %v853, 8
        %v857 = vpop.permute.xlu0 %856
        %vm859 = vcmask 130112
        %860 = vst.msk [vmem:[#allocation4] sm:$0xff] %vm859, %v857
        %v861 = vld [vmem:[#allocation3] sm:$0xff]
        %v862 = vld [vmem:[#allocation3 + $0x8] sm:$0xff]
        %863 = vrot.lane.b32.xlu0 %v704, 112
        %v864 = vpop.permute.xlu0 %863
        %867 = vrot.lane.b32.xlu0 %v861, 112
        %v868 = vpop.permute.xlu0 %867
        %869 = vrot.lane.b32.xlu0 %v862, 112
        %v870 = vpop.permute.xlu0 %869
        %v871 = vsel %vm707, %v864, 0
        %v873 = vsel %vm707, %v868, 0
        %v875 = vsel %vm707, %v870, 0
        %877 = vmatpush.xpose.msra.mxu0 0.0
        %878 = vmatpush.xpose.msra.mxu0 0.0
        %879 = vmatpush.xpose.msra.mxu0 0.0
        %880 = vmatpush.xpose.msra.mxu0 0.0
        %881 = vmatpush.xpose.msra.mxu0 0.0
        %882 = vmatpush.xpose.msra.mxu0 0.0
        %883 = vmatpush.xpose.msra.mxu0 0.0
        %884 = vmatpush.xpose.msra.mxu0 0.0
        %885 = vmatpush.xpose.msra.mxu0 0.0
        %886 = vmatpush.xpose.msra.mxu0 0.0
        %887 = vmatpush.xpose.msra.mxu0 0.0
        %888 = vmatpush.xpose.msra.mxu0 0.0
        %889 = vmatpush.xpose.msra.mxu0 0.0
        %890 = vmatpush.xpose.msra.mxu0 0.0
        %891 = vmatpush.xpose.msra.mxu0 %v875
        %892 = vmatpush.xpose.msra.mxu0 %v873
        %893 = vmatmul.f32.gmra.mxu0 %v871
        %v894 = vpop.f32.mrf.mxu0
        %v895 = vadd.f32 0.0, %v894
        %896 = vdwg.mxu0
        %v897 = vsel %vm737, %v895, -inf
        %898 = vmax.xlane.f32.xlu0 %v897
        %v899 = vpop.xlane.xlu0 %898
        %v900 = vsub.f32 %v895, %v899
        %v901 = vmul.f32 %v900, 1.442695
        %v902 = vpow.pop %v901
        %v903 = vsel %vm737, %v902, 0.0
        %904 = vadd.xlane.f32.xlu0 %v903
        %v905 = vpop.xlane.xlu0 %904
        %v906 = vrcp.pop %v905
        %v907 = vmul.f32 %v902, %v906
        %908 = vrot.lane.b32.xlu0 %v861, 80
        %v909 = vpop.permute.xlu0 %908
        %910 = vrot.lane.b32.xlu0 %v862, 80
        %v911 = vpop.permute.xlu0 %910
        %v915 = vsel %vm737, %v907, 0
        %917 = vmatpush.msra.mxu0 0.0
        %918 = vmatpush.msra.mxu0 0.0
        %919 = vmatpush.msra.mxu0 0.0
        %920 = vmatpush.msra.mxu0 0.0
        %921 = vmatpush.msra.mxu0 0.0
        %922 = vmatpush.msra.mxu0 0.0
        %923 = vmatpush.msra.mxu0 0.0
        %924 = vmatpush.msra.mxu0 0.0
        %925 = vmatpush.msra.mxu0 0.0
        %926 = vmatpush.msra.mxu0 0.0
        %927 = vmatpush.msra.mxu0 0.0
        %928 = vmatpush.msra.mxu0 0.0
        %929 = vmatpush.msra.mxu0 0.0
        %930 = vmatpush.msra.mxu0 0.0
        %931 = vmatpush.msra.mxu0 %v911
        %932 = vmatpush.msra.mxu0 %v909
        %933 = vmatmul.f32.gmra.mxu0 %v915
        %v934 = vpop.f32.mrf.mxu0
        %v935 = vadd.f32 0.0, %v934
        %936 = vdwg.mxu0
        %938 = vrot.lane.b32.xlu0 %v935, 16
        %v939 = vpop.permute.xlu0 %938
        %vm941 = vcmask 195712
        %942 = vst.msk [vmem:[#allocation4] sm:$0xff] %vm941, %v939
        %v943 = vld [vmem:[#allocation3] sm:$0xff]
        %v944 = vld [vmem:[#allocation3 + $0x8] sm:$0xff]
        %945 = vrot.lane.b32.xlu0 %v704, 104
        %v946 = vpop.permute.xlu0 %945
        %949 = vrot.lane.b32.xlu0 %v943, 104
        %v950 = vpop.permute.xlu0 %949
        %951 = vrot.lane.b32.xlu0 %v944, 104
        %v952 = vpop.permute.xlu0 %951
        %v953 = vsel %vm707, %v946, 0
        %v955 = vsel %vm707, %v950, 0
        %v957 = vsel %vm707, %v952, 0
        %959 = vmatpush.xpose.msra.mxu0 0.0
        %960 = vmatpush.xpose.msra.mxu0 0.0
        %961 = vmatpush.xpose.msra.mxu0 0.0
        %962 = vmatpush.xpose.msra.mxu0 0.0
        %963 = vmatpush.xpose.msra.mxu0 0.0
        %964 = vmatpush.xpose.msra.mxu0 0.0
        %965 = vmatpush.xpose.msra.mxu0 0.0
        %966 = vmatpush.xpose.msra.mxu0 0.0
        %967 = vmatpush.xpose.msra.mxu0 0.0
        %968 = vmatpush.xpose.msra.mxu0 0.0
        %969 = vmatpush.xpose.msra.mxu0 0.0
        %970 = vmatpush.xpose.msra.mxu0 0.0
        %971 = vmatpush.xpose.msra.mxu0 0.0
        %972 = vmatpush.xpose.msra.mxu0 0.0
        %973 = vmatpush.xpose.msra.mxu0 %v957
        %974 = vmatpush.xpose.msra.mxu0 %v955
        %975 = vmatmul.f32.gmra.mxu0 %v953
        %v976 = vpop.f32.mrf.mxu0
        %v977 = vadd.f32 0.0, %v976
        %978 = vdwg.mxu0
        %v979 = vsel %vm737, %v977, -inf
        %980 = vmax.xlane.f32.xlu0 %v979
        %v981 = vpop.xlane.xlu0 %980
        %v982 = vsub.f32 %v977, %v981
        %v983 = vmul.f32 %v982, 1.442695
        %v984 = vpow.pop %v983
        %v985 = vsel %vm737, %v984, 0.0
        %986 = vadd.xlane.f32.xlu0 %v985
        %v987 = vpop.xlane.xlu0 %986
        %v988 = vrcp.pop %v987
        %v989 = vmul.f32 %v984, %v988
        %990 = vrot.lane.b32.xlu0 %v943, 72
        %v991 = vpop.permute.xlu0 %990
        %992 = vrot.lane.b32.xlu0 %v944, 72
        %v993 = vpop.permute.xlu0 %992
        %v997 = vsel %vm737, %v989, 0
        %999 = vmatpush.msra.mxu0 0.0
        %1000 = vmatpush.msra.mxu0 0.0
        %1001 = vmatpush.msra.mxu0 0.0
        %1002 = vmatpush.msra.mxu0 0.0
        %1003 = vmatpush.msra.mxu0 0.0
        %1004 = vmatpush.msra.mxu0 0.0
        %1005 = vmatpush.msra.mxu0 0.0
        %1006 = vmatpush.msra.mxu0 0.0
        %1007 = vmatpush.msra.mxu0 0.0
        %1008 = vmatpush.msra.mxu0 0.0
        %1009 = vmatpush.msra.mxu0 0.0
        %1010 = vmatpush.msra.mxu0 0.0
        %1011 = vmatpush.msra.mxu0 0.0
        %1012 = vmatpush.msra.mxu0 0.0
        %1013 = vmatpush.msra.mxu0 %v993
        %1014 = vmatpush.msra.mxu0 %v991
        %1015 = vmatmul.f32.gmra.mxu0 %v997
        %v1016 = vpop.f32.mrf.mxu0
        %v1017 = vadd.f32 0.0, %v1016
        %1018 = vdwg.mxu0
        %1020 = vrot.lane.b32.xlu0 %v1017, 24
        %v1021 = vpop.permute.xlu0 %1020
        %vm1023 = vcmask 261312
        %1024 = vst.msk [vmem:[#allocation4] sm:$0xff] %vm1023, %v1021
        %v1025 = vld [vmem:[#allocation4] sm:$0xff]
        %v1026 = vld [vmem:[#allocation8] sm:$0xff]
        %v1027 = vld [vmem:[#allocation8 + $0x8] sm:$0xff]
        %v1028 = vld [vmem:[#allocation8 + $0x10] sm:$0xff]
        %v1029 = vld [vmem:[#allocation8 + $0x18] sm:$0xff]
        %v1030 = vld [vmem:[%s8] sm:$0x1]
        %v1032 = vperm.slane %v1030, 0
        %v1035 = vsel %vm680, %v1025, 0
        %1037 = vmatpush.msra.mxu0 0.0
        %1038 = vmatpush.msra.mxu0 0.0
        %1039 = vmatpush.msra.mxu0 0.0
        %1040 = vmatpush.msra.mxu0 0.0
        %1041 = vmatpush.msra.mxu0 0.0
        %1042 = vmatpush.msra.mxu0 0.0
        %1043 = vmatpush.msra.mxu0 0.0
        %1044 = vmatpush.msra.mxu0 0.0
        %1045 = vmatpush.msra.mxu0 0.0
        %1046 = vmatpush.msra.mxu0 0.0
        %1047 = vmatpush.msra.mxu0 0.0
        %1048 = vmatpush.msra.mxu0 0.0
        %1049 = vmatpush.msra.mxu0 %v1029
        %1050 = vmatpush.msra.mxu0 %v1028
        %1051 = vmatpush.msra.mxu0 %v1027
        %1052 = vmatpush.msra.mxu0 %v1026
        %1053 = vmatmul.f32.gmra.mxu0 %v1035
        %v1054 = vpop.f32.mrf.mxu0
        %v1055 = vadd.f32 %v1032, %v1054
        %1056 = vdwg.mxu0
        %v1057 = vadd.f32 %v1055, %v669
        %v1058 = vld [vmem:[%s9] sm:$0x1]
        %v1059 = vld [vmem:[%s10] sm:$0x1]
        %v1060 = vsel %vm680, %v1057, 0.0
        %1061 = vadd.xlane.f32.xlu0 %v1060
        %v1062 = vpop.xlane.xlu0 %1061
        %v1063 = vrcp.pop 32.0
        %v1064 = vmul.f32 32.0, %v1063
        %v1065 = vsub.f32 1.0, %v1064
        %v1066 = vmul.f32 %v1063, %v1065
        %v1067 = vadd.f32 %v1063, %v1066
        %vm1068 = vweird.f32 %v1063
        %v1069 = vsel %vm1068, %v1063, %v1067
        %v1070 = vmul.f32 %v1062, %v1069
        %v1071 = vsub.f32 %v1057, %v1070
        %v1072 = vmul.f32 %v1071, %v1071
        %v1073 = vsel %vm680, %v1072, 0.0
        %1074 = vadd.xlane.f32.xlu0 %v1073
        %v1075 = vpop.xlane.xlu0 %1074
        %v1076 = vmul.f32 %v1075, %v1069
        %v1077 = vadd.f32 %v1076, 1e-05
        %v1078 = vrsqrt.pop %v1077
        %v1079 = vmul.f32 %v1078, %v1077
        %v1080 = vmul.f32 %v1079, %v1078
        %v1081 = vmul.f32 0.5, %v1080
        %v1082 = vsub.f32 1.5, %v1081
        %v1083 = vmul.f32 %v1078, %v1082
        %vm1084 = vweird.f32 %v1077
        %vm1085 = vweird.f32 %v1078
        %vm1086 = vmor %vm1084, %vm1085
        %v1087 = vsel %vm1086, %v1078, %v1083
        %v1088 = vmul.f32 %v1071, %v1087
        %v1090 = vperm.slane %v1058, 0
        %v1092 = vmul.f32 %v1088, %v1090
        %v1094 = vperm.slane %v1059, 0
        %v1096 = vadd.f32 %v1092, %v1094
        %v1097 = vld [vmem:[#allocation10] sm:$0xff]
        %v1098 = vld [vmem:[#allocation10 + $0x8] sm:$0xff]
        %v1099 = vld [vmem:[#allocation10 + $0x10] sm:$0xff]
        %v1100 = vld [vmem:[#allocation10 + $0x18] sm:$0xff]
        %v1101 = vld [vmem:[%s12] sm:$0x1]
        %v1103 = vperm.slane %v1101, 0
        %v1106 = vsel %vm680, %v1096, 0
        %1108 = vmatpush.msra.mxu0 0.0
        %1109 = vmatpush.msra.mxu0 0.0
        %1110 = vmatpush.msra.mxu0 0.0
        %1111 = vmatpush.msra.mxu0 0.0
        %1112 = vmatpush.msra.mxu0 0.0
        %1113 = vmatpush.msra.mxu0 0.0
        %1114 = vmatpush.msra.mxu0 0.0
        %1115 = vmatpush.msra.mxu0 0.0
        %1116 = vmatpush.msra.mxu0 0.0
        %1117 = vmatpush.msra.mxu0 0.0
        %1118 = vmatpush.msra.mxu0 0.0
        %1119 = vmatpush.msra.mxu0 0.0
        %1120 = vmatpush.msra.mxu0 %v1100
        %1121 = vmatpush.msra.mxu0 %v1099
        %1122 = vmatpush.msra.mxu0 %v1098
        %1123 = vmatpush.msra.mxu0 %v1097
        %1124 = vmatmul.f32.gmra.mxu0 %v1106
        %v1125 = vpop.f32.mrf.mxu0
        %v1126 = vadd.f32 %v1103, %v1125
        %1127 = vdwg.mxu0
        %v1128 = vmul.f32 %v1126, 0.5
        %v1129 = vmul.f32 %v1126, 0.70710677
        %v1130 = vmul.f32 %v1129, %v1129
        %v1131 = vmin.f32 16.0, %v1130
        %v1132 = vmul.f32 %v1131, 2.1237322e-06
        %v1133 = vadd.f32 %v1132, 0.00028619796
        %v1134 = vmul.f32 %v1131, %v1133
        %v1135 = vadd.f32 %v1134, 0.0036580483
        %v1136 = vmul.f32 %v1131, %v1135
        %v1137 = vadd.f32 %v1136, 0.05243302
        %v1138 = vmul.f32 %v1131, %v1137
        %v1139 = vadd.f32 %v1138, 0.18741608
        %v1140 = vmul.f32 %v1131, %v1139
        %v1141 = vadd.f32 %v1140, 1.1283791
        %v1142 = vmul.f32 %v1129, %v1141
        %v1143 = vmul.f32 %v1131, 3.8918573e-05
        %v1144 = vadd.f32 %v1143, 0.001143296
        %v1145 = vmul.f32 %v1131, %v1144
        %v1146 = vadd.f32 %v1145, 0.014752088
        %v1147 = vmul.f32 %v1131, %v1146
        %v1148 = vadd.f32 %v1147, 0.112945676
        %v1149 = vmul.f32 %v1131, %v1148
        %v1150 = vadd.f32 %v1149, 0.4994258
        %v1151 = vmul.f32 %v1131, %v1150
        %v1152 = vadd.f32 %v1151, 1.0
        %v1153 = vrcp.pop %v1152
        %v1154 = vmul.f32 %v1152, %v1153
        %v1155 = vsub.f32 1.0, %v1154
        %v1156 = vmul.f32 %v1153, %v1155
        %v1157 = vadd.f32 %v1153, %v1156
        %vm1158 = vweird.f32 %v1152
        %vm1159 = vweird.f32 %v1153
        %vm1160 = vmor %vm1158, %vm1159
        %v1161 = vsel %vm1160, %v1153, %v1157
        %v1162 = vand.u32 2147483647, %v1152
        %vm1163 = vcmp.eq.f32.partialorder %v1162, 8.507059e+37
        %v1164 = vand.u32 %v1152, 2147483648
        %v1165 = vor.u32 1.1754944e-38, %v1164
        %v1166 = vsel %vm1163, %v1165, %v1161
        %v1167 = vmul.f32 %v1142, %v1166
        %v1168 = vmin.f32 %v1167, 1.0
        %v1169 = vmax.f32 %v1168, -1.0
        %v1170 = vadd.f32 %v1169, 1.0
        %v1171 = vmul.f32 %v1128, %v1170
        %v1172 = vld [vmem:[%s13] sm:$0xff]
        %v1173 = vld [vmem:[%s13 + $0x8] sm:$0xff]
        %v1174 = vld [vmem:[%s13 + $0x10] sm:$0xff]
        %v1175 = vld [vmem:[%s13 + $0x18] sm:$0xff]
        %v1176 = vld [vmem:[%s13 + $0x20] sm:$0xff]
        %v1177 = vld [vmem:[%s13 + $0x28] sm:$0xff]
        %v1178 = vld [vmem:[%s13 + $0x30] sm:$0xff]
        %v1179 = vld [vmem:[%s13 + $0x38] sm:$0xff]
        %v1180 = vld [vmem:[%s14] sm:$0x1]
        %v1182 = vperm.slane %v1180, 0
        %vm1184 = vcmask 523264
        %v1186 = vsel %vm1184, %v1171, 0
        %1188 = vmatpush.msra.mxu0 0.0
        %1189 = vmatpush.msra.mxu0 0.0
        %1190 = vmatpush.msra.mxu0 0.0
        %1191 = vmatpush.msra.mxu0 0.0
        %1192 = vmatpush.msra.mxu0 0.0
        %1193 = vmatpush.msra.mxu0 0.0
        %1194 = vmatpush.msra.mxu0 0.0
        %1195 = vmatpush.msra.mxu0 0.0
        %1196 = vmatpush.msra.mxu0 %v1179
        %1197 = vmatpush.msra.mxu0 %v1178
        %1198 = vmatpush.msra.mxu0 %v1177
        %1199 = vmatpush.msra.mxu0 %v1176
        %1200 = vmatpush.msra.mxu0 %v1175
        %1201 = vmatpush.msra.mxu0 %v1174
        %1202 = vmatpush.msra.mxu0 %v1173
        %1203 = vmatpush.msra.mxu0 %v1172
        %1204 = vmatmul.f32.gmra.mxu0 %v1186
        %v1205 = vpop.f32.mrf.mxu0
        %v1206 = vadd.f32 %v1182, %v1205
        %1207 = vdwg.mxu0
        %v1208 = vadd.f32 %v1206, %v1057
        %1209 = vst.msk [vmem:[%s549] sm:$0xff] %vm680, %v1208
        %s1210 = sand.u32 %s373, 1
        %s1211 = scalar_lea.sflag [#allocation7], %s1210
        %s1212 = sand.u32 %s373, 1
        %s1213 = smul.addr %s1212, 8
        %s1214 = scalar_lea.vmem [#allocation11], %s1213
        // Predicated region
        $region97: #{tpu_custom_call.1} parent=79 // pred_check
          %p1215 = pneg %p383
        $region98: #{tpu_custom_call.1} parent=79 // pred_check_branch
          %1217 = sbr.rel (%p1215) target = $region100
        $region99: #{tpu_custom_call.1} parent=79 // pred_region
          %1219 = vsyncadd %s1211, 0
          %s1220 = smul.addr %s35, 2
          %s1221 = sadd.s32 %s36, %s1220
          %s1222 = smul.addr %s1221, 8
          %s1223 = scalar_lea.hbm %s15, %s1222
          %s1225 = sshll.u32 %s1214, 4
          %s1226 = int_to_ptr.vmem [resolvable:$true] %s1225
          %s1227 = sshll.u32 %s1223, 4
          %s1228 = int_to_ptr.hbm [resolvable:$true] %s1227
          %1230 = dma.vmem_to_hbm [thread:$0]  %s1226, 128, %s1228, %s1211
        $region100: #{tpu_custom_call.1} parent=79 // pred_fallthru
          _
      $region80: #{tpu_custom_call.1} parent=5 // pred_fallthru
        _
      %p1231 = scmp.le.s32.totalorder 2, %s26
      // Predicated region
      $region101: #{tpu_custom_call.1} parent=5 // pred_check
        %p1232 = pneg %p1231
      $region102: #{tpu_custom_call.1} parent=5 // pred_check_branch
        %1234 = sbr.rel (%p1232) target = $region104
      $region103: #{tpu_custom_call.1} parent=5 // pred_region
        %s1235 = ssub.s32 %s26, 2
        // Predicated region
        $region105: #{tpu_custom_call.1} parent=103 // pred_check
          %p1236 = pneg %p389
        $region106: #{tpu_custom_call.1} parent=103 // pred_check_branch
          %1238 = sbr.rel (%p1236) target = $region108
        $region107: #{tpu_custom_call.1} parent=103 // pred_region
          %s1239 = sand.u32 %s374, 1
          %s1240 = scalar_lea.sflag [#allocation7], %s1239
          %s1241 = sand.u32 %s374, 1
          %s1242 = smul.addr %s1241, 8
          %s1243 = scalar_lea.vmem [#allocation11], %s1242
          %1245 = dma.done %s1240, 128
        $region108: #{tpu_custom_call.1} parent=103 // pred_fallthru
          _
      $region104: #{tpu_custom_call.1} parent=5 // pred_fallthru
        _
    $region6: #{tpu_custom_call.1} parent=1 // loop_footer
      %s30 = sadd.s32 1, %s26
    $region7: #{tpu_custom_call.1} parent=1 // loop_footer_branch
      %25 = sbr.rel target = $region3
    $region8: #{tpu_custom_call.1} parent=1 // loop_exit
      _
    %1246 = vsyncpa [#allocation6], 1
    %s1247 = scalar_lea.sflag [#allocation6], 1
    %1248 = vsyncpa %s1247, 1
    %1249 = vsyncpa [#allocation9], 1
    %1250 = vsyncpa [#allocation7], 1
    %s1251 = scalar_lea.sflag [#allocation7], 1
    %1252 = vsyncpa %s1251, 1

// kernel: tpu_custom_call.1
$region0: #{tpu_custom_call.1}
  #allocation0 [shape = 'u32[]', space=smem, size = 0x4, offset = 0x4, fixed_abs, tag = 'smem constant byte address 0x4 - core index']
  #allocation1 [shape = 'u32[72,128]{1,0:T(1,128)}', space=vmem, size = 0x9000, scoped, tag = 'internal scratch']
  #allocation2 [shape = 'f32[16,32]{1,0:T(8,128)}', space=vmem, size = 0x2000, scoped, tag = 'scratch operand']
  #allocation3 [shape = 'f32[16,64]{1,0:T(8,128)}', space=vmem, size = 0x2000, scoped, tag = 'scratch operand']
  #allocation4 [shape = 'f32[8,32]{1,0:T(8,128)}', space=vmem, size = 0x1000, scoped, tag = 'scratch operand']
  %s0 = inlined_call_operand.vmem [shape: f32[2,16,32], index: 0, kind: input, shape index: {}]
  %s1 = inlined_call_operand.hbm [shape: f32[1,32], index: 1, kind: input, shape index: {}]
  %s2 = inlined_call_operand.vmem [shape: f32[1,32], index: 2, kind: input, shape index: {}]
  %s3 = inlined_call_operand.vmem [shape: f32[32,32], index: 3, kind: input, shape index: {}]
  %s4 = inlined_call_operand.vmem [shape: f32[1,32], index: 4, kind: input, shape index: {}]
  %s5 = inlined_call_operand.vmem [shape: f32[32,64], index: 5, kind: input, shape index: {}]
  %s6 = inlined_call_operand.vmem [shape: f32[1,64], index: 6, kind: input, shape index: {}]
  %s7 = inlined_call_operand.hbm [shape: f32[32,32], index: 7, kind: input, shape index: {}]
  %s8 = inlined_call_operand.vmem [shape: f32[1,32], index: 8, kind: input, shape index: {}]
  %s9 = inlined_call_operand.vmem [shape: f32[1,32], index: 9, kind: input, shape index: {}]
  %s10 = inlined_call_operand.vmem [shape: f32[1,32], index: 10, kind: input, shape index: {}]
  %s11 = inlined_call_operand.hbm [shape: f32[32,64], index: 11, kind: input, shape index: {}]
  %s12 = inlined_call_operand.vmem [shape: f32[1,64], index: 12, kind: input, shape index: {}]
  %s13 = inlined_call_operand.vmem [shape: f32[64,32], index: 13, kind: input, shape index: {}]
  %s14 = inlined_call_operand.vmem [shape: f32[1,32], index: 14, kind: input, shape index: {}]
  %s15 = inlined_call_operand.hbm [shape: f32[2,16,32], index: 15, kind: output, shape index: {}]
  %s16 = sld [smem:[#allocation0]]
  $region109: #{tpu_custom_call.1} parent=0
    _
  %s18 = ssub.s32 1, %s16
  %s19 = scalar_select 0, %s18, %s16
  $region1: #{tpu_custom_call.1} parent=0
    #allocation5 [shape = 'u8[512]{0}', space=vmem, size = 0x400, scoped, tag = 'input window, operand 1, single buffered']
    #allocation6 [shape = 's32[2]{0}', space=sflag, size = 0x8, scoped, tag = 'scoped memory for tpu_custom_call.1']
    #allocation7 [shape = 's32[2]{0}', space=sflag, size = 0x8, scoped, tag = 'scoped memory for tpu_custom_call.1']
    #allocation8 [shape = 'u8[16384]{0}', space=vmem, size = 0x4000, scoped, tag = 'input window, operand 7, single buffered']
    #allocation9 [shape = 's32[1]{0}', space=sflag, size = 0x4, scoped, tag = 'scoped memory for tpu_custom_call.1']
    #allocation10 [shape = 'u8[16384]{0}', space=vmem, size = 0x4000, scoped, tag = 'input window, operand 11, single buffered']
    #allocation11 [shape = 'u8[8192]{0}', space=vmem, size = 0x2000, scoped, tag = 'output window, operand 0']
    %20 = vsyncpa [#allocation6], 0
    %21 = vsyncpa [#allocation9], 0
    %22 = vsyncpa [#allocation7], 0
    %s23 = scalar_lea.sflag [#allocation7], 1
    %24 = vsyncpa %s23, 0
    loop: start=0, step=1, limit=6
    $region2: #{tpu_custom_call.1} parent=1 // loop_pre_header
      _
    $region3: #{tpu_custom_call.1} parent=1 // loop_header
      %s26 = sphi 0, %s30
      %p27 = scmp.ge.s32.totalorder %s26, 6
      %s33 = sphi 0, %s45
      %s34 = sphi 0, %s41
      %s35 = sphi 0, %s33
      %s36 = sphi 0, %s34
      %s37 = sphi 0, %s35
      %s38 = sphi 0, %s36
      %s48 = sphi 0, %s50
      %s51 = sphi 0, %s48
      %s52 = sphi 0, %s51
      %s68 = sphi 0, %s52
      %s72 = sphi 0, %s72
      %s74 = sphi 0, %s72
      %s75 = sphi 0, %s74
      %s89 = sphi 0, %s75
      %s93 = sphi 0, %s93
      %s95 = sphi 0, %s93
      %s96 = sphi 0, %s95
      %s110 = sphi 0, %s96
      %s114 = sphi 0, %s114
      %s116 = sphi 0, %s114
      %s117 = sphi 0, %s116
      %s131 = sphi 0, %s117
      %s135 = sphi 0, %s135
      %s137 = sphi 0, %s135
      %s138 = sphi 0, %s137
      %s152 = sphi 0, %s138
      %s156 = sphi 0, %s156
      %s158 = sphi 0, %s156
      %s159 = sphi 0, %s158
      %s173 = sphi 0, %s159
      %s177 = sphi 0, %s177
      %s179 = sphi 0, %s177
      %s180 = sphi 0, %s179
      %s194 = sphi 0, %s180
      %s198 = sphi 0, %s198
      %s200 = sphi 0, %s198
      %s201 = sphi 0, %s200
      %s215 = sphi 0, %s201
      %s219 = sphi 0, %s219
      %s221 = sphi 0, %s219
      %s222 = sphi 0, %s221
      %s236 = sphi 0, %s222
      %s240 = sphi 0, %s240
      %s242 = sphi 0, %s240
      %s243 = sphi 0, %s242
      %s257 = sphi 0, %s243
      %s261 = sphi 0, %s261
      %s263 = sphi 0, %s261
      %s264 = sphi 0, %s263
      %s278 = sphi 0, %s264
      %s282 = sphi 0, %s282
      %s284 = sphi 0, %s282
      %s285 = sphi 0, %s284
      %s299 = sphi 0, %s285
      %s303 = sphi 0, %s303
      %s305 = sphi 0, %s303
      %s306 = sphi 0, %s305
      %s320 = sphi 0, %s306
      %s324 = sphi 0, %s324
      %s326 = sphi 0, %s324
      %s327 = sphi 0, %s326
      %s341 = sphi 0, %s327
      %s345 = sphi 0, %s345
      %s347 = sphi 0, %s345
      %s348 = sphi 0, %s347
      %s362 = sphi 0, %s348
      %s370 = sphi 0, %s372
      %s373 = sphi 0, %s370
      %s374 = sphi 0, %s373
      %s390 = sphi 0, %s374
    $region4: #{tpu_custom_call.1} parent=1 // loop_header_branch
      %29 = sbr.rel (%p27) target = $region8
    $region5: #{tpu_custom_call.1} parent=1 // loop_body
      %s31 = ssub.s32 %s26, 1
      %s32 = ssub.s32 %s26, 2
      %s39 = sadd.s32 1, %s34
      %p40 = scmp.ge.s32.totalorder %s39, 2
      %s41 = scalar_select %p40, 0, %s39
      %s42 = sadd.s32 1, %s33
      %s43 = scalar_select %p40, %s42, %s33
      %p44 = scmp.ge.s32.totalorder %s43, 2
      %s45 = scalar_select %p44, 0, %s43
      %s46 = ssub.s32 %s33, %s45
      %p47 = scmp.eq.s32.totalorder %s46, 0
      %s49 = sadd.s32 %s48, 1
      %s50 = scalar_select %p47, %s48, %s49
      %p53 = pneg %p47
      %p54 = scmp.eq.s32.totalorder %s26, 3
      %p55 = por %p53, %p54
      %p56 = scmp.ne.s32.totalorder %s48, %s51
      %p57 = scmp.eq.s32.totalorder %s26, 0
      %p58 = por %p56, %p57
      %p59 = scmp.ne.s32.totalorder %s48, %s51
      %p60 = scmp.eq.s32.totalorder %s31, 3
      %p61 = por %p59, %p60
      %p62 = scmp.ne.s32.totalorder %s51, %s52
      %p63 = scmp.eq.s32.totalorder %s31, 0
      %p64 = por %p62, %p63
      %p65 = scmp.ne.s32.totalorder %s51, %s52
      %p66 = scmp.eq.s32.totalorder %s32, 3
      %p67 = por %p65, %p66
      %p69 = scmp.ne.s32.totalorder %s52, %s68
      %p70 = scmp.eq.s32.totalorder %s32, 0
      %p71 = por %p69, %p70
      %s73 = sadd.s32 %s72, 1
      %p76 = scmp.eq.s32.totalorder %s26, 3
      %p77 = scmp.ne.s32.totalorder %s72, %s74
      %p78 = scmp.eq.s32.totalorder %s26, 0
      %p79 = por %p77, %p78
      %p80 = scmp.ne.s32.totalorder %s72, %s74
      %p81 = scmp.eq.s32.totalorder %s31, 3
      %p82 = por %p80, %p81
      %p83 = scmp.ne.s32.totalorder %s74, %s75
      %p84 = scmp.eq.s32.totalorder %s31, 0
      %p85 = por %p83, %p84
      %p86 = scmp.ne.s32.totalorder %s74, %s75
      %p87 = scmp.eq.s32.totalorder %s32, 3
      %p88 = por %p86, %p87
      %p90 = scmp.ne.s32.totalorder %s75, %s89
      %p91 = scmp.eq.s32.totalorder %s32, 0
      %p92 = por %p90, %p91
      %s94 = sadd.s32 %s93, 1
      %p97 = scmp.eq.s32.totalorder %s26, 3
      %p98 = scmp.ne.s32.totalorder %s93, %s95
      %p99 = scmp.eq.s32.totalorder %s26, 0
      %p100 = por %p98, %p99
      %p101 = scmp.ne.s32.totalorder %s93, %s95
      %p102 = scmp.eq.s32.totalorder %s31, 3
      %p103 = por %p101, %p102
      %p104 = scmp.ne.s32.totalorder %s95, %s96
      %p105 = scmp.eq.s32.totalorder %s31, 0
      %p106 = por %p104, %p105
      %p107 = scmp.ne.s32.totalorder %s95, %s96
      %p108 = scmp.eq.s32.totalorder %s32, 3
      %p109 = por %p107, %p108
      %p111 = scmp.ne.s32.totalorder %s96, %s110
      %p112 = scmp.eq.s32.totalorder %s32, 0
      %p113 = por %p111, %p112
      %s115 = sadd.s32 %s114, 1
      %p118 = scmp.eq.s32.totalorder %s26, 3
      %p119 = scmp.ne.s32.totalorder %s114, %s116
      %p120 = scmp.eq.s32.totalorder %s26, 0
      %p121 = por %p119, %p120
      %p122 = scmp.ne.s32.totalorder %s114, %s116
      %p123 = scmp.eq.s32.totalorder %s31, 3
      %p124 = por %p122, %p123
      %p125 = scmp.ne.s32.totalorder %s116, %s117
      %p126 = scmp.eq.s32.totalorder %s31, 0
      %p127 = por %p125, %p126
      %p128 = scmp.ne.s32.totalorder %s116, %s117
      %p129 = scmp.eq.s32.totalorder %s32, 3
      %p130 = por %p128, %p129
      %p132 = scmp.ne.s32.totalorder %s117, %s131
      %p133 = scmp.eq.s32.totalorder %s32, 0
      %p134 = por %p132, %p133
      %s136 = sadd.s32 %s135, 1
      %p139 = scmp.eq.s32.totalorder %s26, 3
      %p140 = scmp.ne.s32.totalorder %s135, %s137
      %p141 = scmp.eq.s32.totalorder %s26, 0
      %p142 = por %p140, %p141
      %p143 = scmp.ne.s32.totalorder %s135, %s137
      %p144 = scmp.eq.s32.totalorder %s31, 3
      %p145 = por %p143, %p144
      %p146 = scmp.ne.s32.totalorder %s137, %s138
      %p147 = scmp.eq.s32.totalorder %s31, 0
      %p148 = por %p146, %p147
      %p149 = scmp.ne.s32.totalorder %s137, %s138
      %p150 = scmp.eq.s32.totalorder %s32, 3
      %p151 = por %p149, %p150
      %p153 = scmp.ne.s32.totalorder %s138, %s152
      %p154 = scmp.eq.s32.totalorder %s32, 0
      %p155 = por %p153, %p154
      %s157 = sadd.s32 %s156, 1
      %p160 = scmp.eq.s32.totalorder %s26, 3
      %p161 = scmp.ne.s32.totalorder %s156, %s158
      %p162 = scmp.eq.s32.totalorder %s26, 0
      %p163 = por %p161, %p162
      %p164 = scmp.ne.s32.totalorder %s156, %s158
      %p165 = scmp.eq.s32.totalorder %s31, 3
      %p166 = por %p164, %p165
      %p167 = scmp.ne.s32.totalorder %s158, %s159
      %p168 = scmp.eq.s32.totalorder %s31, 0
      %p169 = por %p167, %p168
      %p170 = scmp.ne.s32.totalorder %s158, %s159
      %p171 = scmp.eq.s32.totalorder %s32, 3
      %p172 = por %p170, %p171
      %p174 = scmp.ne.s32.totalorder %s159, %s173
      %p175 = scmp.eq.s32.totalorder %s32, 0
      %p176 = por %p174, %p175
      %s178 = sadd.s32 %s177, 1
      %p181 = scmp.eq.s32.totalorder %s26, 3
      %p182 = scmp.ne.s32.totalorder %s177, %s179
      %p183 = scmp.eq.s32.totalorder %s26, 0
      %p184 = por %p182, %p183
      %p185 = scmp.ne.s32.totalorder %s177, %s179
      %p186 = scmp.eq.s32.totalorder %s31, 3
      %p187 = por %p185, %p186
      %p188 = scmp.ne.s32.totalorder %s179, %s180
      %p189 = scmp.eq.s32.totalorder %s31, 0
      %p190 = por %p188, %p189
      %p191 = scmp.ne.s32.totalorder %s179, %s180
      %p192 = scmp.eq.s32.totalorder %s32, 3
      %p193 = por %p191, %p192
      %p195 = scmp.ne.s32.totalorder %s180, %s194
      %p196 = scmp.eq.s32.totalorder %s32, 0
      %p197 = por %p195, %p196
      %s199 = sadd.s32 %s198, 1
      %p202 = scmp.eq.s32.totalorder %s26, 3
      %p203 = scmp.ne.s32.totalorder %s198, %s200
      %p204 = scmp.eq.s32.totalorder %s26, 0
      %p205 = por %p203, %p204
      %p206 = scmp.ne.s32.totalorder %s198, %s200
      %p207 = scmp.eq.s32.totalorder %s31, 3
      %p208 = por %p206, %p207
      %p209 = scmp.ne.s32.totalorder %s200, %s201
      %p210 = scmp.eq.s32.totalorder %s31, 0
      %p211 = por %p209, %p210
      %p212 = scmp.ne.s32.totalorder %s200, %s201
      %p213 = scmp.eq.s32.totalorder %s32, 3
      %p214 = por %p212, %p213
      %p216 = scmp.ne.s32.totalorder %s201, %s215
      %p217 = scmp.eq.s32.totalorder %s32, 0
      %p218 = por %p216, %p217
      %s220 = sadd.s32 %s219, 1
      %p223 = scmp.eq.s32.totalorder %s26, 3
      %p224 = scmp.ne.s32.totalorder %s219, %s221
      %p225 = scmp.eq.s32.totalorder %s26, 0
      %p226 = por %p224, %p225
      %p227 = scmp.ne.s32.totalorder %s219, %s221
      %p228 = scmp.eq.s32.totalorder %s31, 3
      %p229 = por %p227, %p228
      %p230 = scmp.ne.s32.totalorder %s221, %s222
      %p231 = scmp.eq.s32.totalorder %s31, 0
      %p232 = por %p230, %p231
      %p233 = scmp.ne.s32.totalorder %s221, %s222
      %p234 = scmp.eq.s32.totalorder %s32, 3
      %p235 = por %p233, %p234
      %p237 = scmp.ne.s32.totalorder %s222, %s236
      %p238 = scmp.eq.s32.totalorder %s32, 0
      %p239 = por %p237, %p238
      %s241 = sadd.s32 %s240, 1
      %p244 = scmp.eq.s32.totalorder %s26, 3
      %p245 = scmp.ne.s32.totalorder %s240, %s242
      %p246 = scmp.eq.s32.totalorder %s26, 0
      %p247 = por %p245, %p246
      %p248 = scmp.ne.s32.totalorder %s240, %s242
      %p249 = scmp.eq.s32.totalorder %s31, 3
      %p250 = por %p248, %p249
      %p251 = scmp.ne.s32.totalorder %s242, %s243
      %p252 = scmp.eq.s32.totalorder %s31, 0
      %p253 = por %p251, %p252
      %p254 = scmp.ne.s32.totalorder %s242, %s243
      %p255 = scmp.eq.s32.totalorder %s32, 3
      %p256 = por %p254, %p255
      %p258 = scmp.ne.s32.totalorder %s243, %s257
      %p259 = scmp.eq.s32.totalorder %s32, 0
      %p260 = por %p258, %p259
      %s262 = sadd.s32 %s261, 1
      %p265 = scmp.eq.s32.totalorder %s26, 3
      %p266 = scmp.ne.s32.totalorder %s261, %s263
      %p267 = scmp.eq.s32.totalorder %s26, 0
      %p268 = por %p266, %p267
      %p269 = scmp.ne.s32.totalorder %s261, %s263
      %p270 = scmp.eq.s32.totalorder %s31, 3
      %p271 = por %p269, %p270
      %p272 = scmp.ne.s32.totalorder %s263, %s264
      %p273 = scmp.eq.s32.totalorder %s31, 0
      %p274 = por %p272, %p273
      %p275 = scmp.ne.s32.totalorder %s263, %s264
      %p276 = scmp.eq.s32.totalorder %s32, 3
      %p277 = por %p275, %p276
      %p279 = scmp.ne.s32.totalorder %s264, %s278
      %p280 = scmp.eq.s32.totalorder %s32, 0
      %p281 = por %p279, %p280
      %s283 = sadd.s32 %s282, 1
      %p286 = scmp.eq.s32.totalorder %s26, 3
      %p287 = scmp.ne.s32.totalorder %s282, %s284
      %p288 = scmp.eq.s32.totalorder %s26, 0
      %p289 = por %p287, %p288
      %p290 = scmp.ne.s32.totalorder %s282, %s284
      %p291 = scmp.eq.s32.totalorder %s31, 3
      %p292 = por %p290, %p291
      %p293 = scmp.ne.s32.totalorder %s284, %s285
      %p294 = scmp.eq.s32.totalorder %s31, 0
      %p295 = por %p293, %p294
      %p296 = scmp.ne.s32.totalorder %s284, %s285
      %p297 = scmp.eq.s32.totalorder %s32, 3
      %p298 = por %p296, %p297
      %p300 = scmp.ne.s32.totalorder %s285, %s299
      %p301 = scmp.eq.s32.totalorder %s32, 0
      %p302 = por %p300, %p301
      %s304 = sadd.s32 %s303, 1
      %p307 = scmp.eq.s32.totalorder %s26, 3
      %p308 = scmp.ne.s32.totalorder %s303, %s305
      %p309 = scmp.eq.s32.totalorder %s26, 0
      %p310 = por %p308, %p309
      %p311 = scmp.ne.s32.totalorder %s303, %s305
      %p312 = scmp.eq.s32.totalorder %s31, 3
      %p313 = por %p311, %p312
      %p314 = scmp.ne.s32.totalorder %s305, %s306
      %p315 = scmp.eq.s32.totalorder %s31, 0
      %p316 = por %p314, %p315
      %p317 = scmp.ne.s32.totalorder %s305, %s306
      %p318 = scmp.eq.s32.totalorder %s32, 3
      %p319 = por %p317, %p318
      %p321 = scmp.ne.s32.totalorder %s306, %s320
      %p322 = scmp.eq.s32.totalorder %s32, 0
      %p323 = por %p321, %p322
      %s325 = sadd.s32 %s324, 1
      %p328 = scmp.eq.s32.totalorder %s26, 3
      %p329 = scmp.ne.s32.totalorder %s324, %s326
      %p330 = scmp.eq.s32.totalorder %s26, 0
      %p331 = por %p329, %p330
      %p332 = scmp.ne.s32.totalorder %s324, %s326
      %p333 = scmp.eq.s32.totalorder %s31, 3
      %p334 = por %p332, %p333
      %p335 = scmp.ne.s32.totalorder %s326, %s327
      %p336 = scmp.eq.s32.totalorder %s31, 0
      %p337 = por %p335, %p336
      %p338 = scmp.ne.s32.totalorder %s326, %s327
      %p339 = scmp.eq.s32.totalorder %s32, 3
      %p340 = por %p338, %p339
      %p342 = scmp.ne.s32.totalorder %s327, %s341
      %p343 = scmp.eq.s32.totalorder %s32, 0
      %p344 = por %p342, %p343
      %s346 = sadd.s32 %s345, 1
      %p349 = scmp.eq.s32.totalorder %s26, 3
      %p350 = scmp.ne.s32.totalorder %s345, %s347
      %p351 = scmp.eq.s32.totalorder %s26, 0
      %p352 = por %p350, %p351
      %p353 = scmp.ne.s32.totalorder %s345, %s347
      %p354 = scmp.eq.s32.totalorder %s31, 3
      %p355 = por %p353, %p354
      %p356 = scmp.ne.s32.totalorder %s347, %s348
      %p357 = scmp.eq.s32.totalorder %s31, 0
      %p358 = por %p356, %p357
      %p359 = scmp.ne.s32.totalorder %s347, %s348
      %p360 = scmp.eq.s32.totalorder %s32, 3
      %p361 = por %p359, %p360
      %p363 = scmp.ne.s32.totalorder %s348, %s362
      %p364 = scmp.eq.s32.totalorder %s32, 0
      %p365 = por %p363, %p364
      %s366 = ssub.s32 %s33, %s45
      %s367 = ssub.s32 %s34, %s41
      %s368 = sor.u32 %s366, %s367
      %p369 = scmp.eq.s32.totalorder %s368, 0
      %s371 = sadd.s32 %s370, 1
      %s372 = scalar_select %p369, %s370, %s371
      %p375 = pneg %p369
      %p376 = scmp.eq.s32.totalorder %s26, 3
      %p377 = por %p375, %p376
      %p378 = scmp.ne.s32.totalorder %s370, %s373
      %p379 = scmp.eq.s32.totalorder %s26, 0
      %p380 = por %p378, %p379
      %p381 = scmp.ne.s32.totalorder %s370, %s373
      %p382 = scmp.eq.s32.totalorder %s31, 3
      %p383 = por %p381, %p382
      %p384 = scmp.ne.s32.totalorder %s373, %s374
      %p385 = scmp.eq.s32.totalorder %s31, 0
      %p386 = por %p384, %p385
      %p387 = scmp.ne.s32.totalorder %s373, %s374
      %p388 = scmp.eq.s32.totalorder %s32, 3
      %p389 = por %p387, %p388
      %p391 = scmp.ne.s32.totalorder %s374, %s390
      %p392 = scmp.eq.s32.totalorder %s32, 0
      %p393 = por %p391, %p392
      %p394 = scmp.le.s32.totalorder 1, %s26
      %p395 = scmp.lt.s32.totalorder %s26, 5
      %p396 = pnand %p394, %p395
      %p397 = pneg %p396
      // Predicated region
      $region9: #{tpu_custom_call.1} parent=5 // pred_check
        _
      $region10: #{tpu_custom_call.1} parent=5 // pred_check_branch
        %399 = sbr.rel (%p396) target = $region12
      $region11: #{tpu_custom_call.1} parent=5 // pred_region
        %s400 = ssub.s32 %s26, 1
        // Predicated region
        $region13: #{tpu_custom_call.1} parent=11 // pred_check
          %p401 = pneg %p85
        $region14: #{tpu_custom_call.1} parent=11 // pred_check_branch
          %403 = sbr.rel (%p401) target = $region16
        $region15: #{tpu_custom_call.1} parent=11 // pred_region
          %405 = vsyncadd [#allocation6], 0
          %s407 = sshll.u32 %s1, 4
          %s408 = int_to_ptr.hbm [resolvable:$true] %s407
          %s409 = sshll.u32 [#allocation5], 4
          %s410 = int_to_ptr.vmem [resolvable:$true] %s409
          %412 = dma.hbm_to_vmem [thread:$0]  %s408, 16, %s410, [#allocation6]
        $region16: #{tpu_custom_call.1} parent=11 // pred_fallthru
          _
        // Predicated region
        $region17: #{tpu_custom_call.1} parent=11 // pred_check
          %p413 = pneg %p106
        $region18: #{tpu_custom_call.1} parent=11 // pred_check_branch
          %415 = sbr.rel (%p413) target = $region20
        $region19: #{tpu_custom_call.1} parent=11 // pred_region
          _
        $region20: #{tpu_custom_call.1} parent=11 // pred_fallthru
          _
        // Predicated region
        $region21: #{tpu_custom_call.1} parent=11 // pred_check
          %p416 = pneg %p127
        $region22: #{tpu_custom_call.1} parent=11 // pred_check_branch
          %418 = sbr.rel (%p416) target = $region24
        $region23: #{tpu_custom_call.1} parent=11 // pred_region
          _
        $region24: #{tpu_custom_call.1} parent=11 // pred_fallthru
          _
        // Predicated region
        $region25: #{tpu_custom_call.1} parent=11 // pred_check
          %p419 = pneg %p148
        $region26: #{tpu_custom_call.1} parent=11 // pred_check_branch
          %421 = sbr.rel (%p419) target = $region28
        $region27: #{tpu_custom_call.1} parent=11 // pred_region
          _
        $region28: #{tpu_custom_call.1} parent=11 // pred_fallthru
          _
        // Predicated region
        $region29: #{tpu_custom_call.1} parent=11 // pred_check
          %p422 = pneg %p169
        $region30: #{tpu_custom_call.1} parent=11 // pred_check_branch
          %424 = sbr.rel (%p422) target = $region32
        $region31: #{tpu_custom_call.1} parent=11 // pred_region
          _
        $region32: #{tpu_custom_call.1} parent=11 // pred_fallthru
          _
        // Predicated region
        $region33: #{tpu_custom_call.1} parent=11 // pred_check
          %p425 = pneg %p190
        $region34: #{tpu_custom_call.1} parent=11 // pred_check_branch
          %427 = sbr.rel (%p425) target = $region36
        $region35: #{tpu_custom_call.1} parent=11 // pred_region
          _
        $region36: #{tpu_custom_call.1} parent=11 // pred_fallthru
          _
        // Predicated region
        $region37: #{tpu_custom_call.1} parent=11 // pred_check
          %p428 = pneg %p211
        $region38: #{tpu_custom_call.1} parent=11 // pred_check_branch
          %430 = sbr.rel (%p428) target = $region40
        $region39: #{tpu_custom_call.1} parent=11 // pred_region
          %432 = vsyncadd [#allocation9], 0
          %s433 = sshll.u32 %s7, 4
          %s434 = int_to_ptr.hbm [resolvable:$true] %s433
          %s435 = sshll.u32 [#allocation8], 4
          %s436 = int_to_ptr.vmem [resolvable:$true] %s435
          %441 = dma.hbm_to_vmem [thread:$0]  %s434, 512, %s436, [#allocation9], 128, 128, 8
        $region40: #{tpu_custom_call.1} parent=11 // pred_fallthru
          _
        // Predicated region
        $region41: #{tpu_custom_call.1} parent=11 // pred_check
          %p442 = pneg %p232
        $region42: #{tpu_custom_call.1} parent=11 // pred_check_branch
          %444 = sbr.rel (%p442) target = $region44
        $region43: #{tpu_custom_call.1} parent=11 // pred_region
          _
        $region44: #{tpu_custom_call.1} parent=11 // pred_fallthru
          _
        // Predicated region
        $region45: #{tpu_custom_call.1} parent=11 // pred_check
          %p445 = pneg %p253
        $region46: #{tpu_custom_call.1} parent=11 // pred_check_branch
          %447 = sbr.rel (%p445) target = $region48
        $region47: #{tpu_custom_call.1} parent=11 // pred_region
          _
        $region48: #{tpu_custom_call.1} parent=11 // pred_fallthru
          _
        // Predicated region
        $region49: #{tpu_custom_call.1} parent=11 // pred_check
          %p448 = pneg %p274
        $region50: #{tpu_custom_call.1} parent=11 // pred_check_branch
          %450 = sbr.rel (%p448) target = $region52
        $region51: #{tpu_custom_call.1} parent=11 // pred_region
          _
        $region52: #{tpu_custom_call.1} parent=11 // pred_fallthru
          _
        // Predicated region
        $region53: #{tpu_custom_call.1} parent=11 // pred_check
          %p451 = pneg %p295
        $region54: #{tpu_custom_call.1} parent=11 // pred_check_branch
          %453 = sbr.rel (%p451) target = $region56
        $region55: #{tpu_custom_call.1} parent=11 // pred_region
          %455 = vsyncadd [#allocation9], 0
          %s456 = sshll.u32 %s11, 4
          %s457 = int_to_ptr.hbm [resolvable:$true] %s456
          %s458 = sshll.u32 [#allocation10], 4
          %s459 = int_to_ptr.vmem [resolvable:$true] %s458
          %464 = dma.hbm_to_vmem [thread:$0]  %s457, 512, %s459, [#allocation9], 128, 128, 8
        $region56: #{tpu_custom_call.1} parent=11 // pred_fallthru
          _
        // Predicated region
        $region57: #{tpu_custom_call.1} parent=11 // pred_check
          %p465 = pneg %p316
        $region58: #{tpu_custom_call.1} parent=11 // pred_check_branch
          %467 = sbr.rel (%p465) target = $region60
        $region59: #{tpu_custom_call.1} parent=11 // pred_region
          _
        $region60: #{tpu_custom_call.1} parent=11 // pred_fallthru
          _
        // Predicated region
        $region61: #{tpu_custom_call.1} parent=11 // pred_check
          %p468 = pneg %p337
        $region62: #{tpu_custom_call.1} parent=11 // pred_check_branch
          %470 = sbr.rel (%p468) target = $region64
        $region63: #{tpu_custom_call.1} parent=11 // pred_region
          _
        $region64: #{tpu_custom_call.1} parent=11 // pred_fallthru
          _
        // Predicated region
        $region65: #{tpu_custom_call.1} parent=11 // pred_check
          %p471 = pneg %p358
        $region66: #{tpu_custom_call.1} parent=11 // pred_check_branch
          %473 = sbr.rel (%p471) target = $region68
        $region67: #{tpu_custom_call.1} parent=11 // pred_region
          _
        $region68: #{tpu_custom_call.1} parent=11 // pred_fallthru
          _
      $region12: #{tpu_custom_call.1} parent=5 // pred_fallthru
        _
      %p474 = scmp.lt.s32.totalorder %s26, 4
      // Predicated region
      $region69: #{tpu_custom_call.1} parent=5 // pred_check
        %p475 = pneg %p474
      $region70: #{tpu_custom_call.1} parent=5 // pred_check_branch
        %477 = sbr.rel (%p475) target = $region72
      $region71: #{tpu_custom_call.1} parent=5 // pred_region
        // Predicated region
        $region73: #{tpu_custom_call.1} parent=71 // pred_check
          %p478 = pneg %p58
        $region74: #{tpu_custom_call.1} parent=71 // pred_check_branch
          %480 = sbr.rel (%p478) target = $region76
        $region75: #{tpu_custom_call.1} parent=71 // pred_region
          %p481 = scmp.lt.s32.totalorder %s33, 1
          %s482 = scalar_select %p481, %s33, 1
          %s483 = smul.addr %s482, 2
          %s484 = smul.addr %s483, 8
          %s485 = scalar_lea.vmem %s0, %s484
        $region76: #{tpu_custom_call.1} parent=71 // pred_fallthru
          _
      $region72: #{tpu_custom_call.1} parent=5 // pred_fallthru
        _
      %p486 = scmp.le.s32.totalorder 1, %s26
      %p487 = scmp.lt.s32.totalorder %s26, 5
      %p488 = pnand %p486, %p487
      %p489 = pneg %p488
      // Predicated region
      $region77: #{tpu_custom_call.1} parent=5 // pred_check
        _
      $region78: #{tpu_custom_call.1} parent=5 // pred_check_branch
        %491 = sbr.rel (%p488) target = $region80
      $region79: #{tpu_custom_call.1} parent=5 // pred_region
        %s492 = ssub.s32 %s26, 1
        // Predicated region
        $region81: #{tpu_custom_call.1} parent=79 // pred_check
          %p493 = pneg %p85
        $region82: #{tpu_custom_call.1} parent=79 // pred_check_branch
          %495 = sbr.rel (%p493) target = $region84
        $region83: #{tpu_custom_call.1} parent=79 // pred_region
          %497 = dma.done [#allocation6], 16
        $region84: #{tpu_custom_call.1} parent=79 // pred_fallthru
          _
        // Predicated region
        $region85: #{tpu_custom_call.1} parent=79 // pred_check
          %p498 = pneg %p211
        $region86: #{tpu_custom_call.1} parent=79 // pred_check_branch
          %500 = sbr.rel (%p498) target = $region88
        $region87: #{tpu_custom_call.1} parent=79 // pred_region
          %502 = dma.done [#allocation9], 512
        $region88: #{tpu_custom_call.1} parent=79 // pred_fallthru
          _
        // Predicated region
        $region89: #{tpu_custom_call.1} parent=79 // pred_check
          %p503 = pneg %p295
        $region90: #{tpu_custom_call.1} parent=79 // pred_check_branch
          %505 = sbr.rel (%p503) target = $region92
        $region91: #{tpu_custom_call.1} parent=79 // pred_region
          %507 = dma.done [#allocation9], 512
        $region92: #{tpu_custom_call.1} parent=79 // pred_fallthru
          _
        %p508 = scmp.lt.s32.totalorder %s35, 1
        %s509 = scalar_select %p508, %s35, 1
        %s510 = smul.addr %s509, 2
        %s511 = smul.addr %s510, 8
        %s512 = scalar_lea.vmem %s0, %s511
        %p513 = pneg %p64
        %p514 = pneg %p61
        %p515 = pneg %p85
        %p516 = pneg %p82
        %p517 = pneg %p106
        %p518 = pneg %p103
        %p519 = pneg %p127
        %p520 = pneg %p124
        %p521 = pneg %p148
        %p522 = pneg %p145
        %p523 = pneg %p169
        %p524 = pneg %p166
        %p525 = pneg %p190
        %p526 = pneg %p187
        %p527 = pneg %p211
        %p528 = pneg %p208
        %p529 = pneg %p232
        %p530 = pneg %p229
        %p531 = pneg %p253
        %p532 = pneg %p250
        %p533 = pneg %p274
        %p534 = pneg %p271
        %p535 = pneg %p295
        %p536 = pneg %p292
        %p537 = pneg %p316
        %p538 = pneg %p313
        %p539 = pneg %p337
        %p540 = pneg %p334
        %p541 = pneg %p358
        %p542 = pneg %p355
        %p543 = pneg %p386
        %p544 = pneg %p383
        %s545 = sand.u32 %s373, 1
        %s546 = scalar_lea.sflag [#allocation7], %s545
        %s547 = sand.u32 %s373, 1
        %s548 = smul.addr %s547, 8
        %s549 = scalar_lea.vmem [#allocation11], %s548
        %p550 = scmp.lt.s32.totalorder %s35, 1
        %s551 = scalar_select %p550, %s35, 1
        %s552 = smul.addr %s551, 2
        %s553 = smul.addr %s552, 8
        %s554 = scalar_lea.vmem %s0, %s553
        %p555 = scmp.eq.s32.totalorder %s36, 0
        // Predicated region
        $region93: #{tpu_custom_call.1} parent=79 // pred_check
          %p556 = pneg %p555
        $region94: #{tpu_custom_call.1} parent=79 // pred_check_branch
          %558 = sbr.rel (%p556) target = $region96
        $region95: #{tpu_custom_call.1} parent=79 // pred_region
          %v559 = vld [vmem:[%s554] sm:$0xff]
          %v560 = vld [vmem:[%s554 + $0x8] sm:$0xff]
          %v561 = vld [vmem:[#allocation5] sm:$0x1]
          %v562 = vld [vmem:[%s2] sm:$0x1]
          %vm563 = vcmask 261120
          %v564 = vsel %vm563, %v559, 0.0
          %565 = vadd.xlane.f32.xlu0 %v564
          %v566 = vpop.xlane.xlu0 %565
          %v567 = vsel %vm563, %v560, 0.0
          %568 = vadd.xlane.f32.xlu0 %v567
          %v569 = vpop.xlane.xlu0 %568
          %v570 = vrcp.pop 32.0
          %v571 = vmul.f32 32.0, %v570
          %v572 = vsub.f32 1.0, %v571
          %v573 = vmul.f32 %v570, %v572
          %v574 = vadd.f32 %v570, %v573
          %vm575 = vweird.f32 %v570
          %v576 = vsel %vm575, %v570, %v574
          %v577 = vmul.f32 %v566, %v576
          %v578 = vmul.f32 %v569, %v576
          %v579 = vsub.f32 %v559, %v577
          %v580 = vsub.f32 %v560, %v578
          %v581 = vmul.f32 %v579, %v579
          %v582 = vmul.f32 %v580, %v580
          %v583 = vsel %vm563, %v581, 0.0
          %584 = vadd.xlane.f32.xlu0 %v583
          %v585 = vpop.xlane.xlu0 %584
          %v586 = vsel %vm563, %v582, 0.0
          %587 = vadd.xlane.f32.xlu0 %v586
          %v588 = vpop.xlane.xlu0 %587
          %v589 = vmul.f32 %v585, %v576
          %v590 = vmul.f32 %v588, %v576
          %v591 = vadd.f32 %v589, 1e-05
          %v592 = vadd.f32 %v590, 1e-05
          %v593 = vrsqrt.pop %v591
          %v594 = vmul.f32 %v593, %v591
          %v595 = vmul.f32 %v594, %v593
          %v596 = vmul.f32 0.5, %v595
          %v597 = vsub.f32 1.5, %v596
          %v598 = vmul.f32 %v593, %v597
          %vm599 = vweird.f32 %v591
          %vm600 = vweird.f32 %v593
          %vm601 = vmor %vm599, %vm600
          %v602 = vsel %vm601, %v593, %v598
          %v603 = vrsqrt.pop %v592
          %v604 = vmul.f32 %v603, %v592
          %v605 = vmul.f32 %v604, %v603
          %v606 = vmul.f32 0.5, %v605
          %v607 = vsub.f32 1.5, %v606
          %v608 = vmul.f32 %v603, %v607
          %vm609 = vweird.f32 %v592
          %vm610 = vweird.f32 %v603
          %vm611 = vmor %vm609, %vm610
          %v612 = vsel %vm611, %v603, %v608
          %v613 = vmul.f32 %v579, %v602
          %v614 = vmul.f32 %v580, %v612
          %v616 = vperm.slane %v561, 0
          %v618 = vmul.f32 %v613, %v616
          %v619 = vmul.f32 %v614, %v616
          %v621 = vperm.slane %v562, 0
          %v623 = vadd.f32 %v618, %v621
          %v624 = vadd.f32 %v619, %v621
          %625 = vst.msk [vmem:[#allocation2] sm:$0xff] %vm563, %v623
          %626 = vst.msk [vmem:[#allocation2 + $0x8] sm:$0xff] %vm563, %v624
          %v627 = vld [vmem:[%s5] sm:$0xff]
          %v628 = vld [vmem:[%s5 + $0x8] sm:$0xff]
          %v629 = vld [vmem:[%s5 + $0x10] sm:$0xff]
          %v630 = vld [vmem:[%s5 + $0x18] sm:$0xff]
          %v631 = vld [vmem:[%s6] sm:$0x1]
          %v633 = vperm.slane %v631, 0
          %v636 = vsel %vm563, %v623, 0
          %v639 = vsel %vm563, %v624, 0
          %641 = vmatpush.msra.mxu0 0.0
          %642 = vmatpush.msra.mxu0 0.0
          %643 = vmatpush.msra.mxu0 0.0
          %644 = vmatpush.msra.mxu0 0.0
          %645 = vmatpush.msra.mxu0 0.0
          %646 = vmatpush.msra.mxu0 0.0
          %647 = vmatpush.msra.mxu0 0.0
          %648 = vmatpush.msra.mxu0 0.0
          %649 = vmatpush.msra.mxu0 0.0
          %650 = vmatpush.msra.mxu0 0.0
          %651 = vmatpush.msra.mxu0 0.0
          %652 = vmatpush.msra.mxu0 0.0
          %653 = vmatpush.msra.mxu0 %v630
          %654 = vmatpush.msra.mxu0 %v629
          %655 = vmatpush.msra.mxu0 %v628
          %656 = vmatpush.msra.mxu0 %v627
          %657 = vmatmul.f32.gmra.mxu0 %v636
          %v658 = vpop.f32.mrf.mxu0
          %v659 = vadd.f32 %v633, %v658
          %660 = vmatmul.f32.gmra.mxu0 %v639
          %v661 = vpop.f32.mrf.mxu0
          %v662 = vadd.f32 %v633, %v661
          %663 = vdwg.mxu0
          %vm664 = vcmask 523264
          %665 = vst.msk [vmem:[#allocation3] sm:$0xff] %vm664, %v659
          %666 = vst.msk [vmem:[#allocation3 + $0x8] sm:$0xff] %vm664, %v662
        $region96: #{tpu_custom_call.1} parent=79 // pred_fallthru
          _
        %s667 = smul.u32 %s36, 8
        %s668 = scalar_lea.vmem %s554, %s667
        %v669 = vld [vmem:[%s668] sm:$0xff]
        %s670 = scalar_lea.vmem [#allocation2], %s667
        %v671 = vld [vmem:[%s670] sm:$0xff]
        %v672 = vld [vmem:[%s3] sm:$0xff]
        %v673 = vld [vmem:[%s3 + $0x8] sm:$0xff]
        %v674 = vld [vmem:[%s3 + $0x10] sm:$0xff]
        %v675 = vld [vmem:[%s3 + $0x18] sm:$0xff]
        %v676 = vld [vmem:[%s4] sm:$0x1]
        %v678 = vperm.slane %v676, 0
        %vm680 = vcmask 261120
        %v682 = vsel %vm680, %v671, 0
        %684 = vmatpush.msra.mxu0 0.0
        %685 = vmatpush.msra.mxu0 0.0
        %686 = vmatpush.msra.mxu0 0.0
        %687 = vmatpush.msra.mxu0 0.0
        %688 = vmatpush.msra.mxu0 0.0
        %689 = vmatpush.msra.mxu0 0.0
        %690 = vmatpush.msra.mxu0 0.0
        %691 = vmatpush.msra.mxu0 0.0
        %692 = vmatpush.msra.mxu0 0.0
        %693 = vmatpush.msra.mxu0 0.0
        %694 = vmatpush.msra.mxu0 0.0
        %695 = vmatpush.msra.mxu0 0.0
        %696 = vmatpush.msra.mxu0 %v675
        %697 = vmatpush.msra.mxu0 %v674
        %698 = vmatpush.msra.mxu0 %v673
        %699 = vmatpush.msra.mxu0 %v672
        %700 = vmatmul.f32.gmra.mxu0 %v682
        %v701 = vpop.f32.mrf.mxu0
        %v702 = vadd.f32 %v678, %v701
        %703 = vdwg.mxu0
        %v704 = vmul.f32 %v702, 0.35355338
        %v705 = vld [vmem:[#allocation3] sm:$0xff]
        %v706 = vld [vmem:[#allocation3 + $0x8] sm:$0xff]
        %vm707 = vcmask 64512
        %v709 = vsel %vm707, %v704, 0
        %v712 = vsel %vm707, %v705, 0
        %v715 = vsel %vm707, %v706, 0
        %717 = vmatpush.xpose.msra.mxu0 0.0
        %718 = vmatpush.xpose.msra.mxu0 0.0
        %719 = vmatpush.xpose.msra.mxu0 0.0
        %720 = vmatpush.xpose.msra.mxu0 0.0
        %721 = vmatpush.xpose.msra.mxu0 0.0
        %722 = vmatpush.xpose.msra.mxu0 0.0
        %723 = vmatpush.xpose.msra.mxu0 0.0
        %724 = vmatpush.xpose.msra.mxu0 0.0
        %725 = vmatpush.xpose.msra.mxu0 0.0
        %726 = vmatpush.xpose.msra.mxu0 0.0
        %727 = vmatpush.xpose.msra.mxu0 0.0
        %728 = vmatpush.xpose.msra.mxu0 0.0
        %729 = vmatpush.xpose.msra.mxu0 0.0
        %730 = vmatpush.xpose.msra.mxu0 0.0
        %731 = vmatpush.xpose.msra.mxu0 %v715
        %732 = vmatpush.xpose.msra.mxu0 %v712
        %733 = vmatmul.f32.gmra.mxu0 %v709
        %v734 = vpop.f32.mrf.mxu0
        %v735 = vadd.f32 0.0, %v734
        %736 = vdwg.mxu0
        %vm737 = vcmask 130048
        %v738 = vsel %vm737, %v735, -inf
        %739 = vmax.xlane.f32.xlu0 %v738
        %v740 = vpop.xlane.xlu0 %739
        %v741 = vsub.f32 %v735, %v740
        %v742 = vmul.f32 %v741, 1.442695
        %v743 = vpow.pop %v742
        %v744 = vsel %vm737, %v743, 0.0
        %745 = vadd.xlane.f32.xlu0 %v744
        %v746 = vpop.xlane.xlu0 %745
        %v747 = vrcp.pop %v746
        %v748 = vmul.f32 %v743, %v747
        %749 = vrot.lane.b32.xlu0 %v705, 96
        %v750 = vpop.permute.xlu0 %749
        %751 = vrot.lane.b32.xlu0 %v706, 96
        %v752 = vpop.permute.xlu0 %751
        %v756 = vsel %vm737, %v748, 0
        %758 = vmatpush.msra.mxu0 0.0
        %759 = vmatpush.msra.mxu0 0.0
        %760 = vmatpush.msra.mxu0 0.0
        %761 = vmatpush.msra.mxu0 0.0
        %762 = vmatpush.msra.mxu0 0.0
        %763 = vmatpush.msra.mxu0 0.0
        %764 = vmatpush.msra.mxu0 0.0
        %765 = vmatpush.msra.mxu0 0.0
        %766 = vmatpush.msra.mxu0 0.0
        %767 = vmatpush.msra.mxu0 0.0
        %768 = vmatpush.msra.mxu0 0.0
        %769 = vmatpush.msra.mxu0 0.0
        %770 = vmatpush.msra.mxu0 0.0
        %771 = vmatpush.msra.mxu0 0.0
        %772 = vmatpush.msra.mxu0 %v752
        %773 = vmatpush.msra.mxu0 %v750
        %774 = vmatmul.f32.gmra.mxu0 %v756
        %v775 = vpop.f32.mrf.mxu0
        %v776 = vadd.f32 0.0, %v775
        %777 = vdwg.mxu0
        %778 = vst.msk [vmem:[#allocation4] sm:$0xff] %vm707, %v776
        %v779 = vld [vmem:[#allocation3] sm:$0xff]
        %v780 = vld [vmem:[#allocation3 + $0x8] sm:$0xff]
        %781 = vrot.lane.b32.xlu0 %v704, 120
        %v782 = vpop.permute.xlu0 %781
        %785 = vrot.lane.b32.xlu0 %v779, 120
        %v786 = vpop.permute.xlu0 %785
        %787 = vrot.lane.b32.xlu0 %v780, 120
        %v788 = vpop.permute.xlu0 %787
        %v789 = vsel %vm707, %v782, 0
        %v791 = vsel %vm707, %v786, 0
        %v793 = vsel %vm707, %v788, 0
        %795 = vmatpush.xpose.msra.mxu0 0.0
        %796 = vmatpush.xpose.msra.mxu0 0.0
        %797 = vmatpush.xpose.msra.mxu0 0.0
        %798 = vmatpush.xpose.msra.mxu0 0.0
        %799 = vmatpush.xpose.msra.mxu0 0.0
        %800 = vmatpush.xpose.msra.mxu0 0.0
        %801 = vmatpush.xpose.msra.mxu0 0.0
        %802 = vmatpush.xpose.msra.mxu0 0.0
        %803 = vmatpush.xpose.msra.mxu0 0.0
        %804 = vmatpush.xpose.msra.mxu0 0.0
        %805 = vmatpush.xpose.msra.mxu0 0.0
        %806 = vmatpush.xpose.msra.mxu0 0.0
        %807 = vmatpush.xpose.msra.mxu0 0.0
        %808 = vmatpush.xpose.msra.mxu0 0.0
        %809 = vmatpush.xpose.msra.mxu0 %v793
        %810 = vmatpush.xpose.msra.mxu0 %v791
        %811 = vmatmul.f32.gmra.mxu0 %v789
        %v812 = vpop.f32.mrf.mxu0
        %v813 = vadd.f32 0.0, %v812
        %814 = vdwg.mxu0
        %v815 = vsel %vm737, %v813, -inf
        %816 = vmax.xlane.f32.xlu0 %v815
        %v817 = vpop.xlane.xlu0 %816
        %v818 = vsub.f32 %v813, %v817
        %v819 = vmul.f32 %v818, 1.442695
        %v820 = vpow.pop %v819
        %v821 = vsel %vm737, %v820, 0.0
        %822 = vadd.xlane.f32.xlu0 %v821
        %v823 = vpop.xlane.xlu0 %822
        %v824 = vrcp.pop %v823
        %v825 = vmul.f32 %v820, %v824
        %826 = vrot.lane.b32.xlu0 %v779, 88
        %v827 = vpop.permute.xlu0 %826
        %828 = vrot.lane.b32.xlu0 %v780, 88
        %v829 = vpop.permute.xlu0 %828
        %v833 = vsel %vm737, %v825, 0
        %835 = vmatpush.msra.mxu0 0.0
        %836 = vmatpush.msra.mxu0 0.0
        %837 = vmatpush.msra.mxu0 0.0
        %838 = vmatpush.msra.mxu0 0.0
        %839 = vmatpush.msra.mxu0 0.0
        %840 = vmatpush.msra.mxu0 0.0
        %841 = vmatpush.msra.mxu0 0.0
        %842 = vmatpush.msra.mxu0 0.0
        %843 = vmatpush.msra.mxu0 0.0
        %844 = vmatpush.msra.mxu0 0.0
        %845 = vmatpush.msra.mxu0 0.0
        %846 = vmatpush.msra.mxu0 0.0
        %847 = vmatpush.msra.mxu0 0.0
        %848 = vmatpush.msra.mxu0 0.0
        %849 = vmatpush.msra.mxu0 %v829
        %850 = vmatpush.msra.mxu0 %v827
        %851 = vmatmul.f32.gmra.mxu0 %v833
        %v852 = vpop.f32.mrf.mxu0
        %v853 = vadd.f32 0.0, %v852
        %854 = vdwg.mxu0
        %856 = vrot.lane.b32.xlu0 %v853, 8
        %v857 = vpop.permute.xlu0 %856
        %vm859 = vcmask 130112
        %860 = vst.msk [vmem:[#allocation4] sm:$0xff] %vm859, %v857
        %v861 = vld [vmem:[#allocation3] sm:$0xff]
        %v862 = vld [vmem:[#allocation3 + $0x8] sm:$0xff]
        %863 = vrot.lane.b32.xlu0 %v704, 112
        %v864 = vpop.permute.xlu0 %863
        %867 = vrot.lane.b32.xlu0 %v861, 112
        %v868 = vpop.permute.xlu0 %867
        %869 = vrot.lane.b32.xlu0 %v862, 112
        %v870 = vpop.permute.xlu0 %869
        %v871 = vsel %vm707, %v864, 0
        %v873 = vsel %vm707, %v868, 0
        %v875 = vsel %vm707, %v870, 0
        %877 = vmatpush.xpose.msra.mxu0 0.0
        %878 = vmatpush.xpose.msra.mxu0 0.0
        %879 = vmatpush.xpose.msra.mxu0 0.0
        %880 = vmatpush.xpose.msra.mxu0 0.0
        %881 = vmatpush.xpose.msra.mxu0 0.0
        %882 = vmatpush.xpose.msra.mxu0 0.0
        %883 = vmatpush.xpose.msra.mxu0 0.0
        %884 = vmatpush.xpose.msra.mxu0 0.0
        %885 = vmatpush.xpose.msra.mxu0 0.0
        %886 = vmatpush.xpose.msra.mxu0 0.0
        %887 = vmatpush.xpose.msra.mxu0 0.0
        %888 = vmatpush.xpose.msra.mxu0 0.0
        %889 = vmatpush.xpose.msra.mxu0 0.0
        %890 = vmatpush.xpose.msra.mxu0 0.0
        %891 = vmatpush.xpose.msra.mxu0 %v875
        %892 = vmatpush.xpose.msra.mxu0 %v873
        %893 = vmatmul.f32.gmra.mxu0 %v871
        %v894 = vpop.f32.mrf.mxu0
        %v895 = vadd.f32 0.0, %v894
        %896 = vdwg.mxu0
        %v897 = vsel %vm737, %v895, -inf
        %898 = vmax.xlane.f32.xlu0 %v897
        %v899 = vpop.xlane.xlu0 %898
        %v900 = vsub.f32 %v895, %v899
        %v901 = vmul.f32 %v900, 1.442695
        %v902 = vpow.pop %v901
        %v903 = vsel %vm737, %v902, 0.0
        %904 = vadd.xlane.f32.xlu0 %v903
        %v905 = vpop.xlane.xlu0 %904
        %v906 = vrcp.pop %v905
        %v907 = vmul.f32 %v902, %v906
        %908 = vrot.lane.b32.xlu0 %v861, 80
        %v909 = vpop.permute.xlu0 %908
        %910 = vrot.lane.b32.xlu0 %v862, 80
        %v911 = vpop.permute.xlu0 %910
        %v915 = vsel %vm737, %v907, 0
        %917 = vmatpush.msra.mxu0 0.0
        %918 = vmatpush.msra.mxu0 0.0
        %919 = vmatpush.msra.mxu0 0.0
        %920 = vmatpush.msra.mxu0 0.0
        %921 = vmatpush.msra.mxu0 0.0
        %922 = vmatpush.msra.mxu0 0.0
        %923 = vmatpush.msra.mxu0 0.0
        %924 = vmatpush.msra.mxu0 0.0
        %925 = vmatpush.msra.mxu0 0.0
        %926 = vmatpush.msra.mxu0 0.0
        %927 = vmatpush.msra.mxu0 0.0
        %928 = vmatpush.msra.mxu0 0.0
        %929 = vmatpush.msra.mxu0 0.0
        %930 = vmatpush.msra.mxu0 0.0
        %931 = vmatpush.msra.mxu0 %v911
        %932 = vmatpush.msra.mxu0 %v909
        %933 = vmatmul.f32.gmra.mxu0 %v915
        %v934 = vpop.f32.mrf.mxu0
        %v935 = vadd.f32 0.0, %v934
        %936 = vdwg.mxu0
        %938 = vrot.lane.b32.xlu0 %v935, 16
        %v939 = vpop.permute.xlu0 %938
        %vm941 = vcmask 195712
        %942 = vst.msk [vmem:[#allocation4] sm:$0xff] %vm941, %v939
        %v943 = vld [vmem:[#allocation3] sm:$0xff]
        %v944 = vld [vmem:[#allocation3 + $0x8] sm:$0xff]
        %945 = vrot.lane.b32.xlu0 %v704, 104
        %v946 = vpop.permute.xlu0 %945
        %949 = vrot.lane.b32.xlu0 %v943, 104
        %v950 = vpop.permute.xlu0 %949
        %951 = vrot.lane.b32.xlu0 %v944, 104
        %v952 = vpop.permute.xlu0 %951
        %v953 = vsel %vm707, %v946, 0
        %v955 = vsel %vm707, %v950, 0
        %v957 = vsel %vm707, %v952, 0
        %959 = vmatpush.xpose.msra.mxu0 0.0
        %960 = vmatpush.xpose.msra.mxu0 0.0
        %961 = vmatpush.xpose.msra.mxu0 0.0
        %962 = vmatpush.xpose.msra.mxu0 0.0
        %963 = vmatpush.xpose.msra.mxu0 0.0
        %964 = vmatpush.xpose.msra.mxu0 0.0
        %965 = vmatpush.xpose.msra.mxu0 0.0
        %966 = vmatpush.xpose.msra.mxu0 0.0
        %967 = vmatpush.xpose.msra.mxu0 0.0
        %968 = vmatpush.xpose.msra.mxu0 0.0
        %969 = vmatpush.xpose.msra.mxu0 0.0
        %970 = vmatpush.xpose.msra.mxu0 0.0
        %971 = vmatpush.xpose.msra.mxu0 0.0
        %972 = vmatpush.xpose.msra.mxu0 0.0
        %973 = vmatpush.xpose.msra.mxu0 %v957
        %974 = vmatpush.xpose.msra.mxu0 %v955
        %975 = vmatmul.f32.gmra.mxu0 %v953
        %v976 = vpop.f32.mrf.mxu0
        %v977 = vadd.f32 0.0, %v976
        %978 = vdwg.mxu0
        %v979 = vsel %vm737, %v977, -inf
        %980 = vmax.xlane.f32.xlu0 %v979
        %v981 = vpop.xlane.xlu0 %980
        %v982 = vsub.f32 %v977, %v981
        %v983 = vmul.f32 %v982, 1.442695
        %v984 = vpow.pop %v983
        %v985 = vsel %vm737, %v984, 0.0
        %986 = vadd.xlane.f32.xlu0 %v985
        %v987 = vpop.xlane.xlu0 %986
        %v988 = vrcp.pop %v987
        %v989 = vmul.f32 %v984, %v988
        %990 = vrot.lane.b32.xlu0 %v943, 72
        %v991 = vpop.permute.xlu0 %990
        %992 = vrot.lane.b32.xlu0 %v944, 72
        %v993 = vpop.permute.xlu0 %992
        %v997 = vsel %vm737, %v989, 0
        %999 = vmatpush.msra.mxu0 0.0
        %1000 = vmatpush.msra.mxu0 0.0
        %1001 = vmatpush.msra.mxu0 0.0
        %1002 = vmatpush.msra.mxu0 0.0
        %1003 = vmatpush.msra.mxu0 0.0
        %1004 = vmatpush.msra.mxu0 0.0
        %1005 = vmatpush.msra.mxu0 0.0
        %1006 = vmatpush.msra.mxu0 0.0
        %1007 = vmatpush.msra.mxu0 0.0
        %1008 = vmatpush.msra.mxu0 0.0
        %1009 = vmatpush.msra.mxu0 0.0
        %1010 = vmatpush.msra.mxu0 0.0
        %1011 = vmatpush.msra.mxu0 0.0
        %1012 = vmatpush.msra.mxu0 0.0
        %1013 = vmatpush.msra.mxu0 %v993
        %1014 = vmatpush.msra.mxu0 %v991
        %1015 = vmatmul.f32.gmra.mxu0 %v997
        %v1016 = vpop.f32.mrf.mxu0
        %v1017 = vadd.f32 0.0, %v1016
        %1018 = vdwg.mxu0
        %1020 = vrot.lane.b32.xlu0 %v1017, 24
        %v1021 = vpop.permute.xlu0 %1020
        %vm1023 = vcmask 261312
        %1024 = vst.msk [vmem:[#allocation4] sm:$0xff] %vm1023, %v1021
        %v1025 = vld [vmem:[#allocation4] sm:$0xff]
        %v1026 = vld [vmem:[#allocation8] sm:$0xff]
        %v1027 = vld [vmem:[#allocation8 + $0x8] sm:$0xff]
        %v1028 = vld [vmem:[#allocation8 + $0x10] sm:$0xff]
        %v1029 = vld [vmem:[#allocation8 + $0x18] sm:$0xff]
        %v1030 = vld [vmem:[%s8] sm:$0x1]
        %v1032 = vperm.slane %v1030, 0
        %v1035 = vsel %vm680, %v1025, 0
        %1037 = vmatpush.msra.mxu0 0.0
        %1038 = vmatpush.msra.mxu0 0.0
        %1039 = vmatpush.msra.mxu0 0.0
        %1040 = vmatpush.msra.mxu0 0.0
        %1041 = vmatpush.msra.mxu0 0.0
        %1042 = vmatpush.msra.mxu0 0.0
        %1043 = vmatpush.msra.mxu0 0.0
        %1044 = vmatpush.msra.mxu0 0.0
        %1045 = vmatpush.msra.mxu0 0.0
        %1046 = vmatpush.msra.mxu0 0.0
        %1047 = vmatpush.msra.mxu0 0.0
        %1048 = vmatpush.msra.mxu0 0.0
        %1049 = vmatpush.msra.mxu0 %v1029
        %1050 = vmatpush.msra.mxu0 %v1028
        %1051 = vmatpush.msra.mxu0 %v1027
        %1052 = vmatpush.msra.mxu0 %v1026
        %1053 = vmatmul.f32.gmra.mxu0 %v1035
        %v1054 = vpop.f32.mrf.mxu0
        %v1055 = vadd.f32 %v1032, %v1054
        %1056 = vdwg.mxu0
        %v1057 = vadd.f32 %v1055, %v669
        %v1058 = vld [vmem:[%s9] sm:$0x1]
        %v1059 = vld [vmem:[%s10] sm:$0x1]
        %v1060 = vsel %vm680, %v1057, 0.0
        %1061 = vadd.xlane.f32.xlu0 %v1060
        %v1062 = vpop.xlane.xlu0 %1061
        %v1063 = vrcp.pop 32.0
        %v1064 = vmul.f32 32.0, %v1063
        %v1065 = vsub.f32 1.0, %v1064
        %v1066 = vmul.f32 %v1063, %v1065
        %v1067 = vadd.f32 %v1063, %v1066
        %vm1068 = vweird.f32 %v1063
        %v1069 = vsel %vm1068, %v1063, %v1067
        %v1070 = vmul.f32 %v1062, %v1069
        %v1071 = vsub.f32 %v1057, %v1070
        %v1072 = vmul.f32 %v1071, %v1071
        %v1073 = vsel %vm680, %v1072, 0.0
        %1074 = vadd.xlane.f32.xlu0 %v1073
        %v1075 = vpop.xlane.xlu0 %1074
        %v1076 = vmul.f32 %v1075, %v1069
        %v1077 = vadd.f32 %v1076, 1e-05
        %v1078 = vrsqrt.pop %v1077
        %v1079 = vmul.f32 %v1078, %v1077
        %v1080 = vmul.f32 %v1079, %v1078
        %v1081 = vmul.f32 0.5, %v1080
        %v1082 = vsub.f32 1.5, %v1081
        %v1083 = vmul.f32 %v1078, %v1082
        %vm1084 = vweird.f32 %v1077
        %vm1085 = vweird.f32 %v1078
        %vm1086 = vmor %vm1084, %vm1085
        %v1087 = vsel %vm1086, %v1078, %v1083
        %v1088 = vmul.f32 %v1071, %v1087
        %v1090 = vperm.slane %v1058, 0
        %v1092 = vmul.f32 %v1088, %v1090
        %v1094 = vperm.slane %v1059, 0
        %v1096 = vadd.f32 %v1092, %v1094
        %v1097 = vld [vmem:[#allocation10] sm:$0xff]
        %v1098 = vld [vmem:[#allocation10 + $0x8] sm:$0xff]
        %v1099 = vld [vmem:[#allocation10 + $0x10] sm:$0xff]
        %v1100 = vld [vmem:[#allocation10 + $0x18] sm:$0xff]
        %v1101 = vld [vmem:[%s12] sm:$0x1]
        %v1103 = vperm.slane %v1101, 0
        %v1106 = vsel %vm680, %v1096, 0
        %1108 = vmatpush.msra.mxu0 0.0
        %1109 = vmatpush.msra.mxu0 0.0
        %1110 = vmatpush.msra.mxu0 0.0
        %1111 = vmatpush.msra.mxu0 0.0
        %1112 = vmatpush.msra.mxu0 0.0
        %1113 = vmatpush.msra.mxu0 0.0
        %1114 = vmatpush.msra.mxu0 0.0
        %1115 = vmatpush.msra.mxu0 0.0
        %1116 = vmatpush.msra.mxu0 0.0
        %1117 = vmatpush.msra.mxu0 0.0
        %1118 = vmatpush.msra.mxu0 0.0
        %1119 = vmatpush.msra.mxu0 0.0
        %1120 = vmatpush.msra.mxu0 %v1100
        %1121 = vmatpush.msra.mxu0 %v1099
        %1122 = vmatpush.msra.mxu0 %v1098
        %1123 = vmatpush.msra.mxu0 %v1097
        %1124 = vmatmul.f32.gmra.mxu0 %v1106
        %v1125 = vpop.f32.mrf.mxu0
        %v1126 = vadd.f32 %v1103, %v1125
        %1127 = vdwg.mxu0
        %v1128 = vmul.f32 %v1126, 0.5
        %v1129 = vmul.f32 %v1126, 0.70710677
        %v1130 = vmul.f32 %v1129, %v1129
        %v1131 = vmin.f32 16.0, %v1130
        %v1132 = vmul.f32 %v1131, 2.1237322e-06
        %v1133 = vadd.f32 %v1132, 0.00028619796
        %v1134 = vmul.f32 %v1131, %v1133
        %v1135 = vadd.f32 %v1134, 0.0036580483
        %v1136 = vmul.f32 %v1131, %v1135
        %v1137 = vadd.f32 %v1136, 0.05243302
        %v1138 = vmul.f32 %v1131, %v1137
        %v1139 = vadd.f32 %v1138, 0.18741608
        %v1140 = vmul.f32 %v1131, %v1139
        %v1141 = vadd.f32 %v1140, 1.1283791
        %v1142 = vmul.f32 %v1129, %v1141
        %v1143 = vmul.f32 %v1131, 3.8918573e-05
        %v1144 = vadd.f32 %v1143, 0.001143296
        %v1145 = vmul.f32 %v1131, %v1144
        %v1146 = vadd.f32 %v1145, 0.014752088
        %v1147 = vmul.f32 %v1131, %v1146
        %v1148 = vadd.f32 %v1147, 0.112945676
        %v1149 = vmul.f32 %v1131, %v1148
        %v1150 = vadd.f32 %v1149, 0.4994258
        %v1151 = vmul.f32 %v1131, %v1150
        %v1152 = vadd.f32 %v1151, 1.0
        %v1153 = vrcp.pop %v1152
        %v1154 = vmul.f32 %v1152, %v1153
        %v1155 = vsub.f32 1.0, %v1154
        %v1156 = vmul.f32 %v1153, %v1155
        %v1157 = vadd.f32 %v1153, %v1156
        %vm1158 = vweird.f32 %v1152
        %vm1159 = vweird.f32 %v1153
        %vm1160 = vmor %vm1158, %vm1159
        %v1161 = vsel %vm1160, %v1153, %v1157
        %v1162 = vand.u32 2147483647, %v1152
        %vm1163 = vcmp.eq.f32.partialorder %v1162, 8.507059e+37
        %v1164 = vand.u32 %v1152, 2147483648
        %v1165 = vor.u32 1.1754944e-38, %v1164
        %v1166 = vsel %vm1163, %v1165, %v1161
        %v1167 = vmul.f32 %v1142, %v1166
        %v1168 = vmin.f32 %v1167, 1.0
        %v1169 = vmax.f32 %v1168, -1.0
        %v1170 = vadd.f32 %v1169, 1.0
        %v1171 = vmul.f32 %v1128, %v1170
        %v1172 = vld [vmem:[%s13] sm:$0xff]
        %v1173 = vld [vmem:[%s13 + $0x8] sm:$0xff]
        %v1174 = vld [vmem:[%s13 + $0x10] sm:$0xff]
        %v1175 = vld [vmem:[%s13 + $0x18] sm:$0xff]
        %v1176 = vld [vmem:[%s13 + $0x20] sm:$0xff]
        %v1177 = vld [vmem:[%s13 + $0x28] sm:$0xff]
        %v1178 = vld [vmem:[%s13 + $0x30] sm:$0xff]
        %v1179 = vld [vmem:[%s13 + $0x38] sm:$0xff]
        %v1180 = vld [vmem:[%s14] sm:$0x1]
        %v1182 = vperm.slane %v1180, 0
        %vm1184 = vcmask 523264
        %v1186 = vsel %vm1184, %v1171, 0
        %1188 = vmatpush.msra.mxu0 0.0
        %1189 = vmatpush.msra.mxu0 0.0
        %1190 = vmatpush.msra.mxu0 0.0
        %1191 = vmatpush.msra.mxu0 0.0
        %1192 = vmatpush.msra.mxu0 0.0
        %1193 = vmatpush.msra.mxu0 0.0
        %1194 = vmatpush.msra.mxu0 0.0
        %1195 = vmatpush.msra.mxu0 0.0
        %1196 = vmatpush.msra.mxu0 %v1179
        %1197 = vmatpush.msra.mxu0 %v1178
        %1198 = vmatpush.msra.mxu0 %v1177
        %1199 = vmatpush.msra.mxu0 %v1176
        %1200 = vmatpush.msra.mxu0 %v1175
        %1201 = vmatpush.msra.mxu0 %v1174
        %1202 = vmatpush.msra.mxu0 %v1173
        %1203 = vmatpush.msra.mxu0 %v1172
        %1204 = vmatmul.f32.gmra.mxu0 %v1186
        %v1205 = vpop.f32.mrf.mxu0
        %v1206 = vadd.f32 %v1182, %v1205
        %1207 = vdwg.mxu0
        %v1208 = vadd.f32 %v1206, %v1057
        %1209 = vst.msk [vmem:[%s549] sm:$0xff] %vm680, %v1208
        %s1210 = sand.u32 %s373, 1
        %s1211 = scalar_lea.sflag [#allocation7], %s1210
        %s1212 = sand.u32 %s373, 1
        %s1213 = smul.addr %s1212, 8
        %s1214 = scalar_lea.vmem [#allocation11], %s1213
        // Predicated region
        $region97: #{tpu_custom_call.1} parent=79 // pred_check
          %p1215 = pneg %p383
        $region98: #{tpu_custom_call.1} parent=79 // pred_check_branch
          %1217 = sbr.rel (%p1215) target = $region100
        $region99: #{tpu_custom_call.1} parent=79 // pred_region
          %1219 = vsyncadd %s1211, 0
          %s1220 = smul.addr %s35, 2
          %s1221 = sadd.s32 %s36, %s1220
          %s1222 = smul.addr %s1221, 8
          %s1223 = scalar_lea.hbm %s15, %s1222
          %s1225 = sshll.u32 %s1214, 4
          %s1226 = int_to_ptr.vmem [resolvable:$true] %s1225
          %s1227 = sshll.u32 %s1223, 4
          %s1228 = int_to_ptr.hbm [resolvable:$true] %s1227
          %1230 = dma.vmem_to_hbm [thread:$0]  %s1226, 128, %s1228, %s1211
        $region100: #{tpu_custom_call.1} parent=79 // pred_fallthru
          _
      $region80: #{tpu_custom_call.1} parent=5 // pred_fallthru
        _
      %p1231 = scmp.le.s32.totalorder 2, %s26
      // Predicated region
      $region101: #{tpu_custom_call.1} parent=5 // pred_check
        %p1232 = pneg %p1231
      $region102: #{tpu_custom_call.1} parent=5 // pred_check_branch
        %1234 = sbr.rel (%p1232) target = $region104
      $region103: #{tpu_custom_call.1} parent=5 // pred_region
        %s1235 = ssub.s32 %s26, 2
        // Predicated region
        $region105: #{tpu_custom_call.1} parent=103 // pred_check
          %p1236 = pneg %p389
        $region106: #{tpu_custom_call.1} parent=103 // pred_check_branch
          %1238 = sbr.rel (%p1236) target = $region108
        $region107: #{tpu_custom_call.1} parent=103 // pred_region
          %s1239 = sand.u32 %s374, 1
          %s1240 = scalar_lea.sflag [#allocation7], %s1239
          %s1241 = sand.u32 %s374, 1
          %s1242 = smul.addr %s1241, 8
          %s1243 = scalar_lea.vmem [#allocation11], %s1242
          %1245 = dma.done %s1240, 128
        $region108: #{tpu_custom_call.1} parent=103 // pred_fallthru
          _
      $region104: #{tpu_custom_call.1} parent=5 // pred_fallthru
        _
    $region6: #{tpu_custom_call.1} parent=1 // loop_footer
      %s30 = sadd.s32 1, %s26
    $region7: #{tpu_custom_call.1} parent=1 // loop_footer_branch
      %25 = sbr.rel target = $region3
    $region8: #{tpu_custom_call.1} parent=1 // loop_exit
      _
    %1246 = vsyncpa [#allocation6], 1
    %s1247 = scalar_lea.sflag [#allocation6], 1
    %1248 = vsyncpa %s1247, 1
    %1249 = vsyncpa [#allocation9], 1
    %1250 = vsyncpa [#allocation7], 1
    %s1251 = scalar_lea.sflag [#allocation7], 1
    %1252 = vsyncpa %s1251, 1

</llo_original>
